<compile_context>
chip_gen: v6e
topology: v6e:2x2x1
jax: 0.10.0
libtpu: 0.0.40
codegen_flags: <defaults>
</compile_context>

<pallas_src>
import jax
import jax.numpy as jnp
from jax import lax
from jax.experimental import pallas as pl
from jax.experimental.pallas import tpu as pltpu


def decoder_kernel(
    x_ref, y_ref, mask_ref,
    # self-attention
    wq1_ref, bq1_ref, wk1_ref, bk1_ref, wv1_ref, bv1_ref, wo1_ref, bo1_ref,
    g1_ref, be1_ref,
    # cross-attention
    wq2_ref, bq2_ref, wk2_ref, bk2_ref, wv2_ref, bv2_ref, wo2_ref, bo2_ref,
    g2_ref, be2_ref,
    # feed-forward
    w1_ref, bf1_ref, w2_ref, bf2_ref,
    g3_ref, be3_ref,
    o_ref,
):
    f32 = jnp.float32
    bf16 = jnp.bfloat16
    eps = f32(1e-5)

    Bblk, S, D = x_ref.shape
    Sy = y_ref.shape[1]

    def linear(a_bf16, w_ref, b_ref):
        # bf16 MXU operands, f32 accumulation, f32 bias add.
        return jnp.dot(a_bf16, w_ref[...], preferred_element_type=f32) + b_ref[...]

    def linear16(a_bf16, w_ref, b_ref):
        # Same, but the result is kept in bf16 (cast once, right here).
        return linear(a_bf16, w_ref, b_ref).astype(bf16)

    def layernorm(a, g_ref, b_ref):
        mu = jnp.mean(a, axis=-1, keepdims=True)
        var = jnp.mean((a - mu) * (a - mu), axis=-1, keepdims=True)
        return (a - mu) * lax.rsqrt(var + eps) * g_ref[...] + b_ref[...]

    def softmax(logits):
        mx = jnp.max(logits, axis=-1, keepdims=True)
        e = jnp.exp(logits - mx)
        denom = jnp.sum(e, axis=-1, keepdims=True)
        return e * pl.reciprocal(denom, approx=True)

    # (B,S,D) x (B,T,D) -> (B,S,T): contract last dims, no XLU transpose.
    bmm_qk = (((2,), (2,)), ((0,), (0,)))
    # (B,S,T) x (B,T,D) -> (B,S,D)
    bmm_pv = (((2,), (1,)), ((0,), (0,)))

    # Flat f32 residual slabs; bf16 copies cast ONCE and reused everywhere.
    x2d = x_ref[...].astype(f32).reshape(Bblk * S, D)
    x2d_bf = x2d.astype(bf16)
    y2d_bf = y_ref[...].astype(f32).reshape(Bblk * Sy, D).astype(bf16)

    # ---- self-attention (masked) ----
    q = linear16(x2d_bf, wq1_ref, bq1_ref).reshape(Bblk, S, D)
    k = linear16(x2d_bf, wk1_ref, bk1_ref).reshape(Bblk, S, D)
    v = linear16(x2d_bf, wv1_ref, bv1_ref).reshape(Bblk, S, D)

    sim = lax.dot_general(q, k, dimension_numbers=bmm_qk,
                          preferred_element_type=f32)          # (Bblk,S,S) f32
    sim = jnp.where(mask_ref[...] != 0, f32(-1e9), sim)         # int8 predicate
    p = softmax(sim)
    ctx = lax.dot_general(p.astype(bf16), v, dimension_numbers=bmm_pv,
                          preferred_element_type=f32).astype(bf16)
    out = linear(ctx.reshape(Bblk * S, D), wo1_ref, bo1_ref)
    x1 = layernorm(out + x2d, g1_ref, be1_ref)                  # (rows, D) f32
    x1_bf = x1.astype(bf16)

    # ---- cross-attention (Q from x1, K/V from y, no mask) ----
    q2 = linear16(x1_bf, wq2_ref, bq2_ref).reshape(Bblk, S, D)
    k2 = linear16(y2d_bf, wk2_ref, bk2_ref).reshape(Bblk, Sy, D)
    v2 = linear16(y2d_bf, wv2_ref, bv2_ref).reshape(Bblk, Sy, D)

    sim2 = lax.dot_general(q2, k2, dimension_numbers=bmm_qk,
                           preferred_element_type=f32)          # (Bblk,S,Sy)
    p2 = softmax(sim2)
    ctx2 = lax.dot_general(p2.astype(bf16), v2, dimension_numbers=bmm_pv,
                           preferred_element_type=f32).astype(bf16)
    out2 = linear(ctx2.reshape(Bblk * S, D), wo2_ref, bo2_ref)
    x2 = layernorm(out2 + x1, g2_ref, be2_ref)
    x2_bf = x2.astype(bf16)

    # ---- feed-forward ----
    h = jnp.maximum(linear(x2_bf, w1_ref, bf1_ref), f32(0.0)).astype(bf16)
    ff = linear(h, w2_ref, bf2_ref)
    x3 = layernorm(ff + x2, g3_ref, be3_ref)

    o_ref[...] = x3.reshape(Bblk, S, D).astype(o_ref.dtype)


def _pick_block_b(B, S, row_target=256):
    """Largest divisor of B with block_b*S <= row_target, keeping >=2 grid steps
    when B >= 2 so v7x's two TensorCores both get work."""
    block_b = 1
    for cand in range(1, B + 1):
        if B % cand == 0 and cand * S <= max(row_target, S):
            block_b = cand
    if B >= 2 and block_b == B:
        block_b = max(d for d in range(1, B) if B % d == 0)
    return block_b


def decoder_forward(x, y, mask, params, *, block_b=None):
    """x: (B, S, D) f32, y: (B, Sy, D) f32, mask: (B, S, S) bool/0-1 (True == masked)."""
    B, S, D = x.shape
    Sy = y.shape[1]
    FF = params["w1"].shape[1]

    if block_b is None:
        block_b = _pick_block_b(B, S)
    block_b = max(1, min(block_b, B))
    while B % block_b:
        block_b -= 1
    grid = (B // block_b,)

    # int8 mask: 4x less HBM traffic than f32 for a pure compare.
    mask_i8 = (mask != 0).astype(jnp.int8)

    # Weights to bf16 (native MXU dtype); biases / LN params stay f32.
    def w16(name):
        return params[name].astype(jnp.bfloat16)

    # ---- generation-aware VMEM budget ----
    try:
        vmem_cap = int(pltpu.get_tpu_info().vmem_capacity_bytes)
    except Exception:
        vmem_cap = 64 * 1024 * 1024
    rows, rows_y = block_b * S, block_b * Sy
    # double-buffered grid blocks: x, y, mask (int8), out
    blk_io = 2 * (4 * rows * D + 4 * rows_y * D + 1 * rows * S + 4 * rows * D)
    # resident bf16 weights (single-buffered) + f32 biases / LN params
    w_bytes = 2 * (8 * D * D + 2 * D * FF) + 4 * (15 * D + FF)
    # in-kernel intermediates (live-set upper bound):
    inter = (
        4 * rows * D * 8                        # f32 slabs (x2d/out/x1/out2/x2/ff/LN tmp)
        + 2 * D * (8 * rows + 4 * rows_y)       # bf16 slabs (casts, q/k/v, q2/k2/v2, ctx)
        + 4 * rows * max(S, Sy) * 2             # f32 scores + probs
        + 4 * rows * FF + 2 * rows * FF         # FFN pre-relu f32 + bf16 hidden
    )
    vmem_limit = int(min(int(0.85 * vmem_cap),
                         max(32 * 1024 * 1024, 2 * (blk_io + w_bytes + inter))))

    # ---- cost estimate (advisory) ----
    flops = 2 * B * (
        4 * S * D * D + 2 * S * S * D                          # self-attn
        + 2 * S * D * D + 2 * Sy * D * D + 2 * S * Sy * D      # cross-attn
        + 2 * S * D * FF                                       # FFN
    )
    transcendentals = B * S * (S + Sy)
    bytes_accessed = (
        x.size * 4 + y.size * 4 + mask_i8.size * 1 + B * S * D * 4
        + 2 * (8 * D * D + 2 * D * FF) + (15 * D + FF) * 4
    )
    cost = pl.CostEstimate(flops=int(flops),
                           transcendentals=int(transcendentals),
                           bytes_accessed=int(bytes_accessed))

    def build(single_buffer_weights):
        def full(shape):
            idx = lambda b, n=len(shape): (0,) * n
            if single_buffer_weights:
                # Constant index_map -> no need to double-buffer these inputs.
                return pl.BlockSpec(shape, idx,
                                    pipeline_mode=pl.Buffered(buffer_count=1))
            return pl.BlockSpec(shape, idx)

        in_specs = [
            pl.BlockSpec((block_b, S, D), lambda b: (b, 0, 0)),    # x
            pl.BlockSpec((block_b, Sy, D), lambda b: (b, 0, 0)),   # y
            pl.BlockSpec((block_b, S, S), lambda b: (b, 0, 0)),    # mask (int8)
            # self-attention
            full((D, D)), full((1, D)), full((D, D)), full((1, D)),
            full((D, D)), full((1, D)), full((D, D)), full((1, D)),
            full((1, D)), full((1, D)),                            # norm1
            # cross-attention
            full((D, D)), full((1, D)), full((D, D)), full((1, D)),
            full((D, D)), full((1, D)), full((D, D)), full((1, D)),
            full((1, D)), full((1, D)),                            # norm2
            # feed-forward
            full((D, FF)), full((1, FF)), full((FF, D)), full((1, D)),
            full((1, D)), full((1, D)),                            # norm3
        ]
        return pl.pallas_call(
            decoder_kernel,
            out_shape=jax.ShapeDtypeStruct((B, S, D), x.dtype),
            grid_spec=pltpu.PrefetchScalarGridSpec(
                num_scalar_prefetch=0,
                grid=grid,
                in_specs=in_specs,
                out_specs=pl.BlockSpec((block_b, S, D), lambda b: (b, 0, 0)),
            ),
            compiler_params=pltpu.CompilerParams(
                dimension_semantics=("parallel",),
                vmem_limit_bytes=vmem_limit,
            ),
            cost_estimate=cost,
        )

    args = (
        x, y, mask_i8,
        w16("wq1"), params["bq1"], w16("wk1"), params["bk1"],
        w16("wv1"), params["bv1"], w16("wo1"), params["bo1"],
        params["g1"], params["be1"],
        w16("wq2"), params["bq2"], w16("wk2"), params["bk2"],
        w16("wv2"), params["bv2"], w16("wo2"), params["bo2"],
        params["g2"], params["be2"],
        w16("w1"), params["bf1"], w16("w2"), params["bf2"],
        params["g3"], params["be3"],
    )
    try:
        return build(True)(*args)
    except Exception:
        # Fallback for JAX builds that reject buffer_count=1 pipeline mode.
        return build(False)(*args)


def decoder_reference(x, y, mask, params):
    """Pure-JAX (f32) reference matching the PyTorch Decoder.forward exactly."""
    def ln(v, g, b):
        mu = jnp.mean(v, axis=-1, keepdims=True)
        var = jnp.mean((v - mu) ** 2, axis=-1, keepdims=True)
        return (v - mu) / jnp.sqrt(var + 1e-5) * g + b

    def attention(xq, xkv, wq, bq, wk, bk, wv, bv, wo, bo, msk=None):
        Q = xq @ wq + bq
        K = xkv @ wk + bk
        V = xkv @ wv + bv
        sim = Q @ jnp.swapaxes(K, 1, 2)
        if msk is not None:
            sim = jnp.where(msk, -1e9, sim)
        p = jax.nn.softmax(sim, axis=-1)
        return (p @ V) @ wo + bo

    out = attention(x, x, params["wq1"], params["bq1"], params["wk1"],
                    params["bk1"], params["wv1"], params["bv1"],
                    params["wo1"], params["bo1"], msk=mask)
    x1 = ln(out + x, params["g1"], params["be1"])
    out = attention(x1, y, params["wq2"], params["bq2"], params["wk2"],
                    params["bk2"], params["wv2"], params["bv2"],
                    params["wo2"], params["bo2"], msk=None)
    x2 = ln(out + x1, params["g2"], params["be2"])
    h = jax.nn.relu(x2 @ params["w1"] + params["bf1"])
    ff = h @ params["w2"] + params["bf2"]
    return ln(ff + x2, params["g3"], params["be3"])


def make_params(key, embed_dim, ff_dim):
    keys = jax.random.split(key, 20)
    s_d = 1.0 / jnp.sqrt(embed_dim)
    s_f = 1.0 / jnp.sqrt(ff_dim)

    def lin(kw, kb, fan_in, fan_out, scale):
        # weights stored pre-transposed: (in, out)
        w = jax.random.uniform(kw, (fan_in, fan_out), jnp.float32, -scale, scale)
        b = jax.random.uniform(kb, (1, fan_out), jnp.float32, -scale, scale)
        return w, b

    p = {}
    # self-attention
    p["wq1"], p["bq1"] = lin(keys[0], keys[1], embed_dim, embed_dim, s_d)
    p["wk1"], p["bk1"] = lin(keys[2], keys[3], embed_dim, embed_dim, s_d)
    p["wv1"], p["bv1"] = lin(keys[4], keys[5], embed_dim, embed_dim, s_d)
    p["wo1"], p["bo1"] = lin(keys[6], keys[7], embed_dim, embed_dim, s_d)
    # cross-attention
    p["wq2"], p["bq2"] = lin(keys[8], keys[9], embed_dim, embed_dim, s_d)
    p["wk2"], p["bk2"] = lin(keys[10], keys[11], embed_dim, embed_dim, s_d)
    p["wv2"], p["bv2"] = lin(keys[12], keys[13], embed_dim, embed_dim, s_d)
    p["wo2"], p["bo2"] = lin(keys[14], keys[15], embed_dim, embed_dim, s_d)
    # feed-forward
    p["w1"], p["bf1"] = lin(keys[16], keys[17], embed_dim, ff_dim, s_d)
    p["w2"], p["bf2"] = lin(keys[18], keys[19], ff_dim, embed_dim, s_f)
    # layer norms
    for name in ("1", "2", "3"):
        p["g" + name] = jnp.ones((1, embed_dim), jnp.float32)
        p["be" + name] = jnp.zeros((1, embed_dim), jnp.float32)
    return p


if __name__ == "__main__":
    B, S, Sy, D, FF = 2, 8, 8, 32, 64

    key = jax.random.PRNGKey(0)
    kx, ky, kmask, kparams = jax.random.split(key, 4)

    x = jax.random.normal(kx, (B, S, D), jnp.float32)
    y = jax.random.normal(ky, (B, Sy, D), jnp.float32)
    mask = jax.random.bernoulli(kmask, 0.2, (B, S, S))   # True == masked

    params = make_params(kparams, D, FF)

    out = decoder_forward(x, y, mask, params)
    out = jax.block_until_ready(out)

    ref = decoder_reference(x, y, mask, params)
    # bf16 MXU operands / bf16 intermediates with f32 accumulation ->
    # compare at bf16-level tolerance.
    assert jnp.allclose(out, ref, rtol=3e-2, atol=3e-2), (
        "mismatch vs JAX reference, max abs err = "
        f"{float(jnp.max(jnp.abs(out - ref)))}")

    print("KERNEL_OK")
</pallas_src>

<mosaic_0001>
module attributes {stable_mosaic.version = 11 : i64} {
  func.func @decoder_kernel(%arg0: i32, %arg1: memref<1x8x32xf32, #tpu.memory_space<vmem>>, %arg2: memref<1x8x32xf32, #tpu.memory_space<vmem>>, %arg3: memref<1x8x8xi8, #tpu.memory_space<vmem>>, %arg4: memref<32x32xbf16, #tpu.memory_space<vmem>>, %arg5: memref<1x32xf32, #tpu.memory_space<vmem>>, %arg6: memref<32x32xbf16, #tpu.memory_space<vmem>>, %arg7: memref<1x32xf32, #tpu.memory_space<vmem>>, %arg8: memref<32x32xbf16, #tpu.memory_space<vmem>>, %arg9: memref<1x32xf32, #tpu.memory_space<vmem>>, %arg10: memref<32x32xbf16, #tpu.memory_space<vmem>>, %arg11: memref<1x32xf32, #tpu.memory_space<vmem>>, %arg12: memref<1x32xf32, #tpu.memory_space<vmem>>, %arg13: memref<1x32xf32, #tpu.memory_space<vmem>>, %arg14: memref<32x32xbf16, #tpu.memory_space<vmem>>, %arg15: memref<1x32xf32, #tpu.memory_space<vmem>>, %arg16: memref<32x32xbf16, #tpu.memory_space<vmem>>, %arg17: memref<1x32xf32, #tpu.memory_space<vmem>>, %arg18: memref<32x32xbf16, #tpu.memory_space<vmem>>, %arg19: memref<1x32xf32, #tpu.memory_space<vmem>>, %arg20: memref<32x32xbf16, #tpu.memory_space<vmem>>, %arg21: memref<1x32xf32, #tpu.memory_space<vmem>>, %arg22: memref<1x32xf32, #tpu.memory_space<vmem>>, %arg23: memref<1x32xf32, #tpu.memory_space<vmem>>, %arg24: memref<32x64xbf16, #tpu.memory_space<vmem>>, %arg25: memref<1x64xf32, #tpu.memory_space<vmem>>, %arg26: memref<64x32xbf16, #tpu.memory_space<vmem>>, %arg27: memref<1x32xf32, #tpu.memory_space<vmem>>, %arg28: memref<1x32xf32, #tpu.memory_space<vmem>>, %arg29: memref<1x32xf32, #tpu.memory_space<vmem>>, %arg30: memref<1x8x32xf32, #tpu.memory_space<vmem>>) attributes {dimension_semantics = [#tpu.dimension_semantics<parallel>], iteration_bounds = array<i64: 2>, scalar_prefetch = 0 : i64, scratch_operands = 0 : i64, tpu.core_type = #tpu.core_type<tc>, window_params = [{transform_indices = @transform_0, window_bounds = array<i64: 1, 8, 32>}, {transform_indices = @transform_1, window_bounds = array<i64: 1, 8, 32>}, {transform_indices = @transform_2, window_bounds = array<i64: 1, 8, 8>}, {pipeline_mode = #tpu.pipeline_mode<synchronous>, transform_indices = @transform_3, window_bounds = array<i64: 32, 32>}, {pipeline_mode = #tpu.pipeline_mode<synchronous>, transform_indices = @transform_4, window_bounds = array<i64: 1, 32>}, {pipeline_mode = #tpu.pipeline_mode<synchronous>, transform_indices = @transform_5, window_bounds = array<i64: 32, 32>}, {pipeline_mode = #tpu.pipeline_mode<synchronous>, transform_indices = @transform_6, window_bounds = array<i64: 1, 32>}, {pipeline_mode = #tpu.pipeline_mode<synchronous>, transform_indices = @transform_7, window_bounds = array<i64: 32, 32>}, {pipeline_mode = #tpu.pipeline_mode<synchronous>, transform_indices = @transform_8, window_bounds = array<i64: 1, 32>}, {pipeline_mode = #tpu.pipeline_mode<synchronous>, transform_indices = @transform_9, window_bounds = array<i64: 32, 32>}, {pipeline_mode = #tpu.pipeline_mode<synchronous>, transform_indices = @transform_10, window_bounds = array<i64: 1, 32>}, {pipeline_mode = #tpu.pipeline_mode<synchronous>, transform_indices = @transform_11, window_bounds = array<i64: 1, 32>}, {pipeline_mode = #tpu.pipeline_mode<synchronous>, transform_indices = @transform_12, window_bounds = array<i64: 1, 32>}, {pipeline_mode = #tpu.pipeline_mode<synchronous>, transform_indices = @transform_13, window_bounds = array<i64: 32, 32>}, {pipeline_mode = #tpu.pipeline_mode<synchronous>, transform_indices = @transform_14, window_bounds = array<i64: 1, 32>}, {pipeline_mode = #tpu.pipeline_mode<synchronous>, transform_indices = @transform_15, window_bounds = array<i64: 32, 32>}, {pipeline_mode = #tpu.pipeline_mode<synchronous>, transform_indices = @transform_16, window_bounds = array<i64: 1, 32>}, {pipeline_mode = #tpu.pipeline_mode<synchronous>, transform_indices = @transform_17, window_bounds = array<i64: 32, 32>}, {pipeline_mode = #tpu.pipeline_mode<synchronous>, transform_indices = @transform_18, window_bounds = array<i64: 1, 32>}, {pipeline_mode = #tpu.pipeline_mode<synchronous>, transform_indices = @transform_19, window_bounds = array<i64: 32, 32>}, {pipeline_mode = #tpu.pipeline_mode<synchronous>, transform_indices = @transform_20, window_bounds = array<i64: 1, 32>}, {pipeline_mode = #tpu.pipeline_mode<synchronous>, transform_indices = @transform_21, window_bounds = array<i64: 1, 32>}, {pipeline_mode = #tpu.pipeline_mode<synchronous>, transform_indices = @transform_22, window_bounds = array<i64: 1, 32>}, {pipeline_mode = #tpu.pipeline_mode<synchronous>, transform_indices = @transform_23, window_bounds = array<i64: 32, 64>}, {pipeline_mode = #tpu.pipeline_mode<synchronous>, transform_indices = @transform_24, window_bounds = array<i64: 1, 64>}, {pipeline_mode = #tpu.pipeline_mode<synchronous>, transform_indices = @transform_25, window_bounds = array<i64: 64, 32>}, {pipeline_mode = #tpu.pipeline_mode<synchronous>, transform_indices = @transform_26, window_bounds = array<i64: 1, 32>}, {pipeline_mode = #tpu.pipeline_mode<synchronous>, transform_indices = @transform_27, window_bounds = array<i64: 1, 32>}, {pipeline_mode = #tpu.pipeline_mode<synchronous>, transform_indices = @transform_28, window_bounds = array<i64: 1, 32>}, {transform_indices = @transform_29, window_bounds = array<i64: 1, 8, 32>}]} {
    %c0 = arith.constant 0 : index
    %c0_0 = arith.constant 0 : index
    %c0_1 = arith.constant 0 : index
    %0 = vector.load %arg1[%c0, %c0_0, %c0_1] : memref<1x8x32xf32, #tpu.memory_space<vmem>>, vector<1x8x32xf32>
    %1 = vector.shape_cast %0 : vector<1x8x32xf32> to vector<8x32xf32>
    %2 = arith.truncf %1 : vector<8x32xf32> to vector<8x32xbf16>
    %c0_2 = arith.constant 0 : index
    %c0_3 = arith.constant 0 : index
    %c0_4 = arith.constant 0 : index
    %3 = vector.load %arg2[%c0_2, %c0_3, %c0_4] : memref<1x8x32xf32, #tpu.memory_space<vmem>>, vector<1x8x32xf32>
    %4 = vector.shape_cast %3 : vector<1x8x32xf32> to vector<8x32xf32>
    %5 = arith.truncf %4 : vector<8x32xf32> to vector<8x32xbf16>
    %c0_5 = arith.constant 0 : index
    %c0_6 = arith.constant 0 : index
    %6 = vector.load %arg4[%c0_5, %c0_6] : memref<32x32xbf16, #tpu.memory_space<vmem>>, vector<32x32xbf16>
    %cst = arith.constant dense<0.000000e+00> : vector<8x32xf32>
    %7 = tpu.matmul %2, %6, %cst {dimension_numbers = #tpu.dot_dimension_numbers<[1], [0], [0], [1], [0, 0, 1, 1], [], []>} : vector<8x32xbf16>, vector<32x32xbf16>, vector<8x32xf32> -> vector<8x32xf32>
    %c0_7 = arith.constant 0 : index
    %c0_8 = arith.constant 0 : index
    %8 = vector.load %arg5[%c0_7, %c0_8] : memref<1x32xf32, #tpu.memory_space<vmem>>, vector<1x32xf32>
    %9 = vector.broadcast %8 : vector<1x32xf32> to vector<8x32xf32>
    %10 = arith.addf %7, %9 : vector<8x32xf32>
    %11 = arith.truncf %10 : vector<8x32xf32> to vector<8x32xbf16>
    %12 = vector.shape_cast %11 : vector<8x32xbf16> to vector<1x8x32xbf16>
    %c0_9 = arith.constant 0 : index
    %c0_10 = arith.constant 0 : index
    %13 = vector.load %arg6[%c0_9, %c0_10] : memref<32x32xbf16, #tpu.memory_space<vmem>>, vector<32x32xbf16>
    %cst_11 = arith.constant dense<0.000000e+00> : vector<8x32xf32>
    %14 = tpu.matmul %2, %13, %cst_11 {dimension_numbers = #tpu.dot_dimension_numbers<[1], [0], [0], [1], [0, 0, 1, 1], [], []>} : vector<8x32xbf16>, vector<32x32xbf16>, vector<8x32xf32> -> vector<8x32xf32>
    %c0_12 = arith.constant 0 : index
    %c0_13 = arith.constant 0 : index
    %15 = vector.load %arg7[%c0_12, %c0_13] : memref<1x32xf32, #tpu.memory_space<vmem>>, vector<1x32xf32>
    %16 = vector.broadcast %15 : vector<1x32xf32> to vector<8x32xf32>
    %17 = arith.addf %14, %16 : vector<8x32xf32>
    %18 = arith.truncf %17 : vector<8x32xf32> to vector<8x32xbf16>
    %19 = vector.shape_cast %18 : vector<8x32xbf16> to vector<1x8x32xbf16>
    %c0_14 = arith.constant 0 : index
    %c0_15 = arith.constant 0 : index
    %20 = vector.load %arg8[%c0_14, %c0_15] : memref<32x32xbf16, #tpu.memory_space<vmem>>, vector<32x32xbf16>
    %cst_16 = arith.constant dense<0.000000e+00> : vector<8x32xf32>
    %21 = tpu.matmul %2, %20, %cst_16 {dimension_numbers = #tpu.dot_dimension_numbers<[1], [0], [0], [1], [0, 0, 1, 1], [], []>} : vector<8x32xbf16>, vector<32x32xbf16>, vector<8x32xf32> -> vector<8x32xf32>
    %c0_17 = arith.constant 0 : index
    %c0_18 = arith.constant 0 : index
    %22 = vector.load %arg9[%c0_17, %c0_18] : memref<1x32xf32, #tpu.memory_space<vmem>>, vector<1x32xf32>
    %23 = vector.broadcast %22 : vector<1x32xf32> to vector<8x32xf32>
    %24 = arith.addf %21, %23 : vector<8x32xf32>
    %25 = arith.truncf %24 : vector<8x32xf32> to vector<8x32xbf16>
    %26 = vector.shape_cast %25 : vector<8x32xbf16> to vector<1x8x32xbf16>
    %cst_19 = arith.constant dense<0.000000e+00> : vector<1x8x8xf32>
    %27 = tpu.matmul %12, %19, %cst_19 {dimension_numbers = #tpu.dot_dimension_numbers<[2], [2], [1], [1], [0, 0, 0, 1, 1, 1], [0], [0]>} : vector<1x8x32xbf16>, vector<1x8x32xbf16>, vector<1x8x8xf32> -> vector<1x8x8xf32>
    %c0_20 = arith.constant 0 : index
    %c0_21 = arith.constant 0 : index
    %c0_22 = arith.constant 0 : index
    %28 = vector.load %arg3[%c0_20, %c0_21, %c0_22] : memref<1x8x8xi8, #tpu.memory_space<vmem>>, vector<1x8x8xi8>
    %c0_i8 = arith.constant 0 : i8
    %29 = vector.broadcast %c0_i8 : i8 to vector<1x8x8xi8>
    %30 = arith.cmpi ne, %28, %29 : vector<1x8x8xi8>
    %cst_23 = arith.constant -1.000000e+09 : f32
    %31 = vector.broadcast %cst_23 : f32 to vector<1x8x8xf32>
    %32 = arith.select %30, %31, %27 : vector<1x8x8xi1>, vector<1x8x8xf32>
    %cst_24 = arith.constant dense<0xFF800000> : vector<1x8xf32>
    %33 = vector.multi_reduction <maximumf>, %32, %cst_24 [2] : vector<1x8x8xf32> to vector<1x8xf32>
    %34 = vector.shape_cast %33 : vector<1x8xf32> to vector<1x8x1xf32>
    %35 = vector.broadcast %34 : vector<1x8x1xf32> to vector<1x8x8xf32>
    %36 = arith.subf %32, %35 : vector<1x8x8xf32>
    %37 = math.exp %36 : vector<1x8x8xf32>
    %cst_25 = arith.constant dense<0.000000e+00> : vector<1x8xf32>
    %38 = vector.multi_reduction <add>, %37, %cst_25 [2] : vector<1x8x8xf32> to vector<1x8xf32>
    %39 = vector.shape_cast %38 : vector<1x8xf32> to vector<1x8x1xf32>
    %40 = tpu.reciprocal %39 {approx = true} : vector<1x8x1xf32> -> vector<1x8x1xf32>
    %41 = vector.broadcast %40 : vector<1x8x1xf32> to vector<1x8x8xf32>
    %42 = arith.mulf %37, %41 : vector<1x8x8xf32>
    %43 = arith.truncf %42 : vector<1x8x8xf32> to vector<1x8x8xbf16>
    %cst_26 = arith.constant dense<0.000000e+00> : vector<1x8x32xf32>
    %44 = tpu.matmul %43, %26, %cst_26 {dimension_numbers = #tpu.dot_dimension_numbers<[2], [1], [1], [2], [0, 0, 0, 1, 1, 2], [0], [0]>} : vector<1x8x8xbf16>, vector<1x8x32xbf16>, vector<1x8x32xf32> -> vector<1x8x32xf32>
    %45 = arith.truncf %44 : vector<1x8x32xf32> to vector<1x8x32xbf16>
    %46 = vector.shape_cast %45 : vector<1x8x32xbf16> to vector<8x32xbf16>
    %c0_27 = arith.constant 0 : index
    %c0_28 = arith.constant 0 : index
    %47 = vector.load %arg10[%c0_27, %c0_28] : memref<32x32xbf16, #tpu.memory_space<vmem>>, vector<32x32xbf16>
    %cst_29 = arith.constant dense<0.000000e+00> : vector<8x32xf32>
    %48 = tpu.matmul %46, %47, %cst_29 {dimension_numbers = #tpu.dot_dimension_numbers<[1], [0], [0], [1], [0, 0, 1, 1], [], []>} : vector<8x32xbf16>, vector<32x32xbf16>, vector<8x32xf32> -> vector<8x32xf32>
    %c0_30 = arith.constant 0 : index
    %c0_31 = arith.constant 0 : index
    %49 = vector.load %arg11[%c0_30, %c0_31] : memref<1x32xf32, #tpu.memory_space<vmem>>, vector<1x32xf32>
    %50 = vector.broadcast %49 : vector<1x32xf32> to vector<8x32xf32>
    %51 = arith.addf %48, %50 : vector<8x32xf32>
    %52 = arith.addf %51, %1 : vector<8x32xf32>
    %cst_32 = arith.constant dense<0.000000e+00> : vector<8xf32>
    %53 = vector.multi_reduction <add>, %52, %cst_32 [1] : vector<8x32xf32> to vector<8xf32>
    %54 = vector.shape_cast %53 : vector<8xf32> to vector<8x1xf32>
    %cst_33 = arith.constant 3.200000e+01 : f32
    %55 = vector.broadcast %cst_33 : f32 to vector<8x1xf32>
    %56 = arith.divf %54, %55 : vector<8x1xf32>
    %57 = vector.broadcast %56 : vector<8x1xf32> to vector<8x32xf32>
    %58 = arith.subf %52, %57 : vector<8x32xf32>
    %59 = vector.broadcast %56 : vector<8x1xf32> to vector<8x32xf32>
    %60 = arith.subf %52, %59 : vector<8x32xf32>
    %61 = arith.mulf %58, %60 : vector<8x32xf32>
    %cst_34 = arith.constant dense<0.000000e+00> : vector<8xf32>
    %62 = vector.multi_reduction <add>, %61, %cst_34 [1] : vector<8x32xf32> to vector<8xf32>
    %63 = vector.shape_cast %62 : vector<8xf32> to vector<8x1xf32>
    %cst_35 = arith.constant 3.200000e+01 : f32
    %64 = vector.broadcast %cst_35 : f32 to vector<8x1xf32>
    %65 = arith.divf %63, %64 : vector<8x1xf32>
    %66 = vector.broadcast %56 : vector<8x1xf32> to vector<8x32xf32>
    %67 = arith.subf %52, %66 : vector<8x32xf32>
    %cst_36 = arith.constant 9.99999974E-6 : f32
    %68 = vector.broadcast %cst_36 : f32 to vector<8x1xf32>
    %69 = arith.addf %65, %68 : vector<8x1xf32>
    %70 = math.rsqrt %69 : vector<8x1xf32>
    %71 = vector.broadcast %70 : vector<8x1xf32> to vector<8x32xf32>
    %72 = arith.mulf %67, %71 : vector<8x32xf32>
    %c0_37 = arith.constant 0 : index
    %c0_38 = arith.constant 0 : index
    %73 = vector.load %arg12[%c0_37, %c0_38] : memref<1x32xf32, #tpu.memory_space<vmem>>, vector<1x32xf32>
    %74 = vector.broadcast %73 : vector<1x32xf32> to vector<8x32xf32>
    %75 = arith.mulf %72, %74 : vector<8x32xf32>
    %c0_39 = arith.constant 0 : index
    %c0_40 = arith.constant 0 : index
    %76 = vector.load %arg13[%c0_39, %c0_40] : memref<1x32xf32, #tpu.memory_space<vmem>>, vector<1x32xf32>
    %77 = vector.broadcast %76 : vector<1x32xf32> to vector<8x32xf32>
    %78 = arith.addf %75, %77 : vector<8x32xf32>
    %79 = arith.truncf %78 : vector<8x32xf32> to vector<8x32xbf16>
    %c0_41 = arith.constant 0 : index
    %c0_42 = arith.constant 0 : index
    %80 = vector.load %arg14[%c0_41, %c0_42] : memref<32x32xbf16, #tpu.memory_space<vmem>>, vector<32x32xbf16>
    %cst_43 = arith.constant dense<0.000000e+00> : vector<8x32xf32>
    %81 = tpu.matmul %79, %80, %cst_43 {dimension_numbers = #tpu.dot_dimension_numbers<[1], [0], [0], [1], [0, 0, 1, 1], [], []>} : vector<8x32xbf16>, vector<32x32xbf16>, vector<8x32xf32> -> vector<8x32xf32>
    %c0_44 = arith.constant 0 : index
    %c0_45 = arith.constant 0 : index
    %82 = vector.load %arg15[%c0_44, %c0_45] : memref<1x32xf32, #tpu.memory_space<vmem>>, vector<1x32xf32>
    %83 = vector.broadcast %82 : vector<1x32xf32> to vector<8x32xf32>
    %84 = arith.addf %81, %83 : vector<8x32xf32>
    %85 = arith.truncf %84 : vector<8x32xf32> to vector<8x32xbf16>
    %86 = vector.shape_cast %85 : vector<8x32xbf16> to vector<1x8x32xbf16>
    %c0_46 = arith.constant 0 : index
    %c0_47 = arith.constant 0 : index
    %87 = vector.load %arg16[%c0_46, %c0_47] : memref<32x32xbf16, #tpu.memory_space<vmem>>, vector<32x32xbf16>
    %cst_48 = arith.constant dense<0.000000e+00> : vector<8x32xf32>
    %88 = tpu.matmul %5, %87, %cst_48 {dimension_numbers = #tpu.dot_dimension_numbers<[1], [0], [0], [1], [0, 0, 1, 1], [], []>} : vector<8x32xbf16>, vector<32x32xbf16>, vector<8x32xf32> -> vector<8x32xf32>
    %c0_49 = arith.constant 0 : index
    %c0_50 = arith.constant 0 : index
    %89 = vector.load %arg17[%c0_49, %c0_50] : memref<1x32xf32, #tpu.memory_space<vmem>>, vector<1x32xf32>
    %90 = vector.broadcast %89 : vector<1x32xf32> to vector<8x32xf32>
    %91 = arith.addf %88, %90 : vector<8x32xf32>
    %92 = arith.truncf %91 : vector<8x32xf32> to vector<8x32xbf16>
    %93 = vector.shape_cast %92 : vector<8x32xbf16> to vector<1x8x32xbf16>
    %c0_51 = arith.constant 0 : index
    %c0_52 = arith.constant 0 : index
    %94 = vector.load %arg18[%c0_51, %c0_52] : memref<32x32xbf16, #tpu.memory_space<vmem>>, vector<32x32xbf16>
    %cst_53 = arith.constant dense<0.000000e+00> : vector<8x32xf32>
    %95 = tpu.matmul %5, %94, %cst_53 {dimension_numbers = #tpu.dot_dimension_numbers<[1], [0], [0], [1], [0, 0, 1, 1], [], []>} : vector<8x32xbf16>, vector<32x32xbf16>, vector<8x32xf32> -> vector<8x32xf32>
    %c0_54 = arith.constant 0 : index
    %c0_55 = arith.constant 0 : index
    %96 = vector.load %arg19[%c0_54, %c0_55] : memref<1x32xf32, #tpu.memory_space<vmem>>, vector<1x32xf32>
    %97 = vector.broadcast %96 : vector<1x32xf32> to vector<8x32xf32>
    %98 = arith.addf %95, %97 : vector<8x32xf32>
    %99 = arith.truncf %98 : vector<8x32xf32> to vector<8x32xbf16>
    %100 = vector.shape_cast %99 : vector<8x32xbf16> to vector<1x8x32xbf16>
    %cst_56 = arith.constant dense<0.000000e+00> : vector<1x8x8xf32>
    %101 = tpu.matmul %86, %93, %cst_56 {dimension_numbers = #tpu.dot_dimension_numbers<[2], [2], [1], [1], [0, 0, 0, 1, 1, 1], [0], [0]>} : vector<1x8x32xbf16>, vector<1x8x32xbf16>, vector<1x8x8xf32> -> vector<1x8x8xf32>
    %cst_57 = arith.constant dense<0xFF800000> : vector<1x8xf32>
    %102 = vector.multi_reduction <maximumf>, %101, %cst_57 [2] : vector<1x8x8xf32> to vector<1x8xf32>
    %103 = vector.shape_cast %102 : vector<1x8xf32> to vector<1x8x1xf32>
    %104 = vector.broadcast %103 : vector<1x8x1xf32> to vector<1x8x8xf32>
    %105 = arith.subf %101, %104 : vector<1x8x8xf32>
    %106 = math.exp %105 : vector<1x8x8xf32>
    %cst_58 = arith.constant dense<0.000000e+00> : vector<1x8xf32>
    %107 = vector.multi_reduction <add>, %106, %cst_58 [2] : vector<1x8x8xf32> to vector<1x8xf32>
    %108 = vector.shape_cast %107 : vector<1x8xf32> to vector<1x8x1xf32>
    %109 = tpu.reciprocal %108 {approx = true} : vector<1x8x1xf32> -> vector<1x8x1xf32>
    %110 = vector.broadcast %109 : vector<1x8x1xf32> to vector<1x8x8xf32>
    %111 = arith.mulf %106, %110 : vector<1x8x8xf32>
    %112 = arith.truncf %111 : vector<1x8x8xf32> to vector<1x8x8xbf16>
    %cst_59 = arith.constant dense<0.000000e+00> : vector<1x8x32xf32>
    %113 = tpu.matmul %112, %100, %cst_59 {dimension_numbers = #tpu.dot_dimension_numbers<[2], [1], [1], [2], [0, 0, 0, 1, 1, 2], [0], [0]>} : vector<1x8x8xbf16>, vector<1x8x32xbf16>, vector<1x8x32xf32> -> vector<1x8x32xf32>
    %114 = arith.truncf %113 : vector<1x8x32xf32> to vector<1x8x32xbf16>
    %115 = vector.shape_cast %114 : vector<1x8x32xbf16> to vector<8x32xbf16>
    %c0_60 = arith.constant 0 : index
    %c0_61 = arith.constant 0 : index
    %116 = vector.load %arg20[%c0_60, %c0_61] : memref<32x32xbf16, #tpu.memory_space<vmem>>, vector<32x32xbf16>
    %cst_62 = arith.constant dense<0.000000e+00> : vector<8x32xf32>
    %117 = tpu.matmul %115, %116, %cst_62 {dimension_numbers = #tpu.dot_dimension_numbers<[1], [0], [0], [1], [0, 0, 1, 1], [], []>} : vector<8x32xbf16>, vector<32x32xbf16>, vector<8x32xf32> -> vector<8x32xf32>
    %c0_63 = arith.constant 0 : index
    %c0_64 = arith.constant 0 : index
    %118 = vector.load %arg21[%c0_63, %c0_64] : memref<1x32xf32, #tpu.memory_space<vmem>>, vector<1x32xf32>
    %119 = vector.broadcast %118 : vector<1x32xf32> to vector<8x32xf32>
    %120 = arith.addf %117, %119 : vector<8x32xf32>
    %121 = arith.addf %120, %78 : vector<8x32xf32>
    %cst_65 = arith.constant dense<0.000000e+00> : vector<8xf32>
    %122 = vector.multi_reduction <add>, %121, %cst_65 [1] : vector<8x32xf32> to vector<8xf32>
    %123 = vector.shape_cast %122 : vector<8xf32> to vector<8x1xf32>
    %cst_66 = arith.constant 3.200000e+01 : f32
    %124 = vector.broadcast %cst_66 : f32 to vector<8x1xf32>
    %125 = arith.divf %123, %124 : vector<8x1xf32>
    %126 = vector.broadcast %125 : vector<8x1xf32> to vector<8x32xf32>
    %127 = arith.subf %121, %126 : vector<8x32xf32>
    %128 = vector.broadcast %125 : vector<8x1xf32> to vector<8x32xf32>
    %129 = arith.subf %121, %128 : vector<8x32xf32>
    %130 = arith.mulf %127, %129 : vector<8x32xf32>
    %cst_67 = arith.constant dense<0.000000e+00> : vector<8xf32>
    %131 = vector.multi_reduction <add>, %130, %cst_67 [1] : vector<8x32xf32> to vector<8xf32>
    %132 = vector.shape_cast %131 : vector<8xf32> to vector<8x1xf32>
    %cst_68 = arith.constant 3.200000e+01 : f32
    %133 = vector.broadcast %cst_68 : f32 to vector<8x1xf32>
    %134 = arith.divf %132, %133 : vector<8x1xf32>
    %135 = vector.broadcast %125 : vector<8x1xf32> to vector<8x32xf32>
    %136 = arith.subf %121, %135 : vector<8x32xf32>
    %cst_69 = arith.constant 9.99999974E-6 : f32
    %137 = vector.broadcast %cst_69 : f32 to vector<8x1xf32>
    %138 = arith.addf %134, %137 : vector<8x1xf32>
    %139 = math.rsqrt %138 : vector<8x1xf32>
    %140 = vector.broadcast %139 : vector<8x1xf32> to vector<8x32xf32>
    %141 = arith.mulf %136, %140 : vector<8x32xf32>
    %c0_70 = arith.constant 0 : index
    %c0_71 = arith.constant 0 : index
    %142 = vector.load %arg22[%c0_70, %c0_71] : memref<1x32xf32, #tpu.memory_space<vmem>>, vector<1x32xf32>
    %143 = vector.broadcast %142 : vector<1x32xf32> to vector<8x32xf32>
    %144 = arith.mulf %141, %143 : vector<8x32xf32>
    %c0_72 = arith.constant 0 : index
    %c0_73 = arith.constant 0 : index
    %145 = vector.load %arg23[%c0_72, %c0_73] : memref<1x32xf32, #tpu.memory_space<vmem>>, vector<1x32xf32>
    %146 = vector.broadcast %145 : vector<1x32xf32> to vector<8x32xf32>
    %147 = arith.addf %144, %146 : vector<8x32xf32>
    %148 = arith.truncf %147 : vector<8x32xf32> to vector<8x32xbf16>
    %c0_74 = arith.constant 0 : index
    %c0_75 = arith.constant 0 : index
    %149 = vector.load %arg24[%c0_74, %c0_75] : memref<32x64xbf16, #tpu.memory_space<vmem>>, vector<32x64xbf16>
    %cst_76 = arith.constant dense<0.000000e+00> : vector<8x64xf32>
    %150 = tpu.matmul %148, %149, %cst_76 {dimension_numbers = #tpu.dot_dimension_numbers<[1], [0], [0], [1], [0, 0, 1, 1], [], []>} : vector<8x32xbf16>, vector<32x64xbf16>, vector<8x64xf32> -> vector<8x64xf32>
    %c0_77 = arith.constant 0 : index
    %c0_78 = arith.constant 0 : index
    %151 = vector.load %arg25[%c0_77, %c0_78] : memref<1x64xf32, #tpu.memory_space<vmem>>, vector<1x64xf32>
    %152 = vector.broadcast %151 : vector<1x64xf32> to vector<8x64xf32>
    %153 = arith.addf %150, %152 : vector<8x64xf32>
    %cst_79 = arith.constant 0.000000e+00 : f32
    %154 = vector.broadcast %cst_79 : f32 to vector<8x64xf32>
    %155 = arith.maximumf %153, %154 : vector<8x64xf32>
    %156 = arith.truncf %155 : vector<8x64xf32> to vector<8x64xbf16>
    %c0_80 = arith.constant 0 : index
    %c0_81 = arith.constant 0 : index
    %157 = vector.load %arg26[%c0_80, %c0_81] : memref<64x32xbf16, #tpu.memory_space<vmem>>, vector<64x32xbf16>
    %cst_82 = arith.constant dense<0.000000e+00> : vector<8x32xf32>
    %158 = tpu.matmul %156, %157, %cst_82 {dimension_numbers = #tpu.dot_dimension_numbers<[1], [0], [0], [1], [0, 0, 1, 1], [], []>} : vector<8x64xbf16>, vector<64x32xbf16>, vector<8x32xf32> -> vector<8x32xf32>
    %c0_83 = arith.constant 0 : index
    %c0_84 = arith.constant 0 : index
    %159 = vector.load %arg27[%c0_83, %c0_84] : memref<1x32xf32, #tpu.memory_space<vmem>>, vector<1x32xf32>
    %160 = vector.broadcast %159 : vector<1x32xf32> to vector<8x32xf32>
    %161 = arith.addf %158, %160 : vector<8x32xf32>
    %162 = arith.addf %161, %147 : vector<8x32xf32>
    %cst_85 = arith.constant dense<0.000000e+00> : vector<8xf32>
    %163 = vector.multi_reduction <add>, %162, %cst_85 [1] : vector<8x32xf32> to vector<8xf32>
    %164 = vector.shape_cast %163 : vector<8xf32> to vector<8x1xf32>
    %cst_86 = arith.constant 3.200000e+01 : f32
    %165 = vector.broadcast %cst_86 : f32 to vector<8x1xf32>
    %166 = arith.divf %164, %165 : vector<8x1xf32>
    %167 = vector.broadcast %166 : vector<8x1xf32> to vector<8x32xf32>
    %168 = arith.subf %162, %167 : vector<8x32xf32>
    %169 = vector.broadcast %166 : vector<8x1xf32> to vector<8x32xf32>
    %170 = arith.subf %162, %169 : vector<8x32xf32>
    %171 = arith.mulf %168, %170 : vector<8x32xf32>
    %cst_87 = arith.constant dense<0.000000e+00> : vector<8xf32>
    %172 = vector.multi_reduction <add>, %171, %cst_87 [1] : vector<8x32xf32> to vector<8xf32>
    %173 = vector.shape_cast %172 : vector<8xf32> to vector<8x1xf32>
    %cst_88 = arith.constant 3.200000e+01 : f32
    %174 = vector.broadcast %cst_88 : f32 to vector<8x1xf32>
    %175 = arith.divf %173, %174 : vector<8x1xf32>
    %176 = vector.broadcast %166 : vector<8x1xf32> to vector<8x32xf32>
    %177 = arith.subf %162, %176 : vector<8x32xf32>
    %cst_89 = arith.constant 9.99999974E-6 : f32
    %178 = vector.broadcast %cst_89 : f32 to vector<8x1xf32>
    %179 = arith.addf %175, %178 : vector<8x1xf32>
    %180 = math.rsqrt %179 : vector<8x1xf32>
    %181 = vector.broadcast %180 : vector<8x1xf32> to vector<8x32xf32>
    %182 = arith.mulf %177, %181 : vector<8x32xf32>
    %c0_90 = arith.constant 0 : index
    %c0_91 = arith.constant 0 : index
    %183 = vector.load %arg28[%c0_90, %c0_91] : memref<1x32xf32, #tpu.memory_space<vmem>>, vector<1x32xf32>
    %184 = vector.broadcast %183 : vector<1x32xf32> to vector<8x32xf32>
    %185 = arith.mulf %182, %184 : vector<8x32xf32>
    %c0_92 = arith.constant 0 : index
    %c0_93 = arith.constant 0 : index
    %186 = vector.load %arg29[%c0_92, %c0_93] : memref<1x32xf32, #tpu.memory_space<vmem>>, vector<1x32xf32>
    %187 = vector.broadcast %186 : vector<1x32xf32> to vector<8x32xf32>
    %188 = arith.addf %185, %187 : vector<8x32xf32>
    %189 = vector.shape_cast %188 : vector<8x32xf32> to vector<1x8x32xf32>
    %c0_94 = arith.constant 0 : index
    %c0_95 = arith.constant 0 : index
    %c0_96 = arith.constant 0 : index
    %190 = vector.load %arg30[%c0_94, %c0_95, %c0_96] : memref<1x8x32xf32, #tpu.memory_space<vmem>>, vector<1x8x32xf32>
    tpu.vector_store %arg30[%c0_94, %c0_95, %c0_96], %189 {strides = array<i32>} : memref<1x8x32xf32, #tpu.memory_space<vmem>>, vector<1x8x32xf32>,
    return
  }
  func.func @transform_0(%arg0: i32) -> (i32, i32, i32) {
    %c0_i32 = arith.constant 0 : i32
    %c0_i32_0 = arith.constant 0 : i32
    %c0_i32_1 = arith.constant 0 : i32
    return %arg0, %c0_i32, %c0_i32_0 : i32, i32, i32
  }
  func.func @transform_1(%arg0: i32) -> (i32, i32, i32) {
    %c0_i32 = arith.constant 0 : i32
    %c0_i32_0 = arith.constant 0 : i32
    %c0_i32_1 = arith.constant 0 : i32
    return %arg0, %c0_i32, %c0_i32_0 : i32, i32, i32
  }
  func.func @transform_2(%arg0: i32) -> (i32, i32, i32) {
    %c0_i32 = arith.constant 0 : i32
    %c0_i32_0 = arith.constant 0 : i32
    %c0_i32_1 = arith.constant 0 : i32
    return %arg0, %c0_i32, %c0_i32_0 : i32, i32, i32
  }
  func.func @transform_3(%arg0: i32) -> (i32, i32) {
    %c0_i32 = arith.constant 0 : i32
    %c0_i32_0 = arith.constant 0 : i32
    %c0_i32_1 = arith.constant 0 : i32
    return %c0_i32, %c0_i32_0 : i32, i32
  }
  func.func @transform_4(%arg0: i32) -> (i32, i32) {
    %c0_i32 = arith.constant 0 : i32
    %c0_i32_0 = arith.constant 0 : i32
    %c0_i32_1 = arith.constant 0 : i32
    return %c0_i32, %c0_i32_0 : i32, i32
  }
  func.func @transform_5(%arg0: i32) -> (i32, i32) {
    %c0_i32 = arith.constant 0 : i32
    %c0_i32_0 = arith.constant 0 : i32
    %c0_i32_1 = arith.constant 0 : i32
    return %c0_i32, %c0_i32_0 : i32, i32
  }
  func.func @transform_6(%arg0: i32) -> (i32, i32) {
    %c0_i32 = arith.constant 0 : i32
    %c0_i32_0 = arith.constant 0 : i32
    %c0_i32_1 = arith.constant 0 : i32
    return %c0_i32, %c0_i32_0 : i32, i32
  }
  func.func @transform_7(%arg0: i32) -> (i32, i32) {
    %c0_i32 = arith.constant 0 : i32
    %c0_i32_0 = arith.constant 0 : i32
    %c0_i32_1 = arith.constant 0 : i32
    return %c0_i32, %c0_i32_0 : i32, i32
  }
  func.func @transform_8(%arg0: i32) -> (i32, i32) {
    %c0_i32 = arith.constant 0 : i32
    %c0_i32_0 = arith.constant 0 : i32
    %c0_i32_1 = arith.constant 0 : i32
    return %c0_i32, %c0_i32_0 : i32, i32
  }
  func.func @transform_9(%arg0: i32) -> (i32, i32) {
    %c0_i32 = arith.constant 0 : i32
    %c0_i32_0 = arith.constant 0 : i32
    %c0_i32_1 = arith.constant 0 : i32
    return %c0_i32, %c0_i32_0 : i32, i32
  }
  func.func @transform_10(%arg0: i32) -> (i32, i32) {
    %c0_i32 = arith.constant 0 : i32
    %c0_i32_0 = arith.constant 0 : i32
    %c0_i32_1 = arith.constant 0 : i32
    return %c0_i32, %c0_i32_0 : i32, i32
  }
  func.func @transform_11(%arg0: i32) -> (i32, i32) {
    %c0_i32 = arith.constant 0 : i32
    %c0_i32_0 = arith.constant 0 : i32
    %c0_i32_1 = arith.constant 0 : i32
    return %c0_i32, %c0_i32_0 : i32, i32
  }
  func.func @transform_12(%arg0: i32) -> (i32, i32) {
    %c0_i32 = arith.constant 0 : i32
    %c0_i32_0 = arith.constant 0 : i32
    %c0_i32_1 = arith.constant 0 : i32
    return %c0_i32, %c0_i32_0 : i32, i32
  }
  func.func @transform_13(%arg0: i32) -> (i32, i32) {
    %c0_i32 = arith.constant 0 : i32
    %c0_i32_0 = arith.constant 0 : i32
    %c0_i32_1 = arith.constant 0 : i32
    return %c0_i32, %c0_i32_0 : i32, i32
  }
  func.func @transform_14(%arg0: i32) -> (i32, i32) {
    %c0_i32 = arith.constant 0 : i32
    %c0_i32_0 = arith.constant 0 : i32
    %c0_i32_1 = arith.constant 0 : i32
    return %c0_i32, %c0_i32_0 : i32, i32
  }
  func.func @transform_15(%arg0: i32) -> (i32, i32) {
    %c0_i32 = arith.constant 0 : i32
    %c0_i32_0 = arith.constant 0 : i32
    %c0_i32_1 = arith.constant 0 : i32
    return %c0_i32, %c0_i32_0 : i32, i32
  }
  func.func @transform_16(%arg0: i32) -> (i32, i32) {
    %c0_i32 = arith.constant 0 : i32
    %c0_i32_0 = arith.constant 0 : i32
    %c0_i32_1 = arith.constant 0 : i32
    return %c0_i32, %c0_i32_0 : i32, i32
  }
  func.func @transform_17(%arg0: i32) -> (i32, i32) {
    %c0_i32 = arith.constant 0 : i32
    %c0_i32_0 = arith.constant 0 : i32
    %c0_i32_1 = arith.constant 0 : i32
    return %c0_i32, %c0_i32_0 : i32, i32
  }
  func.func @transform_18(%arg0: i32) -> (i32, i32) {
    %c0_i32 = arith.constant 0 : i32
    %c0_i32_0 = arith.constant 0 : i32
    %c0_i32_1 = arith.constant 0 : i32
    return %c0_i32, %c0_i32_0 : i32, i32
  }
  func.func @transform_19(%arg0: i32) -> (i32, i32) {
    %c0_i32 = arith.constant 0 : i32
    %c0_i32_0 = arith.constant 0 : i32
    %c0_i32_1 = arith.constant 0 : i32
    return %c0_i32, %c0_i32_0 : i32, i32
  }
  func.func @transform_20(%arg0: i32) -> (i32, i32) {
    %c0_i32 = arith.constant 0 : i32
    %c0_i32_0 = arith.constant 0 : i32
    %c0_i32_1 = arith.constant 0 : i32
    return %c0_i32, %c0_i32_0 : i32, i32
  }
  func.func @transform_21(%arg0: i32) -> (i32, i32) {
    %c0_i32 = arith.constant 0 : i32
    %c0_i32_0 = arith.constant 0 : i32
    %c0_i32_1 = arith.constant 0 : i32
    return %c0_i32, %c0_i32_0 : i32, i32
  }
  func.func @transform_22(%arg0: i32) -> (i32, i32) {
    %c0_i32 = arith.constant 0 : i32
    %c0_i32_0 = arith.constant 0 : i32
    %c0_i32_1 = arith.constant 0 : i32
    return %c0_i32, %c0_i32_0 : i32, i32
  }
  func.func @transform_23(%arg0: i32) -> (i32, i32) {
    %c0_i32 = arith.constant 0 : i32
    %c0_i32_0 = arith.constant 0 : i32
    %c0_i32_1 = arith.constant 0 : i32
    return %c0_i32, %c0_i32_0 : i32, i32
  }
  func.func @transform_24(%arg0: i32) -> (i32, i32) {
    %c0_i32 = arith.constant 0 : i32
    %c0_i32_0 = arith.constant 0 : i32
    %c0_i32_1 = arith.constant 0 : i32
    return %c0_i32, %c0_i32_0 : i32, i32
  }
  func.func @transform_25(%arg0: i32) -> (i32, i32) {
    %c0_i32 = arith.constant 0 : i32
    %c0_i32_0 = arith.constant 0 : i32
    %c0_i32_1 = arith.constant 0 : i32
    return %c0_i32, %c0_i32_0 : i32, i32
  }
  func.func @transform_26(%arg0: i32) -> (i32, i32) {
    %c0_i32 = arith.constant 0 : i32
    %c0_i32_0 = arith.constant 0 : i32
    %c0_i32_1 = arith.constant 0 : i32
    return %c0_i32, %c0_i32_0 : i32, i32
  }
  func.func @transform_27(%arg0: i32) -> (i32, i32) {
    %c0_i32 = arith.constant 0 : i32
    %c0_i32_0 = arith.constant 0 : i32
    %c0_i32_1 = arith.constant 0 : i32
    return %c0_i32, %c0_i32_0 : i32, i32
  }
  func.func @transform_28(%arg0: i32) -> (i32, i32) {
    %c0_i32 = arith.constant 0 : i32
    %c0_i32_0 = arith.constant 0 : i32
    %c0_i32_1 = arith.constant 0 : i32
    return %c0_i32, %c0_i32_0 : i32, i32
  }
  func.func @transform_29(%arg0: i32) -> (i32, i32, i32) {
    %c0_i32 = arith.constant 0 : i32
    %c0_i32_0 = arith.constant 0 : i32
    %c0_i32_1 = arith.constant 0 : i32
    return %arg0, %c0_i32, %c0_i32_0 : i32, i32, i32
  }
}

module attributes {stable_mosaic.version = 11 : i64} {
  func.func @decoder_kernel(%arg0: i32, %arg1: memref<1x8x32xf32, #tpu.memory_space<vmem>>, %arg2: memref<1x8x32xf32, #tpu.memory_space<vmem>>, %arg3: memref<1x8x8xi8, #tpu.memory_space<vmem>>, %arg4: memref<32x32xbf16, #tpu.memory_space<vmem>>, %arg5: memref<1x32xf32, #tpu.memory_space<vmem>>, %arg6: memref<32x32xbf16, #tpu.memory_space<vmem>>, %arg7: memref<1x32xf32, #tpu.memory_space<vmem>>, %arg8: memref<32x32xbf16, #tpu.memory_space<vmem>>, %arg9: memref<1x32xf32, #tpu.memory_space<vmem>>, %arg10: memref<32x32xbf16, #tpu.memory_space<vmem>>, %arg11: memref<1x32xf32, #tpu.memory_space<vmem>>, %arg12: memref<1x32xf32, #tpu.memory_space<vmem>>, %arg13: memref<1x32xf32, #tpu.memory_space<vmem>>, %arg14: memref<32x32xbf16, #tpu.memory_space<vmem>>, %arg15: memref<1x32xf32, #tpu.memory_space<vmem>>, %arg16: memref<32x32xbf16, #tpu.memory_space<vmem>>, %arg17: memref<1x32xf32, #tpu.memory_space<vmem>>, %arg18: memref<32x32xbf16, #tpu.memory_space<vmem>>, %arg19: memref<1x32xf32, #tpu.memory_space<vmem>>, %arg20: memref<32x32xbf16, #tpu.memory_space<vmem>>, %arg21: memref<1x32xf32, #tpu.memory_space<vmem>>, %arg22: memref<1x32xf32, #tpu.memory_space<vmem>>, %arg23: memref<1x32xf32, #tpu.memory_space<vmem>>, %arg24: memref<32x64xbf16, #tpu.memory_space<vmem>>, %arg25: memref<1x64xf32, #tpu.memory_space<vmem>>, %arg26: memref<64x32xbf16, #tpu.memory_space<vmem>>, %arg27: memref<1x32xf32, #tpu.memory_space<vmem>>, %arg28: memref<1x32xf32, #tpu.memory_space<vmem>>, %arg29: memref<1x32xf32, #tpu.memory_space<vmem>>, %arg30: memref<1x8x32xf32, #tpu.memory_space<vmem>>) attributes {dimension_semantics = [#tpu.dimension_semantics<parallel>], iteration_bounds = array<i64: 2>, scalar_prefetch = 0 : i64, scratch_operands = 0 : i64, tpu.core_type = #tpu.core_type<tc>, window_params = [{transform_indices = @transform_0, window_bounds = array<i64: 1, 8, 32>}, {transform_indices = @transform_1, window_bounds = array<i64: 1, 8, 32>}, {transform_indices = @transform_2, window_bounds = array<i64: 1, 8, 8>}, {pipeline_mode = #tpu.pipeline_mode<synchronous>, transform_indices = @transform_3, window_bounds = array<i64: 32, 32>}, {pipeline_mode = #tpu.pipeline_mode<synchronous>, transform_indices = @transform_4, window_bounds = array<i64: 1, 32>}, {pipeline_mode = #tpu.pipeline_mode<synchronous>, transform_indices = @transform_5, window_bounds = array<i64: 32, 32>}, {pipeline_mode = #tpu.pipeline_mode<synchronous>, transform_indices = @transform_6, window_bounds = array<i64: 1, 32>}, {pipeline_mode = #tpu.pipeline_mode<synchronous>, transform_indices = @transform_7, window_bounds = array<i64: 32, 32>}, {pipeline_mode = #tpu.pipeline_mode<synchronous>, transform_indices = @transform_8, window_bounds = array<i64: 1, 32>}, {pipeline_mode = #tpu.pipeline_mode<synchronous>, transform_indices = @transform_9, window_bounds = array<i64: 32, 32>}, {pipeline_mode = #tpu.pipeline_mode<synchronous>, transform_indices = @transform_10, window_bounds = array<i64: 1, 32>}, {pipeline_mode = #tpu.pipeline_mode<synchronous>, transform_indices = @transform_11, window_bounds = array<i64: 1, 32>}, {pipeline_mode = #tpu.pipeline_mode<synchronous>, transform_indices = @transform_12, window_bounds = array<i64: 1, 32>}, {pipeline_mode = #tpu.pipeline_mode<synchronous>, transform_indices = @transform_13, window_bounds = array<i64: 32, 32>}, {pipeline_mode = #tpu.pipeline_mode<synchronous>, transform_indices = @transform_14, window_bounds = array<i64: 1, 32>}, {pipeline_mode = #tpu.pipeline_mode<synchronous>, transform_indices = @transform_15, window_bounds = array<i64: 32, 32>}, {pipeline_mode = #tpu.pipeline_mode<synchronous>, transform_indices = @transform_16, window_bounds = array<i64: 1, 32>}, {pipeline_mode = #tpu.pipeline_mode<synchronous>, transform_indices = @transform_17, window_bounds = array<i64: 32, 32>}, {pipeline_mode = #tpu.pipeline_mode<synchronous>, transform_indices = @transform_18, window_bounds = array<i64: 1, 32>}, {pipeline_mode = #tpu.pipeline_mode<synchronous>, transform_indices = @transform_19, window_bounds = array<i64: 32, 32>}, {pipeline_mode = #tpu.pipeline_mode<synchronous>, transform_indices = @transform_20, window_bounds = array<i64: 1, 32>}, {pipeline_mode = #tpu.pipeline_mode<synchronous>, transform_indices = @transform_21, window_bounds = array<i64: 1, 32>}, {pipeline_mode = #tpu.pipeline_mode<synchronous>, transform_indices = @transform_22, window_bounds = array<i64: 1, 32>}, {pipeline_mode = #tpu.pipeline_mode<synchronous>, transform_indices = @transform_23, window_bounds = array<i64: 32, 64>}, {pipeline_mode = #tpu.pipeline_mode<synchronous>, transform_indices = @transform_24, window_bounds = array<i64: 1, 64>}, {pipeline_mode = #tpu.pipeline_mode<synchronous>, transform_indices = @transform_25, window_bounds = array<i64: 64, 32>}, {pipeline_mode = #tpu.pipeline_mode<synchronous>, transform_indices = @transform_26, window_bounds = array<i64: 1, 32>}, {pipeline_mode = #tpu.pipeline_mode<synchronous>, transform_indices = @transform_27, window_bounds = array<i64: 1, 32>}, {pipeline_mode = #tpu.pipeline_mode<synchronous>, transform_indices = @transform_28, window_bounds = array<i64: 1, 32>}, {transform_indices = @transform_29, window_bounds = array<i64: 1, 8, 32>}]} {
    %c0 = arith.constant 0 : index
    %c0_0 = arith.constant 0 : index
    %c0_1 = arith.constant 0 : index
    %0 = vector.load %arg1[%c0, %c0_0, %c0_1] : memref<1x8x32xf32, #tpu.memory_space<vmem>>, vector<1x8x32xf32>
    %1 = vector.shape_cast %0 : vector<1x8x32xf32> to vector<8x32xf32>
    %2 = arith.truncf %1 : vector<8x32xf32> to vector<8x32xbf16>
    %c0_2 = arith.constant 0 : index
    %c0_3 = arith.constant 0 : index
    %c0_4 = arith.constant 0 : index
    %3 = vector.load %arg2[%c0_2, %c0_3, %c0_4] : memref<1x8x32xf32, #tpu.memory_space<vmem>>, vector<1x8x32xf32>
    %4 = vector.shape_cast %3 : vector<1x8x32xf32> to vector<8x32xf32>
    %5 = arith.truncf %4 : vector<8x32xf32> to vector<8x32xbf16>
    %c0_5 = arith.constant 0 : index
    %c0_6 = arith.constant 0 : index
    %6 = vector.load %arg4[%c0_5, %c0_6] : memref<32x32xbf16, #tpu.memory_space<vmem>>, vector<32x32xbf16>
    %cst = arith.constant dense<0.000000e+00> : vector<8x32xf32>
    %7 = tpu.matmul %2, %6, %cst {dimension_numbers = #tpu.dot_dimension_numbers<[1], [0], [0], [1], [0, 0, 1, 1], [], []>} : vector<8x32xbf16>, vector<32x32xbf16>, vector<8x32xf32> -> vector<8x32xf32>
    %c0_7 = arith.constant 0 : index
    %c0_8 = arith.constant 0 : index
    %8 = vector.load %arg5[%c0_7, %c0_8] : memref<1x32xf32, #tpu.memory_space<vmem>>, vector<1x32xf32>
    %9 = vector.broadcast %8 : vector<1x32xf32> to vector<8x32xf32>
    %10 = arith.addf %7, %9 : vector<8x32xf32>
    %11 = arith.truncf %10 : vector<8x32xf32> to vector<8x32xbf16>
    %12 = vector.shape_cast %11 : vector<8x32xbf16> to vector<1x8x32xbf16>
    %c0_9 = arith.constant 0 : index
    %c0_10 = arith.constant 0 : index
    %13 = vector.load %arg6[%c0_9, %c0_10] : memref<32x32xbf16, #tpu.memory_space<vmem>>, vector<32x32xbf16>
    %cst_11 = arith.constant dense<0.000000e+00> : vector<8x32xf32>
    %14 = tpu.matmul %2, %13, %cst_11 {dimension_numbers = #tpu.dot_dimension_numbers<[1], [0], [0], [1], [0, 0, 1, 1], [], []>} : vector<8x32xbf16>, vector<32x32xbf16>, vector<8x32xf32> -> vector<8x32xf32>
    %c0_12 = arith.constant 0 : index
    %c0_13 = arith.constant 0 : index
    %15 = vector.load %arg7[%c0_12, %c0_13] : memref<1x32xf32, #tpu.memory_space<vmem>>, vector<1x32xf32>
    %16 = vector.broadcast %15 : vector<1x32xf32> to vector<8x32xf32>
    %17 = arith.addf %14, %16 : vector<8x32xf32>
    %18 = arith.truncf %17 : vector<8x32xf32> to vector<8x32xbf16>
    %19 = vector.shape_cast %18 : vector<8x32xbf16> to vector<1x8x32xbf16>
    %c0_14 = arith.constant 0 : index
    %c0_15 = arith.constant 0 : index
    %20 = vector.load %arg8[%c0_14, %c0_15] : memref<32x32xbf16, #tpu.memory_space<vmem>>, vector<32x32xbf16>
    %cst_16 = arith.constant dense<0.000000e+00> : vector<8x32xf32>
    %21 = tpu.matmul %2, %20, %cst_16 {dimension_numbers = #tpu.dot_dimension_numbers<[1], [0], [0], [1], [0, 0, 1, 1], [], []>} : vector<8x32xbf16>, vector<32x32xbf16>, vector<8x32xf32> -> vector<8x32xf32>
    %c0_17 = arith.constant 0 : index
    %c0_18 = arith.constant 0 : index
    %22 = vector.load %arg9[%c0_17, %c0_18] : memref<1x32xf32, #tpu.memory_space<vmem>>, vector<1x32xf32>
    %23 = vector.broadcast %22 : vector<1x32xf32> to vector<8x32xf32>
    %24 = arith.addf %21, %23 : vector<8x32xf32>
    %25 = arith.truncf %24 : vector<8x32xf32> to vector<8x32xbf16>
    %26 = vector.shape_cast %25 : vector<8x32xbf16> to vector<1x8x32xbf16>
    %cst_19 = arith.constant dense<0.000000e+00> : vector<1x8x8xf32>
    %27 = tpu.matmul %12, %19, %cst_19 {dimension_numbers = #tpu.dot_dimension_numbers<[2], [2], [1], [1], [0, 0, 0, 1, 1, 1], [0], [0]>} : vector<1x8x32xbf16>, vector<1x8x32xbf16>, vector<1x8x8xf32> -> vector<1x8x8xf32>
    %c0_20 = arith.constant 0 : index
    %c0_21 = arith.constant 0 : index
    %c0_22 = arith.constant 0 : index
    %28 = vector.load %arg3[%c0_20, %c0_21, %c0_22] : memref<1x8x8xi8, #tpu.memory_space<vmem>>, vector<1x8x8xi8>
    %c0_i8 = arith.constant 0 : i8
    %29 = vector.broadcast %c0_i8 : i8 to vector<1x8x8xi8>
    %30 = arith.cmpi ne, %28, %29 : vector<1x8x8xi8>
    %cst_23 = arith.constant -1.000000e+09 : f32
    %31 = vector.broadcast %cst_23 : f32 to vector<1x8x8xf32>
    %32 = arith.select %30, %31, %27 : vector<1x8x8xi1>, vector<1x8x8xf32>
    %cst_24 = arith.constant dense<0xFF800000> : vector<1x8xf32>
    %33 = vector.multi_reduction <maximumf>, %32, %cst_24 [2] : vector<1x8x8xf32> to vector<1x8xf32>
    %34 = vector.shape_cast %33 : vector<1x8xf32> to vector<1x8x1xf32>
    %35 = vector.broadcast %34 : vector<1x8x1xf32> to vector<1x8x8xf32>
    %36 = arith.subf %32, %35 : vector<1x8x8xf32>
    %37 = math.exp %36 : vector<1x8x8xf32>
    %cst_25 = arith.constant dense<0.000000e+00> : vector<1x8xf32>
    %38 = vector.multi_reduction <add>, %37, %cst_25 [2] : vector<1x8x8xf32> to vector<1x8xf32>
    %39 = vector.shape_cast %38 : vector<1x8xf32> to vector<1x8x1xf32>
    %40 = tpu.reciprocal %39 {approx = true} : vector<1x8x1xf32> -> vector<1x8x1xf32>
    %41 = vector.broadcast %40 : vector<1x8x1xf32> to vector<1x8x8xf32>
    %42 = arith.mulf %37, %41 : vector<1x8x8xf32>
    %43 = arith.truncf %42 : vector<1x8x8xf32> to vector<1x8x8xbf16>
    %cst_26 = arith.constant dense<0.000000e+00> : vector<1x8x32xf32>
    %44 = tpu.matmul %43, %26, %cst_26 {dimension_numbers = #tpu.dot_dimension_numbers<[2], [1], [1], [2], [0, 0, 0, 1, 1, 2], [0], [0]>} : vector<1x8x8xbf16>, vector<1x8x32xbf16>, vector<1x8x32xf32> -> vector<1x8x32xf32>
    %45 = arith.truncf %44 : vector<1x8x32xf32> to vector<1x8x32xbf16>
    %46 = vector.shape_cast %45 : vector<1x8x32xbf16> to vector<8x32xbf16>
    %c0_27 = arith.constant 0 : index
    %c0_28 = arith.constant 0 : index
    %47 = vector.load %arg10[%c0_27, %c0_28] : memref<32x32xbf16, #tpu.memory_space<vmem>>, vector<32x32xbf16>
    %cst_29 = arith.constant dense<0.000000e+00> : vector<8x32xf32>
    %48 = tpu.matmul %46, %47, %cst_29 {dimension_numbers = #tpu.dot_dimension_numbers<[1], [0], [0], [1], [0, 0, 1, 1], [], []>} : vector<8x32xbf16>, vector<32x32xbf16>, vector<8x32xf32> -> vector<8x32xf32>
    %c0_30 = arith.constant 0 : index
    %c0_31 = arith.constant 0 : index
    %49 = vector.load %arg11[%c0_30, %c0_31] : memref<1x32xf32, #tpu.memory_space<vmem>>, vector<1x32xf32>
    %50 = vector.broadcast %49 : vector<1x32xf32> to vector<8x32xf32>
    %51 = arith.addf %48, %50 : vector<8x32xf32>
    %52 = arith.addf %51, %1 : vector<8x32xf32>
    %cst_32 = arith.constant dense<0.000000e+00> : vector<8xf32>
    %53 = vector.multi_reduction <add>, %52, %cst_32 [1] : vector<8x32xf32> to vector<8xf32>
    %54 = vector.shape_cast %53 : vector<8xf32> to vector<8x1xf32>
    %cst_33 = arith.constant 3.200000e+01 : f32
    %55 = vector.broadcast %cst_33 : f32 to vector<8x1xf32>
    %56 = arith.divf %54, %55 : vector<8x1xf32>
    %57 = vector.broadcast %56 : vector<8x1xf32> to vector<8x32xf32>
    %58 = arith.subf %52, %57 : vector<8x32xf32>
    %59 = vector.broadcast %56 : vector<8x1xf32> to vector<8x32xf32>
    %60 = arith.subf %52, %59 : vector<8x32xf32>
    %61 = arith.mulf %58, %60 : vector<8x32xf32>
    %cst_34 = arith.constant dense<0.000000e+00> : vector<8xf32>
    %62 = vector.multi_reduction <add>, %61, %cst_34 [1] : vector<8x32xf32> to vector<8xf32>
    %63 = vector.shape_cast %62 : vector<8xf32> to vector<8x1xf32>
    %cst_35 = arith.constant 3.200000e+01 : f32
    %64 = vector.broadcast %cst_35 : f32 to vector<8x1xf32>
    %65 = arith.divf %63, %64 : vector<8x1xf32>
    %66 = vector.broadcast %56 : vector<8x1xf32> to vector<8x32xf32>
    %67 = arith.subf %52, %66 : vector<8x32xf32>
    %cst_36 = arith.constant 9.99999974E-6 : f32
    %68 = vector.broadcast %cst_36 : f32 to vector<8x1xf32>
    %69 = arith.addf %65, %68 : vector<8x1xf32>
    %70 = math.rsqrt %69 : vector<8x1xf32>
    %71 = vector.broadcast %70 : vector<8x1xf32> to vector<8x32xf32>
    %72 = arith.mulf %67, %71 : vector<8x32xf32>
    %c0_37 = arith.constant 0 : index
    %c0_38 = arith.constant 0 : index
    %73 = vector.load %arg12[%c0_37, %c0_38] : memref<1x32xf32, #tpu.memory_space<vmem>>, vector<1x32xf32>
    %74 = vector.broadcast %73 : vector<1x32xf32> to vector<8x32xf32>
    %75 = arith.mulf %72, %74 : vector<8x32xf32>
    %c0_39 = arith.constant 0 : index
    %c0_40 = arith.constant 0 : index
    %76 = vector.load %arg13[%c0_39, %c0_40] : memref<1x32xf32, #tpu.memory_space<vmem>>, vector<1x32xf32>
    %77 = vector.broadcast %76 : vector<1x32xf32> to vector<8x32xf32>
    %78 = arith.addf %75, %77 : vector<8x32xf32>
    %79 = arith.truncf %78 : vector<8x32xf32> to vector<8x32xbf16>
    %c0_41 = arith.constant 0 : index
    %c0_42 = arith.constant 0 : index
    %80 = vector.load %arg14[%c0_41, %c0_42] : memref<32x32xbf16, #tpu.memory_space<vmem>>, vector<32x32xbf16>
    %cst_43 = arith.constant dense<0.000000e+00> : vector<8x32xf32>
    %81 = tpu.matmul %79, %80, %cst_43 {dimension_numbers = #tpu.dot_dimension_numbers<[1], [0], [0], [1], [0, 0, 1, 1], [], []>} : vector<8x32xbf16>, vector<32x32xbf16>, vector<8x32xf32> -> vector<8x32xf32>
    %c0_44 = arith.constant 0 : index
    %c0_45 = arith.constant 0 : index
    %82 = vector.load %arg15[%c0_44, %c0_45] : memref<1x32xf32, #tpu.memory_space<vmem>>, vector<1x32xf32>
    %83 = vector.broadcast %82 : vector<1x32xf32> to vector<8x32xf32>
    %84 = arith.addf %81, %83 : vector<8x32xf32>
    %85 = arith.truncf %84 : vector<8x32xf32> to vector<8x32xbf16>
    %86 = vector.shape_cast %85 : vector<8x32xbf16> to vector<1x8x32xbf16>
    %c0_46 = arith.constant 0 : index
    %c0_47 = arith.constant 0 : index
    %87 = vector.load %arg16[%c0_46, %c0_47] : memref<32x32xbf16, #tpu.memory_space<vmem>>, vector<32x32xbf16>
    %cst_48 = arith.constant dense<0.000000e+00> : vector<8x32xf32>
    %88 = tpu.matmul %5, %87, %cst_48 {dimension_numbers = #tpu.dot_dimension_numbers<[1], [0], [0], [1], [0, 0, 1, 1], [], []>} : vector<8x32xbf16>, vector<32x32xbf16>, vector<8x32xf32> -> vector<8x32xf32>
    %c0_49 = arith.constant 0 : index
    %c0_50 = arith.constant 0 : index
    %89 = vector.load %arg17[%c0_49, %c0_50] : memref<1x32xf32, #tpu.memory_space<vmem>>, vector<1x32xf32>
    %90 = vector.broadcast %89 : vector<1x32xf32> to vector<8x32xf32>
    %91 = arith.addf %88, %90 : vector<8x32xf32>
    %92 = arith.truncf %91 : vector<8x32xf32> to vector<8x32xbf16>
    %93 = vector.shape_cast %92 : vector<8x32xbf16> to vector<1x8x32xbf16>
    %c0_51 = arith.constant 0 : index
    %c0_52 = arith.constant 0 : index
    %94 = vector.load %arg18[%c0_51, %c0_52] : memref<32x32xbf16, #tpu.memory_space<vmem>>, vector<32x32xbf16>
    %cst_53 = arith.constant dense<0.000000e+00> : vector<8x32xf32>
    %95 = tpu.matmul %5, %94, %cst_53 {dimension_numbers = #tpu.dot_dimension_numbers<[1], [0], [0], [1], [0, 0, 1, 1], [], []>} : vector<8x32xbf16>, vector<32x32xbf16>, vector<8x32xf32> -> vector<8x32xf32>
    %c0_54 = arith.constant 0 : index
    %c0_55 = arith.constant 0 : index
    %96 = vector.load %arg19[%c0_54, %c0_55] : memref<1x32xf32, #tpu.memory_space<vmem>>, vector<1x32xf32>
    %97 = vector.broadcast %96 : vector<1x32xf32> to vector<8x32xf32>
    %98 = arith.addf %95, %97 : vector<8x32xf32>
    %99 = arith.truncf %98 : vector<8x32xf32> to vector<8x32xbf16>
    %100 = vector.shape_cast %99 : vector<8x32xbf16> to vector<1x8x32xbf16>
    %cst_56 = arith.constant dense<0.000000e+00> : vector<1x8x8xf32>
    %101 = tpu.matmul %86, %93, %cst_56 {dimension_numbers = #tpu.dot_dimension_numbers<[2], [2], [1], [1], [0, 0, 0, 1, 1, 1], [0], [0]>} : vector<1x8x32xbf16>, vector<1x8x32xbf16>, vector<1x8x8xf32> -> vector<1x8x8xf32>
    %cst_57 = arith.constant dense<0xFF800000> : vector<1x8xf32>
    %102 = vector.multi_reduction <maximumf>, %101, %cst_57 [2] : vector<1x8x8xf32> to vector<1x8xf32>
    %103 = vector.shape_cast %102 : vector<1x8xf32> to vector<1x8x1xf32>
    %104 = vector.broadcast %103 : vector<1x8x1xf32> to vector<1x8x8xf32>
    %105 = arith.subf %101, %104 : vector<1x8x8xf32>
    %106 = math.exp %105 : vector<1x8x8xf32>
    %cst_58 = arith.constant dense<0.000000e+00> : vector<1x8xf32>
    %107 = vector.multi_reduction <add>, %106, %cst_58 [2] : vector<1x8x8xf32> to vector<1x8xf32>
    %108 = vector.shape_cast %107 : vector<1x8xf32> to vector<1x8x1xf32>
    %109 = tpu.reciprocal %108 {approx = true} : vector<1x8x1xf32> -> vector<1x8x1xf32>
    %110 = vector.broadcast %109 : vector<1x8x1xf32> to vector<1x8x8xf32>
    %111 = arith.mulf %106, %110 : vector<1x8x8xf32>
    %112 = arith.truncf %111 : vector<1x8x8xf32> to vector<1x8x8xbf16>
    %cst_59 = arith.constant dense<0.000000e+00> : vector<1x8x32xf32>
    %113 = tpu.matmul %112, %100, %cst_59 {dimension_numbers = #tpu.dot_dimension_numbers<[2], [1], [1], [2], [0, 0, 0, 1, 1, 2], [0], [0]>} : vector<1x8x8xbf16>, vector<1x8x32xbf16>, vector<1x8x32xf32> -> vector<1x8x32xf32>
    %114 = arith.truncf %113 : vector<1x8x32xf32> to vector<1x8x32xbf16>
    %115 = vector.shape_cast %114 : vector<1x8x32xbf16> to vector<8x32xbf16>
    %c0_60 = arith.constant 0 : index
    %c0_61 = arith.constant 0 : index
    %116 = vector.load %arg20[%c0_60, %c0_61] : memref<32x32xbf16, #tpu.memory_space<vmem>>, vector<32x32xbf16>
    %cst_62 = arith.constant dense<0.000000e+00> : vector<8x32xf32>
    %117 = tpu.matmul %115, %116, %cst_62 {dimension_numbers = #tpu.dot_dimension_numbers<[1], [0], [0], [1], [0, 0, 1, 1], [], []>} : vector<8x32xbf16>, vector<32x32xbf16>, vector<8x32xf32> -> vector<8x32xf32>
    %c0_63 = arith.constant 0 : index
    %c0_64 = arith.constant 0 : index
    %118 = vector.load %arg21[%c0_63, %c0_64] : memref<1x32xf32, #tpu.memory_space<vmem>>, vector<1x32xf32>
    %119 = vector.broadcast %118 : vector<1x32xf32> to vector<8x32xf32>
    %120 = arith.addf %117, %119 : vector<8x32xf32>
    %121 = arith.addf %120, %78 : vector<8x32xf32>
    %cst_65 = arith.constant dense<0.000000e+00> : vector<8xf32>
    %122 = vector.multi_reduction <add>, %121, %cst_65 [1] : vector<8x32xf32> to vector<8xf32>
    %123 = vector.shape_cast %122 : vector<8xf32> to vector<8x1xf32>
    %cst_66 = arith.constant 3.200000e+01 : f32
    %124 = vector.broadcast %cst_66 : f32 to vector<8x1xf32>
    %125 = arith.divf %123, %124 : vector<8x1xf32>
    %126 = vector.broadcast %125 : vector<8x1xf32> to vector<8x32xf32>
    %127 = arith.subf %121, %126 : vector<8x32xf32>
    %128 = vector.broadcast %125 : vector<8x1xf32> to vector<8x32xf32>
    %129 = arith.subf %121, %128 : vector<8x32xf32>
    %130 = arith.mulf %127, %129 : vector<8x32xf32>
    %cst_67 = arith.constant dense<0.000000e+00> : vector<8xf32>
    %131 = vector.multi_reduction <add>, %130, %cst_67 [1] : vector<8x32xf32> to vector<8xf32>
    %132 = vector.shape_cast %131 : vector<8xf32> to vector<8x1xf32>
    %cst_68 = arith.constant 3.200000e+01 : f32
    %133 = vector.broadcast %cst_68 : f32 to vector<8x1xf32>
    %134 = arith.divf %132, %133 : vector<8x1xf32>
    %135 = vector.broadcast %125 : vector<8x1xf32> to vector<8x32xf32>
    %136 = arith.subf %121, %135 : vector<8x32xf32>
    %cst_69 = arith.constant 9.99999974E-6 : f32
    %137 = vector.broadcast %cst_69 : f32 to vector<8x1xf32>
    %138 = arith.addf %134, %137 : vector<8x1xf32>
    %139 = math.rsqrt %138 : vector<8x1xf32>
    %140 = vector.broadcast %139 : vector<8x1xf32> to vector<8x32xf32>
    %141 = arith.mulf %136, %140 : vector<8x32xf32>
    %c0_70 = arith.constant 0 : index
    %c0_71 = arith.constant 0 : index
    %142 = vector.load %arg22[%c0_70, %c0_71] : memref<1x32xf32, #tpu.memory_space<vmem>>, vector<1x32xf32>
    %143 = vector.broadcast %142 : vector<1x32xf32> to vector<8x32xf32>
    %144 = arith.mulf %141, %143 : vector<8x32xf32>
    %c0_72 = arith.constant 0 : index
    %c0_73 = arith.constant 0 : index
    %145 = vector.load %arg23[%c0_72, %c0_73] : memref<1x32xf32, #tpu.memory_space<vmem>>, vector<1x32xf32>
    %146 = vector.broadcast %145 : vector<1x32xf32> to vector<8x32xf32>
    %147 = arith.addf %144, %146 : vector<8x32xf32>
    %148 = arith.truncf %147 : vector<8x32xf32> to vector<8x32xbf16>
    %c0_74 = arith.constant 0 : index
    %c0_75 = arith.constant 0 : index
    %149 = vector.load %arg24[%c0_74, %c0_75] : memref<32x64xbf16, #tpu.memory_space<vmem>>, vector<32x64xbf16>
    %cst_76 = arith.constant dense<0.000000e+00> : vector<8x64xf32>
    %150 = tpu.matmul %148, %149, %cst_76 {dimension_numbers = #tpu.dot_dimension_numbers<[1], [0], [0], [1], [0, 0, 1, 1], [], []>} : vector<8x32xbf16>, vector<32x64xbf16>, vector<8x64xf32> -> vector<8x64xf32>
    %c0_77 = arith.constant 0 : index
    %c0_78 = arith.constant 0 : index
    %151 = vector.load %arg25[%c0_77, %c0_78] : memref<1x64xf32, #tpu.memory_space<vmem>>, vector<1x64xf32>
    %152 = vector.broadcast %151 : vector<1x64xf32> to vector<8x64xf32>
    %153 = arith.addf %150, %152 : vector<8x64xf32>
    %cst_79 = arith.constant 0.000000e+00 : f32
    %154 = vector.broadcast %cst_79 : f32 to vector<8x64xf32>
    %155 = arith.maximumf %153, %154 : vector<8x64xf32>
    %156 = arith.truncf %155 : vector<8x64xf32> to vector<8x64xbf16>
    %c0_80 = arith.constant 0 : index
    %c0_81 = arith.constant 0 : index
    %157 = vector.load %arg26[%c0_80, %c0_81] : memref<64x32xbf16, #tpu.memory_space<vmem>>, vector<64x32xbf16>
    %cst_82 = arith.constant dense<0.000000e+00> : vector<8x32xf32>
    %158 = tpu.matmul %156, %157, %cst_82 {dimension_numbers = #tpu.dot_dimension_numbers<[1], [0], [0], [1], [0, 0, 1, 1], [], []>} : vector<8x64xbf16>, vector<64x32xbf16>, vector<8x32xf32> -> vector<8x32xf32>
    %c0_83 = arith.constant 0 : index
    %c0_84 = arith.constant 0 : index
    %159 = vector.load %arg27[%c0_83, %c0_84] : memref<1x32xf32, #tpu.memory_space<vmem>>, vector<1x32xf32>
    %160 = vector.broadcast %159 : vector<1x32xf32> to vector<8x32xf32>
    %161 = arith.addf %158, %160 : vector<8x32xf32>
    %162 = arith.addf %161, %147 : vector<8x32xf32>
    %cst_85 = arith.constant dense<0.000000e+00> : vector<8xf32>
    %163 = vector.multi_reduction <add>, %162, %cst_85 [1] : vector<8x32xf32> to vector<8xf32>
    %164 = vector.shape_cast %163 : vector<8xf32> to vector<8x1xf32>
    %cst_86 = arith.constant 3.200000e+01 : f32
    %165 = vector.broadcast %cst_86 : f32 to vector<8x1xf32>
    %166 = arith.divf %164, %165 : vector<8x1xf32>
    %167 = vector.broadcast %166 : vector<8x1xf32> to vector<8x32xf32>
    %168 = arith.subf %162, %167 : vector<8x32xf32>
    %169 = vector.broadcast %166 : vector<8x1xf32> to vector<8x32xf32>
    %170 = arith.subf %162, %169 : vector<8x32xf32>
    %171 = arith.mulf %168, %170 : vector<8x32xf32>
    %cst_87 = arith.constant dense<0.000000e+00> : vector<8xf32>
    %172 = vector.multi_reduction <add>, %171, %cst_87 [1] : vector<8x32xf32> to vector<8xf32>
    %173 = vector.shape_cast %172 : vector<8xf32> to vector<8x1xf32>
    %cst_88 = arith.constant 3.200000e+01 : f32
    %174 = vector.broadcast %cst_88 : f32 to vector<8x1xf32>
    %175 = arith.divf %173, %174 : vector<8x1xf32>
    %176 = vector.broadcast %166 : vector<8x1xf32> to vector<8x32xf32>
    %177 = arith.subf %162, %176 : vector<8x32xf32>
    %cst_89 = arith.constant 9.99999974E-6 : f32
    %178 = vector.broadcast %cst_89 : f32 to vector<8x1xf32>
    %179 = arith.addf %175, %178 : vector<8x1xf32>
    %180 = math.rsqrt %179 : vector<8x1xf32>
    %181 = vector.broadcast %180 : vector<8x1xf32> to vector<8x32xf32>
    %182 = arith.mulf %177, %181 : vector<8x32xf32>
    %c0_90 = arith.constant 0 : index
    %c0_91 = arith.constant 0 : index
    %183 = vector.load %arg28[%c0_90, %c0_91] : memref<1x32xf32, #tpu.memory_space<vmem>>, vector<1x32xf32>
    %184 = vector.broadcast %183 : vector<1x32xf32> to vector<8x32xf32>
    %185 = arith.mulf %182, %184 : vector<8x32xf32>
    %c0_92 = arith.constant 0 : index
    %c0_93 = arith.constant 0 : index
    %186 = vector.load %arg29[%c0_92, %c0_93] : memref<1x32xf32, #tpu.memory_space<vmem>>, vector<1x32xf32>
    %187 = vector.broadcast %186 : vector<1x32xf32> to vector<8x32xf32>
    %188 = arith.addf %185, %187 : vector<8x32xf32>
    %189 = vector.shape_cast %188 : vector<8x32xf32> to vector<1x8x32xf32>
    %c0_94 = arith.constant 0 : index
    %c0_95 = arith.constant 0 : index
    %c0_96 = arith.constant 0 : index
    %190 = vector.load %arg30[%c0_94, %c0_95, %c0_96] : memref<1x8x32xf32, #tpu.memory_space<vmem>>, vector<1x8x32xf32>
    tpu.vector_store %arg30[%c0_94, %c0_95, %c0_96], %189 {strides = array<i32>} : memref<1x8x32xf32, #tpu.memory_space<vmem>>, vector<1x8x32xf32>,
    return
  }
  func.func @transform_0(%arg0: i32) -> (i32, i32, i32) {
    %c0_i32 = arith.constant 0 : i32
    %c0_i32_0 = arith.constant 0 : i32
    %c0_i32_1 = arith.constant 0 : i32
    return %arg0, %c0_i32, %c0_i32_0 : i32, i32, i32
  }
  func.func @transform_1(%arg0: i32) -> (i32, i32, i32) {
    %c0_i32 = arith.constant 0 : i32
    %c0_i32_0 = arith.constant 0 : i32
    %c0_i32_1 = arith.constant 0 : i32
    return %arg0, %c0_i32, %c0_i32_0 : i32, i32, i32
  }
  func.func @transform_2(%arg0: i32) -> (i32, i32, i32) {
    %c0_i32 = arith.constant 0 : i32
    %c0_i32_0 = arith.constant 0 : i32
    %c0_i32_1 = arith.constant 0 : i32
    return %arg0, %c0_i32, %c0_i32_0 : i32, i32, i32
  }
  func.func @transform_3(%arg0: i32) -> (i32, i32) {
    %c0_i32 = arith.constant 0 : i32
    %c0_i32_0 = arith.constant 0 : i32
    %c0_i32_1 = arith.constant 0 : i32
    return %c0_i32, %c0_i32_0 : i32, i32
  }
  func.func @transform_4(%arg0: i32) -> (i32, i32) {
    %c0_i32 = arith.constant 0 : i32
    %c0_i32_0 = arith.constant 0 : i32
    %c0_i32_1 = arith.constant 0 : i32
    return %c0_i32, %c0_i32_0 : i32, i32
  }
  func.func @transform_5(%arg0: i32) -> (i32, i32) {
    %c0_i32 = arith.constant 0 : i32
    %c0_i32_0 = arith.constant 0 : i32
    %c0_i32_1 = arith.constant 0 : i32
    return %c0_i32, %c0_i32_0 : i32, i32
  }
  func.func @transform_6(%arg0: i32) -> (i32, i32) {
    %c0_i32 = arith.constant 0 : i32
    %c0_i32_0 = arith.constant 0 : i32
    %c0_i32_1 = arith.constant 0 : i32
    return %c0_i32, %c0_i32_0 : i32, i32
  }
  func.func @transform_7(%arg0: i32) -> (i32, i32) {
    %c0_i32 = arith.constant 0 : i32
    %c0_i32_0 = arith.constant 0 : i32
    %c0_i32_1 = arith.constant 0 : i32
    return %c0_i32, %c0_i32_0 : i32, i32
  }
  func.func @transform_8(%arg0: i32) -> (i32, i32) {
    %c0_i32 = arith.constant 0 : i32
    %c0_i32_0 = arith.constant 0 : i32
    %c0_i32_1 = arith.constant 0 : i32
    return %c0_i32, %c0_i32_0 : i32, i32
  }
  func.func @transform_9(%arg0: i32) -> (i32, i32) {
    %c0_i32 = arith.constant 0 : i32
    %c0_i32_0 = arith.constant 0 : i32
    %c0_i32_1 = arith.constant 0 : i32
    return %c0_i32, %c0_i32_0 : i32, i32
  }
  func.func @transform_10(%arg0: i32) -> (i32, i32) {
    %c0_i32 = arith.constant 0 : i32
    %c0_i32_0 = arith.constant 0 : i32
    %c0_i32_1 = arith.constant 0 : i32
    return %c0_i32, %c0_i32_0 : i32, i32
  }
  func.func @transform_11(%arg0: i32) -> (i32, i32) {
    %c0_i32 = arith.constant 0 : i32
    %c0_i32_0 = arith.constant 0 : i32
    %c0_i32_1 = arith.constant 0 : i32
    return %c0_i32, %c0_i32_0 : i32, i32
  }
  func.func @transform_12(%arg0: i32) -> (i32, i32) {
    %c0_i32 = arith.constant 0 : i32
    %c0_i32_0 = arith.constant 0 : i32
    %c0_i32_1 = arith.constant 0 : i32
    return %c0_i32, %c0_i32_0 : i32, i32
  }
  func.func @transform_13(%arg0: i32) -> (i32, i32) {
    %c0_i32 = arith.constant 0 : i32
    %c0_i32_0 = arith.constant 0 : i32
    %c0_i32_1 = arith.constant 0 : i32
    return %c0_i32, %c0_i32_0 : i32, i32
  }
  func.func @transform_14(%arg0: i32) -> (i32, i32) {
    %c0_i32 = arith.constant 0 : i32
    %c0_i32_0 = arith.constant 0 : i32
    %c0_i32_1 = arith.constant 0 : i32
    return %c0_i32, %c0_i32_0 : i32, i32
  }
  func.func @transform_15(%arg0: i32) -> (i32, i32) {
    %c0_i32 = arith.constant 0 : i32
    %c0_i32_0 = arith.constant 0 : i32
    %c0_i32_1 = arith.constant 0 : i32
    return %c0_i32, %c0_i32_0 : i32, i32
  }
  func.func @transform_16(%arg0: i32) -> (i32, i32) {
    %c0_i32 = arith.constant 0 : i32
    %c0_i32_0 = arith.constant 0 : i32
    %c0_i32_1 = arith.constant 0 : i32
    return %c0_i32, %c0_i32_0 : i32, i32
  }
  func.func @transform_17(%arg0: i32) -> (i32, i32) {
    %c0_i32 = arith.constant 0 : i32
    %c0_i32_0 = arith.constant 0 : i32
    %c0_i32_1 = arith.constant 0 : i32
    return %c0_i32, %c0_i32_0 : i32, i32
  }
  func.func @transform_18(%arg0: i32) -> (i32, i32) {
    %c0_i32 = arith.constant 0 : i32
    %c0_i32_0 = arith.constant 0 : i32
    %c0_i32_1 = arith.constant 0 : i32
    return %c0_i32, %c0_i32_0 : i32, i32
  }
  func.func @transform_19(%arg0: i32) -> (i32, i32) {
    %c0_i32 = arith.constant 0 : i32
    %c0_i32_0 = arith.constant 0 : i32
    %c0_i32_1 = arith.constant 0 : i32
    return %c0_i32, %c0_i32_0 : i32, i32
  }
  func.func @transform_20(%arg0: i32) -> (i32, i32) {
    %c0_i32 = arith.constant 0 : i32
    %c0_i32_0 = arith.constant 0 : i32
    %c0_i32_1 = arith.constant 0 : i32
    return %c0_i32, %c0_i32_0 : i32, i32
  }
  func.func @transform_21(%arg0: i32) -> (i32, i32) {
    %c0_i32 = arith.constant 0 : i32
    %c0_i32_0 = arith.constant 0 : i32
    %c0_i32_1 = arith.constant 0 : i32
    return %c0_i32, %c0_i32_0 : i32, i32
  }
  func.func @transform_22(%arg0: i32) -> (i32, i32) {
    %c0_i32 = arith.constant 0 : i32
    %c0_i32_0 = arith.constant 0 : i32
    %c0_i32_1 = arith.constant 0 : i32
    return %c0_i32, %c0_i32_0 : i32, i32
  }
  func.func @transform_23(%arg0: i32) -> (i32, i32) {
    %c0_i32 = arith.constant 0 : i32
    %c0_i32_0 = arith.constant 0 : i32
    %c0_i32_1 = arith.constant 0 : i32
    return %c0_i32, %c0_i32_0 : i32, i32
  }
  func.func @transform_24(%arg0: i32) -> (i32, i32) {
    %c0_i32 = arith.constant 0 : i32
    %c0_i32_0 = arith.constant 0 : i32
    %c0_i32_1 = arith.constant 0 : i32
    return %c0_i32, %c0_i32_0 : i32, i32
  }
  func.func @transform_25(%arg0: i32) -> (i32, i32) {
    %c0_i32 = arith.constant 0 : i32
    %c0_i32_0 = arith.constant 0 : i32
    %c0_i32_1 = arith.constant 0 : i32
    return %c0_i32, %c0_i32_0 : i32, i32
  }
  func.func @transform_26(%arg0: i32) -> (i32, i32) {
    %c0_i32 = arith.constant 0 : i32
    %c0_i32_0 = arith.constant 0 : i32
    %c0_i32_1 = arith.constant 0 : i32
    return %c0_i32, %c0_i32_0 : i32, i32
  }
  func.func @transform_27(%arg0: i32) -> (i32, i32) {
    %c0_i32 = arith.constant 0 : i32
    %c0_i32_0 = arith.constant 0 : i32
    %c0_i32_1 = arith.constant 0 : i32
    return %c0_i32, %c0_i32_0 : i32, i32
  }
  func.func @transform_28(%arg0: i32) -> (i32, i32) {
    %c0_i32 = arith.constant 0 : i32
    %c0_i32_0 = arith.constant 0 : i32
    %c0_i32_1 = arith.constant 0 : i32
    return %c0_i32, %c0_i32_0 : i32, i32
  }
  func.func @transform_29(%arg0: i32) -> (i32, i32, i32) {
    %c0_i32 = arith.constant 0 : i32
    %c0_i32_0 = arith.constant 0 : i32
    %c0_i32_1 = arith.constant 0 : i32
    return %arg0, %c0_i32, %c0_i32_0 : i32, i32, i32
  }
}

</mosaic_0001>

<llo_original>
// kernel: tpu_custom_call.1
$region0: #{tpu_custom_call.1}
  #allocation0 [shape = 'u32[]', space=smem, size = 0x4, offset = 0x4, fixed_abs, tag = 'smem constant byte address 0x4 - core index']
  #allocation1 [shape = 'u32[144,128]{1,0:T(1,128)}', space=vmem, size = 0x12000, scoped, tag = 'internal scratch']
  %s0 = inlined_call_operand.smem [shape: u32[30], index: -1, kind: input, shape index: {}]
  %s1 = sld [smem:[%s0]]
  %s2 = scalar_lea.smem %s0, 1
  %s3 = sld [smem:[%s2]]
  %s4 = scalar_lea.smem %s0, 2
  %s5 = sld [smem:[%s4]]
  %s6 = scalar_lea.smem %s0, 3
  %s7 = sld [smem:[%s6]]
  %s8 = scalar_lea.smem %s0, 4
  %s9 = sld [smem:[%s8]]
  %s10 = scalar_lea.smem %s0, 5
  %s11 = sld [smem:[%s10]]
  %s12 = scalar_lea.smem %s0, 6
  %s13 = sld [smem:[%s12]]
  %s14 = scalar_lea.smem %s0, 7
  %s15 = sld [smem:[%s14]]
  %s16 = scalar_lea.smem %s0, 8
  %s17 = sld [smem:[%s16]]
  %s18 = scalar_lea.smem %s0, 9
  %s19 = sld [smem:[%s18]]
  %s20 = scalar_lea.smem %s0, 10
  %s21 = sld [smem:[%s20]]
  %s22 = scalar_lea.smem %s0, 11
  %s23 = sld [smem:[%s22]]
  %s24 = scalar_lea.smem %s0, 12
  %s25 = sld [smem:[%s24]]
  %s26 = scalar_lea.smem %s0, 13
  %s27 = sld [smem:[%s26]]
  %s28 = scalar_lea.smem %s0, 14
  %s29 = sld [smem:[%s28]]
  %s30 = scalar_lea.smem %s0, 15
  %s31 = sld [smem:[%s30]]
  %s32 = scalar_lea.smem %s0, 16
  %s33 = sld [smem:[%s32]]
  %s34 = scalar_lea.smem %s0, 17
  %s35 = sld [smem:[%s34]]
  %s36 = scalar_lea.smem %s0, 18
  %s37 = sld [smem:[%s36]]
  %s38 = scalar_lea.smem %s0, 19
  %s39 = sld [smem:[%s38]]
  %s40 = scalar_lea.smem %s0, 20
  %s41 = sld [smem:[%s40]]
  %s42 = scalar_lea.smem %s0, 21
  %s43 = sld [smem:[%s42]]
  %s44 = scalar_lea.smem %s0, 22
  %s45 = sld [smem:[%s44]]
  %s46 = scalar_lea.smem %s0, 23
  %s47 = sld [smem:[%s46]]
  %s48 = scalar_lea.smem %s0, 24
  %s49 = sld [smem:[%s48]]
  %s50 = scalar_lea.smem %s0, 25
  %s51 = sld [smem:[%s50]]
  %s52 = scalar_lea.smem %s0, 26
  %s53 = sld [smem:[%s52]]
  %s54 = scalar_lea.smem %s0, 27
  %s55 = sld [smem:[%s54]]
  %s56 = scalar_lea.smem %s0, 28
  %s57 = sld [smem:[%s56]]
  %s58 = scalar_lea.smem %s0, 29
  %s59 = sld [smem:[%s58]]
  %s60 = sld [smem:[#allocation0]]
  $region217: #{tpu_custom_call.1} parent=0
    _
  %s62 = ssub.s32 1, %s60
  %s63 = scalar_select 0, %s62, %s60
  $region1: #{tpu_custom_call.1} parent=0
    #allocation2 [shape = 'u8[2048]{0}', space=vmem, size = 0x800, scoped, tag = 'input window, operand 2']
    #allocation3 [shape = 's32[2]{0}', space=sflag, size = 0x8, scoped, tag = 'scoped memory for tpu_custom_call.1']
    #allocation4 [shape = 's32[2]{0}', space=sflag, size = 0x8, scoped, tag = 'scoped memory for tpu_custom_call.1']
    #allocation5 [shape = 'u8[512]{0}', space=vmem, size = 0x400, scoped, tag = 'input window, operand 4, single buffered']
    #allocation6 [shape = 's32[1]{0}', space=sflag, size = 0x4, scoped, tag = 'scoped memory for tpu_custom_call.1']
    #allocation7 [shape = 'u8[8192]{0}', space=vmem, size = 0x2000, scoped, tag = 'input window, operand 5, single buffered']
    #allocation8 [shape = 'u8[512]{0}', space=vmem, size = 0x400, scoped, tag = 'input window, operand 6, single buffered']
    #allocation9 [shape = 's32[1]{0}', space=sflag, size = 0x4, scoped, tag = 'scoped memory for tpu_custom_call.1']
    #allocation10 [shape = 'u8[8192]{0}', space=vmem, size = 0x2000, scoped, tag = 'input window, operand 7, single buffered']
    #allocation11 [shape = 'u8[512]{0}', space=vmem, size = 0x400, scoped, tag = 'input window, operand 8, single buffered']
    #allocation12 [shape = 's32[1]{0}', space=sflag, size = 0x4, scoped, tag = 'scoped memory for tpu_custom_call.1']
    #allocation13 [shape = 'u8[512]{0}', space=vmem, size = 0x400, scoped, tag = 'input window, operand 10, single buffered']
    #allocation14 [shape = 'u8[512]{0}', space=vmem, size = 0x400, scoped, tag = 'input window, operand 11, single buffered']
    #allocation15 [shape = 's32[1]{0}', space=sflag, size = 0x4, scoped, tag = 'scoped memory for tpu_custom_call.1']
    #allocation16 [shape = 'u8[512]{0}', space=vmem, size = 0x400, scoped, tag = 'input window, operand 12, single buffered']
    #allocation17 [shape = 'u8[8192]{0}', space=vmem, size = 0x2000, scoped, tag = 'input window, operand 13, single buffered']
    #allocation18 [shape = 's32[1]{0}', space=sflag, size = 0x4, scoped, tag = 'scoped memory for tpu_custom_call.1']
    #allocation19 [shape = 'u8[512]{0}', space=vmem, size = 0x400, scoped, tag = 'input window, operand 14, single buffered']
    #allocation20 [shape = 'u8[8192]{0}', space=vmem, size = 0x2000, scoped, tag = 'input window, operand 15, single buffered']
    #allocation21 [shape = 's32[1]{0}', space=sflag, size = 0x4, scoped, tag = 'scoped memory for tpu_custom_call.1']
    #allocation22 [shape = 'u8[512]{0}', space=vmem, size = 0x400, scoped, tag = 'input window, operand 16, single buffered']
    #allocation23 [shape = 'u8[8192]{0}', space=vmem, size = 0x2000, scoped, tag = 'input window, operand 17, single buffered']
    #allocation24 [shape = 's32[1]{0}', space=sflag, size = 0x4, scoped, tag = 'scoped memory for tpu_custom_call.1']
    #allocation25 [shape = 'u8[512]{0}', space=vmem, size = 0x400, scoped, tag = 'input window, operand 18, single buffered']
    #allocation26 [shape = 'u8[8192]{0}', space=vmem, size = 0x2000, scoped, tag = 'input window, operand 19, single buffered']
    #allocation27 [shape = 's32[1]{0}', space=sflag, size = 0x4, scoped, tag = 'scoped memory for tpu_custom_call.1']
    #allocation28 [shape = 'u8[8192]{0}', space=vmem, size = 0x2000, scoped, tag = 'input window, operand 23, single buffered']
    #allocation29 [shape = 'u8[8192]{0}', space=vmem, size = 0x2000, scoped, tag = 'output window, operand 0']
    %64 = vsyncpa [#allocation3], 0
    %s65 = scalar_lea.sflag [#allocation3], 1
    %66 = vsyncpa %s65, 0
    %67 = vsyncpa [#allocation6], 0
    %68 = vsyncpa [#allocation9], 0
    %69 = vsyncpa [#allocation12], 0
    %70 = vsyncpa [#allocation15], 0
    %71 = vsyncpa [#allocation18], 0
    %72 = vsyncpa [#allocation21], 0
    %73 = vsyncpa [#allocation24], 0
    %74 = vsyncpa [#allocation27], 0
    %75 = vsyncpa [#allocation4], 0
    %s76 = scalar_lea.sflag [#allocation4], 1
    %77 = vsyncpa %s76, 0
    loop: start=0, step=1, limit=4
    $region2: #{tpu_custom_call.1} parent=1 // loop_pre_header
      _
    $region3: #{tpu_custom_call.1} parent=1 // loop_header
      %s79 = sphi 0, %s83
      %p80 = scmp.ge.s32.totalorder %s79, 4
      %s89 = sphi 0, %s91
      %s92 = sphi 0, %s89
      %s93 = sphi 0, %s92
      %s109 = sphi 0, %s93
      %s115 = sphi 0, %s117
      %s118 = sphi 0, %s115
      %s119 = sphi 0, %s118
      %s135 = sphi 0, %s119
      %s141 = sphi 0, %s143
      %s144 = sphi 0, %s141
      %s145 = sphi 0, %s144
      %s161 = sphi 0, %s145
      %s165 = sphi 0, %s165
      %s167 = sphi 0, %s165
      %s168 = sphi 0, %s167
      %s182 = sphi 0, %s168
      %s186 = sphi 0, %s186
      %s188 = sphi 0, %s186
      %s189 = sphi 0, %s188
      %s203 = sphi 0, %s189
      %s207 = sphi 0, %s207
      %s209 = sphi 0, %s207
      %s210 = sphi 0, %s209
      %s224 = sphi 0, %s210
      %s228 = sphi 0, %s228
      %s230 = sphi 0, %s228
      %s231 = sphi 0, %s230
      %s245 = sphi 0, %s231
      %s249 = sphi 0, %s249
      %s251 = sphi 0, %s249
      %s252 = sphi 0, %s251
      %s266 = sphi 0, %s252
      %s270 = sphi 0, %s270
      %s272 = sphi 0, %s270
      %s273 = sphi 0, %s272
      %s287 = sphi 0, %s273
      %s291 = sphi 0, %s291
      %s293 = sphi 0, %s291
      %s294 = sphi 0, %s293
      %s308 = sphi 0, %s294
      %s312 = sphi 0, %s312
      %s314 = sphi 0, %s312
      %s315 = sphi 0, %s314
      %s329 = sphi 0, %s315
      %s333 = sphi 0, %s333
      %s335 = sphi 0, %s333
      %s336 = sphi 0, %s335
      %s350 = sphi 0, %s336
      %s354 = sphi 0, %s354
      %s356 = sphi 0, %s354
      %s357 = sphi 0, %s356
      %s371 = sphi 0, %s357
      %s375 = sphi 0, %s375
      %s377 = sphi 0, %s375
      %s378 = sphi 0, %s377
      %s392 = sphi 0, %s378
      %s396 = sphi 0, %s396
      %s398 = sphi 0, %s396
      %s399 = sphi 0, %s398
      %s413 = sphi 0, %s399
      %s417 = sphi 0, %s417
      %s419 = sphi 0, %s417
      %s420 = sphi 0, %s419
      %s434 = sphi 0, %s420
      %s438 = sphi 0, %s438
      %s440 = sphi 0, %s438
      %s441 = sphi 0, %s440
      %s455 = sphi 0, %s441
      %s459 = sphi 0, %s459
      %s461 = sphi 0, %s459
      %s462 = sphi 0, %s461
      %s476 = sphi 0, %s462
      %s480 = sphi 0, %s480
      %s482 = sphi 0, %s480
      %s483 = sphi 0, %s482
      %s497 = sphi 0, %s483
      %s501 = sphi 0, %s501
      %s503 = sphi 0, %s501
      %s504 = sphi 0, %s503
      %s518 = sphi 0, %s504
      %s522 = sphi 0, %s522
      %s524 = sphi 0, %s522
      %s525 = sphi 0, %s524
      %s539 = sphi 0, %s525
      %s543 = sphi 0, %s543
      %s545 = sphi 0, %s543
      %s546 = sphi 0, %s545
      %s560 = sphi 0, %s546
      %s564 = sphi 0, %s564
      %s566 = sphi 0, %s564
      %s567 = sphi 0, %s566
      %s581 = sphi 0, %s567
      %s585 = sphi 0, %s585
      %s587 = sphi 0, %s585
      %s588 = sphi 0, %s587
      %s602 = sphi 0, %s588
      %s606 = sphi 0, %s606
      %s608 = sphi 0, %s606
      %s609 = sphi 0, %s608
      %s623 = sphi 0, %s609
      %s627 = sphi 0, %s627
      %s629 = sphi 0, %s627
      %s630 = sphi 0, %s629
      %s644 = sphi 0, %s630
      %s648 = sphi 0, %s648
      %s650 = sphi 0, %s648
      %s651 = sphi 0, %s650
      %s665 = sphi 0, %s651
      %s669 = sphi 0, %s669
      %s671 = sphi 0, %s669
      %s672 = sphi 0, %s671
      %s686 = sphi 0, %s672
      %s690 = sphi 0, %s690
      %s692 = sphi 0, %s690
      %s693 = sphi 0, %s692
      %s707 = sphi 0, %s693
      %s713 = sphi 0, %s715
      %s716 = sphi 0, %s713
      %s717 = sphi 0, %s716
      %s733 = sphi 0, %s717
    $region4: #{tpu_custom_call.1} parent=1 // loop_header_branch
      %82 = sbr.rel (%p80) target = $region8
    $region5: #{tpu_custom_call.1} parent=1 // loop_body
      %s84 = ssub.s32 %s79, 1
      %s85 = ssub.s32 %s79, 2
      %s86 = sadd.s32 %s79, 1
      %s87 = ssub.s32 %s79, %s86
      %p88 = scmp.eq.s32.totalorder %s87, 0
      %s90 = sadd.s32 %s89, 1
      %s91 = scalar_select %p88, %s89, %s90
      %p94 = pneg %p88
      %p95 = scmp.eq.s32.totalorder %s79, 1
      %p96 = por %p94, %p95
      %p97 = scmp.ne.s32.totalorder %s89, %s92
      %p98 = scmp.eq.s32.totalorder %s79, 0
      %p99 = por %p97, %p98
      %p100 = scmp.ne.s32.totalorder %s89, %s92
      %p101 = scmp.eq.s32.totalorder %s84, 1
      %p102 = por %p100, %p101
      %p103 = scmp.ne.s32.totalorder %s92, %s93
      %p104 = scmp.eq.s32.totalorder %s84, 0
      %p105 = por %p103, %p104
      %p106 = scmp.ne.s32.totalorder %s92, %s93
      %p107 = scmp.eq.s32.totalorder %s85, 1
      %p108 = por %p106, %p107
      %p110 = scmp.ne.s32.totalorder %s93, %s109
      %p111 = scmp.eq.s32.totalorder %s85, 0
      %p112 = por %p110, %p111
      %s113 = ssub.s32 %s79, %s86
      %p114 = scmp.eq.s32.totalorder %s113, 0
      %s116 = sadd.s32 %s115, 1
      %s117 = scalar_select %p114, %s115, %s116
      %p120 = pneg %p114
      %p121 = scmp.eq.s32.totalorder %s79, 1
      %p122 = por %p120, %p121
      %p123 = scmp.ne.s32.totalorder %s115, %s118
      %p124 = scmp.eq.s32.totalorder %s79, 0
      %p125 = por %p123, %p124
      %p126 = scmp.ne.s32.totalorder %s115, %s118
      %p127 = scmp.eq.s32.totalorder %s84, 1
      %p128 = por %p126, %p127
      %p129 = scmp.ne.s32.totalorder %s118, %s119
      %p130 = scmp.eq.s32.totalorder %s84, 0
      %p131 = por %p129, %p130
      %p132 = scmp.ne.s32.totalorder %s118, %s119
      %p133 = scmp.eq.s32.totalorder %s85, 1
      %p134 = por %p132, %p133
      %p136 = scmp.ne.s32.totalorder %s119, %s135
      %p137 = scmp.eq.s32.totalorder %s85, 0
      %p138 = por %p136, %p137
      %s139 = ssub.s32 %s79, %s86
      %p140 = scmp.eq.s32.totalorder %s139, 0
      %s142 = sadd.s32 %s141, 1
      %s143 = scalar_select %p140, %s141, %s142
      %p146 = pneg %p140
      %p147 = scmp.eq.s32.totalorder %s79, 1
      %p148 = por %p146, %p147
      %p149 = scmp.ne.s32.totalorder %s141, %s144
      %p150 = scmp.eq.s32.totalorder %s79, 0
      %p151 = por %p149, %p150
      %p152 = scmp.ne.s32.totalorder %s141, %s144
      %p153 = scmp.eq.s32.totalorder %s84, 1
      %p154 = por %p152, %p153
      %p155 = scmp.ne.s32.totalorder %s144, %s145
      %p156 = scmp.eq.s32.totalorder %s84, 0
      %p157 = por %p155, %p156
      %p158 = scmp.ne.s32.totalorder %s144, %s145
      %p159 = scmp.eq.s32.totalorder %s85, 1
      %p160 = por %p158, %p159
      %p162 = scmp.ne.s32.totalorder %s145, %s161
      %p163 = scmp.eq.s32.totalorder %s85, 0
      %p164 = por %p162, %p163
      %s166 = sadd.s32 %s165, 1
      %p169 = scmp.eq.s32.totalorder %s79, 1
      %p170 = scmp.ne.s32.totalorder %s165, %s167
      %p171 = scmp.eq.s32.totalorder %s79, 0
      %p172 = por %p170, %p171
      %p173 = scmp.ne.s32.totalorder %s165, %s167
      %p174 = scmp.eq.s32.totalorder %s84, 1
      %p175 = por %p173, %p174
      %p176 = scmp.ne.s32.totalorder %s167, %s168
      %p177 = scmp.eq.s32.totalorder %s84, 0
      %p178 = por %p176, %p177
      %p179 = scmp.ne.s32.totalorder %s167, %s168
      %p180 = scmp.eq.s32.totalorder %s85, 1
      %p181 = por %p179, %p180
      %p183 = scmp.ne.s32.totalorder %s168, %s182
      %p184 = scmp.eq.s32.totalorder %s85, 0
      %p185 = por %p183, %p184
      %s187 = sadd.s32 %s186, 1
      %p190 = scmp.eq.s32.totalorder %s79, 1
      %p191 = scmp.ne.s32.totalorder %s186, %s188
      %p192 = scmp.eq.s32.totalorder %s79, 0
      %p193 = por %p191, %p192
      %p194 = scmp.ne.s32.totalorder %s186, %s188
      %p195 = scmp.eq.s32.totalorder %s84, 1
      %p196 = por %p194, %p195
      %p197 = scmp.ne.s32.totalorder %s188, %s189
      %p198 = scmp.eq.s32.totalorder %s84, 0
      %p199 = por %p197, %p198
      %p200 = scmp.ne.s32.totalorder %s188, %s189
      %p201 = scmp.eq.s32.totalorder %s85, 1
      %p202 = por %p200, %p201
      %p204 = scmp.ne.s32.totalorder %s189, %s203
      %p205 = scmp.eq.s32.totalorder %s85, 0
      %p206 = por %p204, %p205
      %s208 = sadd.s32 %s207, 1
      %p211 = scmp.eq.s32.totalorder %s79, 1
      %p212 = scmp.ne.s32.totalorder %s207, %s209
      %p213 = scmp.eq.s32.totalorder %s79, 0
      %p214 = por %p212, %p213
      %p215 = scmp.ne.s32.totalorder %s207, %s209
      %p216 = scmp.eq.s32.totalorder %s84, 1
      %p217 = por %p215, %p216
      %p218 = scmp.ne.s32.totalorder %s209, %s210
      %p219 = scmp.eq.s32.totalorder %s84, 0
      %p220 = por %p218, %p219
      %p221 = scmp.ne.s32.totalorder %s209, %s210
      %p222 = scmp.eq.s32.totalorder %s85, 1
      %p223 = por %p221, %p222
      %p225 = scmp.ne.s32.totalorder %s210, %s224
      %p226 = scmp.eq.s32.totalorder %s85, 0
      %p227 = por %p225, %p226
      %s229 = sadd.s32 %s228, 1
      %p232 = scmp.eq.s32.totalorder %s79, 1
      %p233 = scmp.ne.s32.totalorder %s228, %s230
      %p234 = scmp.eq.s32.totalorder %s79, 0
      %p235 = por %p233, %p234
      %p236 = scmp.ne.s32.totalorder %s228, %s230
      %p237 = scmp.eq.s32.totalorder %s84, 1
      %p238 = por %p236, %p237
      %p239 = scmp.ne.s32.totalorder %s230, %s231
      %p240 = scmp.eq.s32.totalorder %s84, 0
      %p241 = por %p239, %p240
      %p242 = scmp.ne.s32.totalorder %s230, %s231
      %p243 = scmp.eq.s32.totalorder %s85, 1
      %p244 = por %p242, %p243
      %p246 = scmp.ne.s32.totalorder %s231, %s245
      %p247 = scmp.eq.s32.totalorder %s85, 0
      %p248 = por %p246, %p247
      %s250 = sadd.s32 %s249, 1
      %p253 = scmp.eq.s32.totalorder %s79, 1
      %p254 = scmp.ne.s32.totalorder %s249, %s251
      %p255 = scmp.eq.s32.totalorder %s79, 0
      %p256 = por %p254, %p255
      %p257 = scmp.ne.s32.totalorder %s249, %s251
      %p258 = scmp.eq.s32.totalorder %s84, 1
      %p259 = por %p257, %p258
      %p260 = scmp.ne.s32.totalorder %s251, %s252
      %p261 = scmp.eq.s32.totalorder %s84, 0
      %p262 = por %p260, %p261
      %p263 = scmp.ne.s32.totalorder %s251, %s252
      %p264 = scmp.eq.s32.totalorder %s85, 1
      %p265 = por %p263, %p264
      %p267 = scmp.ne.s32.totalorder %s252, %s266
      %p268 = scmp.eq.s32.totalorder %s85, 0
      %p269 = por %p267, %p268
      %s271 = sadd.s32 %s270, 1
      %p274 = scmp.eq.s32.totalorder %s79, 1
      %p275 = scmp.ne.s32.totalorder %s270, %s272
      %p276 = scmp.eq.s32.totalorder %s79, 0
      %p277 = por %p275, %p276
      %p278 = scmp.ne.s32.totalorder %s270, %s272
      %p279 = scmp.eq.s32.totalorder %s84, 1
      %p280 = por %p278, %p279
      %p281 = scmp.ne.s32.totalorder %s272, %s273
      %p282 = scmp.eq.s32.totalorder %s84, 0
      %p283 = por %p281, %p282
      %p284 = scmp.ne.s32.totalorder %s272, %s273
      %p285 = scmp.eq.s32.totalorder %s85, 1
      %p286 = por %p284, %p285
      %p288 = scmp.ne.s32.totalorder %s273, %s287
      %p289 = scmp.eq.s32.totalorder %s85, 0
      %p290 = por %p288, %p289
      %s292 = sadd.s32 %s291, 1
      %p295 = scmp.eq.s32.totalorder %s79, 1
      %p296 = scmp.ne.s32.totalorder %s291, %s293
      %p297 = scmp.eq.s32.totalorder %s79, 0
      %p298 = por %p296, %p297
      %p299 = scmp.ne.s32.totalorder %s291, %s293
      %p300 = scmp.eq.s32.totalorder %s84, 1
      %p301 = por %p299, %p300
      %p302 = scmp.ne.s32.totalorder %s293, %s294
      %p303 = scmp.eq.s32.totalorder %s84, 0
      %p304 = por %p302, %p303
      %p305 = scmp.ne.s32.totalorder %s293, %s294
      %p306 = scmp.eq.s32.totalorder %s85, 1
      %p307 = por %p305, %p306
      %p309 = scmp.ne.s32.totalorder %s294, %s308
      %p310 = scmp.eq.s32.totalorder %s85, 0
      %p311 = por %p309, %p310
      %s313 = sadd.s32 %s312, 1
      %p316 = scmp.eq.s32.totalorder %s79, 1
      %p317 = scmp.ne.s32.totalorder %s312, %s314
      %p318 = scmp.eq.s32.totalorder %s79, 0
      %p319 = por %p317, %p318
      %p320 = scmp.ne.s32.totalorder %s312, %s314
      %p321 = scmp.eq.s32.totalorder %s84, 1
      %p322 = por %p320, %p321
      %p323 = scmp.ne.s32.totalorder %s314, %s315
      %p324 = scmp.eq.s32.totalorder %s84, 0
      %p325 = por %p323, %p324
      %p326 = scmp.ne.s32.totalorder %s314, %s315
      %p327 = scmp.eq.s32.totalorder %s85, 1
      %p328 = por %p326, %p327
      %p330 = scmp.ne.s32.totalorder %s315, %s329
      %p331 = scmp.eq.s32.totalorder %s85, 0
      %p332 = por %p330, %p331
      %s334 = sadd.s32 %s333, 1
      %p337 = scmp.eq.s32.totalorder %s79, 1
      %p338 = scmp.ne.s32.totalorder %s333, %s335
      %p339 = scmp.eq.s32.totalorder %s79, 0
      %p340 = por %p338, %p339
      %p341 = scmp.ne.s32.totalorder %s333, %s335
      %p342 = scmp.eq.s32.totalorder %s84, 1
      %p343 = por %p341, %p342
      %p344 = scmp.ne.s32.totalorder %s335, %s336
      %p345 = scmp.eq.s32.totalorder %s84, 0
      %p346 = por %p344, %p345
      %p347 = scmp.ne.s32.totalorder %s335, %s336
      %p348 = scmp.eq.s32.totalorder %s85, 1
      %p349 = por %p347, %p348
      %p351 = scmp.ne.s32.totalorder %s336, %s350
      %p352 = scmp.eq.s32.totalorder %s85, 0
      %p353 = por %p351, %p352
      %s355 = sadd.s32 %s354, 1
      %p358 = scmp.eq.s32.totalorder %s79, 1
      %p359 = scmp.ne.s32.totalorder %s354, %s356
      %p360 = scmp.eq.s32.totalorder %s79, 0
      %p361 = por %p359, %p360
      %p362 = scmp.ne.s32.totalorder %s354, %s356
      %p363 = scmp.eq.s32.totalorder %s84, 1
      %p364 = por %p362, %p363
      %p365 = scmp.ne.s32.totalorder %s356, %s357
      %p366 = scmp.eq.s32.totalorder %s84, 0
      %p367 = por %p365, %p366
      %p368 = scmp.ne.s32.totalorder %s356, %s357
      %p369 = scmp.eq.s32.totalorder %s85, 1
      %p370 = por %p368, %p369
      %p372 = scmp.ne.s32.totalorder %s357, %s371
      %p373 = scmp.eq.s32.totalorder %s85, 0
      %p374 = por %p372, %p373
      %s376 = sadd.s32 %s375, 1
      %p379 = scmp.eq.s32.totalorder %s79, 1
      %p380 = scmp.ne.s32.totalorder %s375, %s377
      %p381 = scmp.eq.s32.totalorder %s79, 0
      %p382 = por %p380, %p381
      %p383 = scmp.ne.s32.totalorder %s375, %s377
      %p384 = scmp.eq.s32.totalorder %s84, 1
      %p385 = por %p383, %p384
      %p386 = scmp.ne.s32.totalorder %s377, %s378
      %p387 = scmp.eq.s32.totalorder %s84, 0
      %p388 = por %p386, %p387
      %p389 = scmp.ne.s32.totalorder %s377, %s378
      %p390 = scmp.eq.s32.totalorder %s85, 1
      %p391 = por %p389, %p390
      %p393 = scmp.ne.s32.totalorder %s378, %s392
      %p394 = scmp.eq.s32.totalorder %s85, 0
      %p395 = por %p393, %p394
      %s397 = sadd.s32 %s396, 1
      %p400 = scmp.eq.s32.totalorder %s79, 1
      %p401 = scmp.ne.s32.totalorder %s396, %s398
      %p402 = scmp.eq.s32.totalorder %s79, 0
      %p403 = por %p401, %p402
      %p404 = scmp.ne.s32.totalorder %s396, %s398
      %p405 = scmp.eq.s32.totalorder %s84, 1
      %p406 = por %p404, %p405
      %p407 = scmp.ne.s32.totalorder %s398, %s399
      %p408 = scmp.eq.s32.totalorder %s84, 0
      %p409 = por %p407, %p408
      %p410 = scmp.ne.s32.totalorder %s398, %s399
      %p411 = scmp.eq.s32.totalorder %s85, 1
      %p412 = por %p410, %p411
      %p414 = scmp.ne.s32.totalorder %s399, %s413
      %p415 = scmp.eq.s32.totalorder %s85, 0
      %p416 = por %p414, %p415
      %s418 = sadd.s32 %s417, 1
      %p421 = scmp.eq.s32.totalorder %s79, 1
      %p422 = scmp.ne.s32.totalorder %s417, %s419
      %p423 = scmp.eq.s32.totalorder %s79, 0
      %p424 = por %p422, %p423
      %p425 = scmp.ne.s32.totalorder %s417, %s419
      %p426 = scmp.eq.s32.totalorder %s84, 1
      %p427 = por %p425, %p426
      %p428 = scmp.ne.s32.totalorder %s419, %s420
      %p429 = scmp.eq.s32.totalorder %s84, 0
      %p430 = por %p428, %p429
      %p431 = scmp.ne.s32.totalorder %s419, %s420
      %p432 = scmp.eq.s32.totalorder %s85, 1
      %p433 = por %p431, %p432
      %p435 = scmp.ne.s32.totalorder %s420, %s434
      %p436 = scmp.eq.s32.totalorder %s85, 0
      %p437 = por %p435, %p436
      %s439 = sadd.s32 %s438, 1
      %p442 = scmp.eq.s32.totalorder %s79, 1
      %p443 = scmp.ne.s32.totalorder %s438, %s440
      %p444 = scmp.eq.s32.totalorder %s79, 0
      %p445 = por %p443, %p444
      %p446 = scmp.ne.s32.totalorder %s438, %s440
      %p447 = scmp.eq.s32.totalorder %s84, 1
      %p448 = por %p446, %p447
      %p449 = scmp.ne.s32.totalorder %s440, %s441
      %p450 = scmp.eq.s32.totalorder %s84, 0
      %p451 = por %p449, %p450
      %p452 = scmp.ne.s32.totalorder %s440, %s441
      %p453 = scmp.eq.s32.totalorder %s85, 1
      %p454 = por %p452, %p453
      %p456 = scmp.ne.s32.totalorder %s441, %s455
      %p457 = scmp.eq.s32.totalorder %s85, 0
      %p458 = por %p456, %p457
      %s460 = sadd.s32 %s459, 1
      %p463 = scmp.eq.s32.totalorder %s79, 1
      %p464 = scmp.ne.s32.totalorder %s459, %s461
      %p465 = scmp.eq.s32.totalorder %s79, 0
      %p466 = por %p464, %p465
      %p467 = scmp.ne.s32.totalorder %s459, %s461
      %p468 = scmp.eq.s32.totalorder %s84, 1
      %p469 = por %p467, %p468
      %p470 = scmp.ne.s32.totalorder %s461, %s462
      %p471 = scmp.eq.s32.totalorder %s84, 0
      %p472 = por %p470, %p471
      %p473 = scmp.ne.s32.totalorder %s461, %s462
      %p474 = scmp.eq.s32.totalorder %s85, 1
      %p475 = por %p473, %p474
      %p477 = scmp.ne.s32.totalorder %s462, %s476
      %p478 = scmp.eq.s32.totalorder %s85, 0
      %p479 = por %p477, %p478
      %s481 = sadd.s32 %s480, 1
      %p484 = scmp.eq.s32.totalorder %s79, 1
      %p485 = scmp.ne.s32.totalorder %s480, %s482
      %p486 = scmp.eq.s32.totalorder %s79, 0
      %p487 = por %p485, %p486
      %p488 = scmp.ne.s32.totalorder %s480, %s482
      %p489 = scmp.eq.s32.totalorder %s84, 1
      %p490 = por %p488, %p489
      %p491 = scmp.ne.s32.totalorder %s482, %s483
      %p492 = scmp.eq.s32.totalorder %s84, 0
      %p493 = por %p491, %p492
      %p494 = scmp.ne.s32.totalorder %s482, %s483
      %p495 = scmp.eq.s32.totalorder %s85, 1
      %p496 = por %p494, %p495
      %p498 = scmp.ne.s32.totalorder %s483, %s497
      %p499 = scmp.eq.s32.totalorder %s85, 0
      %p500 = por %p498, %p499
      %s502 = sadd.s32 %s501, 1
      %p505 = scmp.eq.s32.totalorder %s79, 1
      %p506 = scmp.ne.s32.totalorder %s501, %s503
      %p507 = scmp.eq.s32.totalorder %s79, 0
      %p508 = por %p506, %p507
      %p509 = scmp.ne.s32.totalorder %s501, %s503
      %p510 = scmp.eq.s32.totalorder %s84, 1
      %p511 = por %p509, %p510
      %p512 = scmp.ne.s32.totalorder %s503, %s504
      %p513 = scmp.eq.s32.totalorder %s84, 0
      %p514 = por %p512, %p513
      %p515 = scmp.ne.s32.totalorder %s503, %s504
      %p516 = scmp.eq.s32.totalorder %s85, 1
      %p517 = por %p515, %p516
      %p519 = scmp.ne.s32.totalorder %s504, %s518
      %p520 = scmp.eq.s32.totalorder %s85, 0
      %p521 = por %p519, %p520
      %s523 = sadd.s32 %s522, 1
      %p526 = scmp.eq.s32.totalorder %s79, 1
      %p527 = scmp.ne.s32.totalorder %s522, %s524
      %p528 = scmp.eq.s32.totalorder %s79, 0
      %p529 = por %p527, %p528
      %p530 = scmp.ne.s32.totalorder %s522, %s524
      %p531 = scmp.eq.s32.totalorder %s84, 1
      %p532 = por %p530, %p531
      %p533 = scmp.ne.s32.totalorder %s524, %s525
      %p534 = scmp.eq.s32.totalorder %s84, 0
      %p535 = por %p533, %p534
      %p536 = scmp.ne.s32.totalorder %s524, %s525
      %p537 = scmp.eq.s32.totalorder %s85, 1
      %p538 = por %p536, %p537
      %p540 = scmp.ne.s32.totalorder %s525, %s539
      %p541 = scmp.eq.s32.totalorder %s85, 0
      %p542 = por %p540, %p541
      %s544 = sadd.s32 %s543, 1
      %p547 = scmp.eq.s32.totalorder %s79, 1
      %p548 = scmp.ne.s32.totalorder %s543, %s545
      %p549 = scmp.eq.s32.totalorder %s79, 0
      %p550 = por %p548, %p549
      %p551 = scmp.ne.s32.totalorder %s543, %s545
      %p552 = scmp.eq.s32.totalorder %s84, 1
      %p553 = por %p551, %p552
      %p554 = scmp.ne.s32.totalorder %s545, %s546
      %p555 = scmp.eq.s32.totalorder %s84, 0
      %p556 = por %p554, %p555
      %p557 = scmp.ne.s32.totalorder %s545, %s546
      %p558 = scmp.eq.s32.totalorder %s85, 1
      %p559 = por %p557, %p558
      %p561 = scmp.ne.s32.totalorder %s546, %s560
      %p562 = scmp.eq.s32.totalorder %s85, 0
      %p563 = por %p561, %p562
      %s565 = sadd.s32 %s564, 1
      %p568 = scmp.eq.s32.totalorder %s79, 1
      %p569 = scmp.ne.s32.totalorder %s564, %s566
      %p570 = scmp.eq.s32.totalorder %s79, 0
      %p571 = por %p569, %p570
      %p572 = scmp.ne.s32.totalorder %s564, %s566
      %p573 = scmp.eq.s32.totalorder %s84, 1
      %p574 = por %p572, %p573
      %p575 = scmp.ne.s32.totalorder %s566, %s567
      %p576 = scmp.eq.s32.totalorder %s84, 0
      %p577 = por %p575, %p576
      %p578 = scmp.ne.s32.totalorder %s566, %s567
      %p579 = scmp.eq.s32.totalorder %s85, 1
      %p580 = por %p578, %p579
      %p582 = scmp.ne.s32.totalorder %s567, %s581
      %p583 = scmp.eq.s32.totalorder %s85, 0
      %p584 = por %p582, %p583
      %s586 = sadd.s32 %s585, 1
      %p589 = scmp.eq.s32.totalorder %s79, 1
      %p590 = scmp.ne.s32.totalorder %s585, %s587
      %p591 = scmp.eq.s32.totalorder %s79, 0
      %p592 = por %p590, %p591
      %p593 = scmp.ne.s32.totalorder %s585, %s587
      %p594 = scmp.eq.s32.totalorder %s84, 1
      %p595 = por %p593, %p594
      %p596 = scmp.ne.s32.totalorder %s587, %s588
      %p597 = scmp.eq.s32.totalorder %s84, 0
      %p598 = por %p596, %p597
      %p599 = scmp.ne.s32.totalorder %s587, %s588
      %p600 = scmp.eq.s32.totalorder %s85, 1
      %p601 = por %p599, %p600
      %p603 = scmp.ne.s32.totalorder %s588, %s602
      %p604 = scmp.eq.s32.totalorder %s85, 0
      %p605 = por %p603, %p604
      %s607 = sadd.s32 %s606, 1
      %p610 = scmp.eq.s32.totalorder %s79, 1
      %p611 = scmp.ne.s32.totalorder %s606, %s608
      %p612 = scmp.eq.s32.totalorder %s79, 0
      %p613 = por %p611, %p612
      %p614 = scmp.ne.s32.totalorder %s606, %s608
      %p615 = scmp.eq.s32.totalorder %s84, 1
      %p616 = por %p614, %p615
      %p617 = scmp.ne.s32.totalorder %s608, %s609
      %p618 = scmp.eq.s32.totalorder %s84, 0
      %p619 = por %p617, %p618
      %p620 = scmp.ne.s32.totalorder %s608, %s609
      %p621 = scmp.eq.s32.totalorder %s85, 1
      %p622 = por %p620, %p621
      %p624 = scmp.ne.s32.totalorder %s609, %s623
      %p625 = scmp.eq.s32.totalorder %s85, 0
      %p626 = por %p624, %p625
      %s628 = sadd.s32 %s627, 1
      %p631 = scmp.eq.s32.totalorder %s79, 1
      %p632 = scmp.ne.s32.totalorder %s627, %s629
      %p633 = scmp.eq.s32.totalorder %s79, 0
      %p634 = por %p632, %p633
      %p635 = scmp.ne.s32.totalorder %s627, %s629
      %p636 = scmp.eq.s32.totalorder %s84, 1
      %p637 = por %p635, %p636
      %p638 = scmp.ne.s32.totalorder %s629, %s630
      %p639 = scmp.eq.s32.totalorder %s84, 0
      %p640 = por %p638, %p639
      %p641 = scmp.ne.s32.totalorder %s629, %s630
      %p642 = scmp.eq.s32.totalorder %s85, 1
      %p643 = por %p641, %p642
      %p645 = scmp.ne.s32.totalorder %s630, %s644
      %p646 = scmp.eq.s32.totalorder %s85, 0
      %p647 = por %p645, %p646
      %s649 = sadd.s32 %s648, 1
      %p652 = scmp.eq.s32.totalorder %s79, 1
      %p653 = scmp.ne.s32.totalorder %s648, %s650
      %p654 = scmp.eq.s32.totalorder %s79, 0
      %p655 = por %p653, %p654
      %p656 = scmp.ne.s32.totalorder %s648, %s650
      %p657 = scmp.eq.s32.totalorder %s84, 1
      %p658 = por %p656, %p657
      %p659 = scmp.ne.s32.totalorder %s650, %s651
      %p660 = scmp.eq.s32.totalorder %s84, 0
      %p661 = por %p659, %p660
      %p662 = scmp.ne.s32.totalorder %s650, %s651
      %p663 = scmp.eq.s32.totalorder %s85, 1
      %p664 = por %p662, %p663
      %p666 = scmp.ne.s32.totalorder %s651, %s665
      %p667 = scmp.eq.s32.totalorder %s85, 0
      %p668 = por %p666, %p667
      %s670 = sadd.s32 %s669, 1
      %p673 = scmp.eq.s32.totalorder %s79, 1
      %p674 = scmp.ne.s32.totalorder %s669, %s671
      %p675 = scmp.eq.s32.totalorder %s79, 0
      %p676 = por %p674, %p675
      %p677 = scmp.ne.s32.totalorder %s669, %s671
      %p678 = scmp.eq.s32.totalorder %s84, 1
      %p679 = por %p677, %p678
      %p680 = scmp.ne.s32.totalorder %s671, %s672
      %p681 = scmp.eq.s32.totalorder %s84, 0
      %p682 = por %p680, %p681
      %p683 = scmp.ne.s32.totalorder %s671, %s672
      %p684 = scmp.eq.s32.totalorder %s85, 1
      %p685 = por %p683, %p684
      %p687 = scmp.ne.s32.totalorder %s672, %s686
      %p688 = scmp.eq.s32.totalorder %s85, 0
      %p689 = por %p687, %p688
      %s691 = sadd.s32 %s690, 1
      %p694 = scmp.eq.s32.totalorder %s79, 1
      %p695 = scmp.ne.s32.totalorder %s690, %s692
      %p696 = scmp.eq.s32.totalorder %s79, 0
      %p697 = por %p695, %p696
      %p698 = scmp.ne.s32.totalorder %s690, %s692
      %p699 = scmp.eq.s32.totalorder %s84, 1
      %p700 = por %p698, %p699
      %p701 = scmp.ne.s32.totalorder %s692, %s693
      %p702 = scmp.eq.s32.totalorder %s84, 0
      %p703 = por %p701, %p702
      %p704 = scmp.ne.s32.totalorder %s692, %s693
      %p705 = scmp.eq.s32.totalorder %s85, 1
      %p706 = por %p704, %p705
      %p708 = scmp.ne.s32.totalorder %s693, %s707
      %p709 = scmp.eq.s32.totalorder %s85, 0
      %p710 = por %p708, %p709
      %s711 = ssub.s32 %s79, %s86
      %p712 = scmp.eq.s32.totalorder %s711, 0
      %s714 = sadd.s32 %s713, 1
      %s715 = scalar_select %p712, %s713, %s714
      %p718 = pneg %p712
      %p719 = scmp.eq.s32.totalorder %s79, 1
      %p720 = por %p718, %p719
      %p721 = scmp.ne.s32.totalorder %s713, %s716
      %p722 = scmp.eq.s32.totalorder %s79, 0
      %p723 = por %p721, %p722
      %p724 = scmp.ne.s32.totalorder %s713, %s716
      %p725 = scmp.eq.s32.totalorder %s84, 1
      %p726 = por %p724, %p725
      %p727 = scmp.ne.s32.totalorder %s716, %s717
      %p728 = scmp.eq.s32.totalorder %s84, 0
      %p729 = por %p727, %p728
      %p730 = scmp.ne.s32.totalorder %s716, %s717
      %p731 = scmp.eq.s32.totalorder %s85, 1
      %p732 = por %p730, %p731
      %p734 = scmp.ne.s32.totalorder %s717, %s733
      %p735 = scmp.eq.s32.totalorder %s85, 0
      %p736 = por %p734, %p735
      %p737 = scmp.le.s32.totalorder 1, %s79
      %p738 = scmp.lt.s32.totalorder %s79, 3
      %p739 = pnand %p737, %p738
      %p740 = pneg %p739
      // Predicated region
      $region9: #{tpu_custom_call.1} parent=5 // pred_check
        _
      $region10: #{tpu_custom_call.1} parent=5 // pred_check_branch
        %742 = sbr.rel (%p739) target = $region12
      $region11: #{tpu_custom_call.1} parent=5 // pred_region
        %s743 = ssub.s32 %s79, 1
        // Predicated region
        $region13: #{tpu_custom_call.1} parent=11 // pred_check
          %p744 = pneg %p178
        $region14: #{tpu_custom_call.1} parent=11 // pred_check_branch
          %746 = sbr.rel (%p744) target = $region16
        $region15: #{tpu_custom_call.1} parent=11 // pred_region
          _
        $region16: #{tpu_custom_call.1} parent=11 // pred_fallthru
          _
        // Predicated region
        $region17: #{tpu_custom_call.1} parent=11 // pred_check
          %p747 = pneg %p199
        $region18: #{tpu_custom_call.1} parent=11 // pred_check_branch
          %749 = sbr.rel (%p747) target = $region20
        $region19: #{tpu_custom_call.1} parent=11 // pred_region
          %s751 = ssub.s32 16, 16
          %752 = vsyncadd [#allocation6], %s751
          %s754 = sshll.u32 [#allocation5], 4
          %s755 = int_to_ptr.vmem [resolvable:$true] %s754
          %757 = dma.hbm_to_vmem [thread:$0]  %s9, 16, %s755, [#allocation6]
        $region20: #{tpu_custom_call.1} parent=11 // pred_fallthru
          _
        // Predicated region
        $region21: #{tpu_custom_call.1} parent=11 // pred_check
          %p758 = pneg %p220
        $region22: #{tpu_custom_call.1} parent=11 // pred_check_branch
          %760 = sbr.rel (%p758) target = $region24
        $region23: #{tpu_custom_call.1} parent=11 // pred_region
          %s762 = ssub.s32 256, 256
          %763 = vsyncadd [#allocation6], %s762
          %s764 = sshll.u32 [#allocation7], 4
          %s765 = int_to_ptr.vmem [resolvable:$true] %s764
          %770 = dma.hbm_to_vmem [thread:$0]  %s11, 256, %s765, [#allocation6], 64, 64, 4
        $region24: #{tpu_custom_call.1} parent=11 // pred_fallthru
          _
        // Predicated region
        $region25: #{tpu_custom_call.1} parent=11 // pred_check
          %p771 = pneg %p241
        $region26: #{tpu_custom_call.1} parent=11 // pred_check_branch
          %773 = sbr.rel (%p771) target = $region28
        $region27: #{tpu_custom_call.1} parent=11 // pred_region
          %s775 = ssub.s32 16, 16
          %776 = vsyncadd [#allocation9], %s775
          %s778 = sshll.u32 [#allocation8], 4
          %s779 = int_to_ptr.vmem [resolvable:$true] %s778
          %781 = dma.hbm_to_vmem [thread:$0]  %s13, 16, %s779, [#allocation9]
        $region28: #{tpu_custom_call.1} parent=11 // pred_fallthru
          _
        // Predicated region
        $region29: #{tpu_custom_call.1} parent=11 // pred_check
          %p782 = pneg %p262
        $region30: #{tpu_custom_call.1} parent=11 // pred_check_branch
          %784 = sbr.rel (%p782) target = $region32
        $region31: #{tpu_custom_call.1} parent=11 // pred_region
          %s786 = ssub.s32 256, 256
          %787 = vsyncadd [#allocation9], %s786
          %s788 = sshll.u32 [#allocation10], 4
          %s789 = int_to_ptr.vmem [resolvable:$true] %s788
          %794 = dma.hbm_to_vmem [thread:$0]  %s15, 256, %s789, [#allocation9], 64, 64, 4
        $region32: #{tpu_custom_call.1} parent=11 // pred_fallthru
          _
        // Predicated region
        $region33: #{tpu_custom_call.1} parent=11 // pred_check
          %p795 = pneg %p283
        $region34: #{tpu_custom_call.1} parent=11 // pred_check_branch
          %797 = sbr.rel (%p795) target = $region36
        $region35: #{tpu_custom_call.1} parent=11 // pred_region
          %s799 = ssub.s32 16, 16
          %800 = vsyncadd [#allocation12], %s799
          %s802 = sshll.u32 [#allocation11], 4
          %s803 = int_to_ptr.vmem [resolvable:$true] %s802
          %805 = dma.hbm_to_vmem [thread:$0]  %s17, 16, %s803, [#allocation12]
        $region36: #{tpu_custom_call.1} parent=11 // pred_fallthru
          _
        // Predicated region
        $region37: #{tpu_custom_call.1} parent=11 // pred_check
          %p806 = pneg %p304
        $region38: #{tpu_custom_call.1} parent=11 // pred_check_branch
          %808 = sbr.rel (%p806) target = $region40
        $region39: #{tpu_custom_call.1} parent=11 // pred_region
          _
        $region40: #{tpu_custom_call.1} parent=11 // pred_fallthru
          _
        // Predicated region
        $region41: #{tpu_custom_call.1} parent=11 // pred_check
          %p809 = pneg %p325
        $region42: #{tpu_custom_call.1} parent=11 // pred_check_branch
          %811 = sbr.rel (%p809) target = $region44
        $region43: #{tpu_custom_call.1} parent=11 // pred_region
          %s813 = ssub.s32 16, 16
          %814 = vsyncadd [#allocation12], %s813
          %s816 = sshll.u32 [#allocation13], 4
          %s817 = int_to_ptr.vmem [resolvable:$true] %s816
          %819 = dma.hbm_to_vmem [thread:$0]  %s21, 16, %s817, [#allocation12]
        $region44: #{tpu_custom_call.1} parent=11 // pred_fallthru
          _
        // Predicated region
        $region45: #{tpu_custom_call.1} parent=11 // pred_check
          %p820 = pneg %p346
        $region46: #{tpu_custom_call.1} parent=11 // pred_check_branch
          %822 = sbr.rel (%p820) target = $region48
        $region47: #{tpu_custom_call.1} parent=11 // pred_region
          %s824 = ssub.s32 16, 16
          %825 = vsyncadd [#allocation15], %s824
          %s827 = sshll.u32 [#allocation14], 4
          %s828 = int_to_ptr.vmem [resolvable:$true] %s827
          %830 = dma.hbm_to_vmem [thread:$0]  %s23, 16, %s828, [#allocation15]
        $region48: #{tpu_custom_call.1} parent=11 // pred_fallthru
          _
        // Predicated region
        $region49: #{tpu_custom_call.1} parent=11 // pred_check
          %p831 = pneg %p367
        $region50: #{tpu_custom_call.1} parent=11 // pred_check_branch
          %833 = sbr.rel (%p831) target = $region52
        $region51: #{tpu_custom_call.1} parent=11 // pred_region
          %s835 = ssub.s32 16, 16
          %836 = vsyncadd [#allocation15], %s835
          %s838 = sshll.u32 [#allocation16], 4
          %s839 = int_to_ptr.vmem [resolvable:$true] %s838
          %841 = dma.hbm_to_vmem [thread:$0]  %s25, 16, %s839, [#allocation15]
        $region52: #{tpu_custom_call.1} parent=11 // pred_fallthru
          _
        // Predicated region
        $region53: #{tpu_custom_call.1} parent=11 // pred_check
          %p842 = pneg %p388
        $region54: #{tpu_custom_call.1} parent=11 // pred_check_branch
          %844 = sbr.rel (%p842) target = $region56
        $region55: #{tpu_custom_call.1} parent=11 // pred_region
          %s846 = ssub.s32 256, 256
          %847 = vsyncadd [#allocation18], %s846
          %s848 = sshll.u32 [#allocation17], 4
          %s849 = int_to_ptr.vmem [resolvable:$true] %s848
          %854 = dma.hbm_to_vmem [thread:$0]  %s27, 256, %s849, [#allocation18], 64, 64, 4
        $region56: #{tpu_custom_call.1} parent=11 // pred_fallthru
          _
        // Predicated region
        $region57: #{tpu_custom_call.1} parent=11 // pred_check
          %p855 = pneg %p409
        $region58: #{tpu_custom_call.1} parent=11 // pred_check_branch
          %857 = sbr.rel (%p855) target = $region60
        $region59: #{tpu_custom_call.1} parent=11 // pred_region
          %s859 = ssub.s32 16, 16
          %860 = vsyncadd [#allocation18], %s859
          %s862 = sshll.u32 [#allocation19], 4
          %s863 = int_to_ptr.vmem [resolvable:$true] %s862
          %865 = dma.hbm_to_vmem [thread:$0]  %s29, 16, %s863, [#allocation18]
        $region60: #{tpu_custom_call.1} parent=11 // pred_fallthru
          _
        // Predicated region
        $region61: #{tpu_custom_call.1} parent=11 // pred_check
          %p866 = pneg %p430
        $region62: #{tpu_custom_call.1} parent=11 // pred_check_branch
          %868 = sbr.rel (%p866) target = $region64
        $region63: #{tpu_custom_call.1} parent=11 // pred_region
          %s870 = ssub.s32 256, 256
          %871 = vsyncadd [#allocation21], %s870
          %s872 = sshll.u32 [#allocation20], 4
          %s873 = int_to_ptr.vmem [resolvable:$true] %s872
          %878 = dma.hbm_to_vmem [thread:$0]  %s31, 256, %s873, [#allocation21], 64, 64, 4
        $region64: #{tpu_custom_call.1} parent=11 // pred_fallthru
          _
        // Predicated region
        $region65: #{tpu_custom_call.1} parent=11 // pred_check
          %p879 = pneg %p451
        $region66: #{tpu_custom_call.1} parent=11 // pred_check_branch
          %881 = sbr.rel (%p879) target = $region68
        $region67: #{tpu_custom_call.1} parent=11 // pred_region
          %s883 = ssub.s32 16, 16
          %884 = vsyncadd [#allocation21], %s883
          %s886 = sshll.u32 [#allocation22], 4
          %s887 = int_to_ptr.vmem [resolvable:$true] %s886
          %889 = dma.hbm_to_vmem [thread:$0]  %s33, 16, %s887, [#allocation21]
        $region68: #{tpu_custom_call.1} parent=11 // pred_fallthru
          _
        // Predicated region
        $region69: #{tpu_custom_call.1} parent=11 // pred_check
          %p890 = pneg %p472
        $region70: #{tpu_custom_call.1} parent=11 // pred_check_branch
          %892 = sbr.rel (%p890) target = $region72
        $region71: #{tpu_custom_call.1} parent=11 // pred_region
          %s894 = ssub.s32 256, 256
          %895 = vsyncadd [#allocation24], %s894
          %s896 = sshll.u32 [#allocation23], 4
          %s897 = int_to_ptr.vmem [resolvable:$true] %s896
          %902 = dma.hbm_to_vmem [thread:$0]  %s35, 256, %s897, [#allocation24], 64, 64, 4
        $region72: #{tpu_custom_call.1} parent=11 // pred_fallthru
          _
        // Predicated region
        $region73: #{tpu_custom_call.1} parent=11 // pred_check
          %p903 = pneg %p493
        $region74: #{tpu_custom_call.1} parent=11 // pred_check_branch
          %905 = sbr.rel (%p903) target = $region76
        $region75: #{tpu_custom_call.1} parent=11 // pred_region
          %s907 = ssub.s32 16, 16
          %908 = vsyncadd [#allocation24], %s907
          %s910 = sshll.u32 [#allocation25], 4
          %s911 = int_to_ptr.vmem [resolvable:$true] %s910
          %913 = dma.hbm_to_vmem [thread:$0]  %s37, 16, %s911, [#allocation24]
        $region76: #{tpu_custom_call.1} parent=11 // pred_fallthru
          _
        // Predicated region
        $region77: #{tpu_custom_call.1} parent=11 // pred_check
          %p914 = pneg %p514
        $region78: #{tpu_custom_call.1} parent=11 // pred_check_branch
          %916 = sbr.rel (%p914) target = $region80
        $region79: #{tpu_custom_call.1} parent=11 // pred_region
          %s918 = ssub.s32 256, 256
          %919 = vsyncadd [#allocation27], %s918
          %s920 = sshll.u32 [#allocation26], 4
          %s921 = int_to_ptr.vmem [resolvable:$true] %s920
          %926 = dma.hbm_to_vmem [thread:$0]  %s39, 256, %s921, [#allocation27], 64, 64, 4
        $region80: #{tpu_custom_call.1} parent=11 // pred_fallthru
          _
        // Predicated region
        $region81: #{tpu_custom_call.1} parent=11 // pred_check
          %p927 = pneg %p535
        $region82: #{tpu_custom_call.1} parent=11 // pred_check_branch
          %929 = sbr.rel (%p927) target = $region84
        $region83: #{tpu_custom_call.1} parent=11 // pred_region
          _
        $region84: #{tpu_custom_call.1} parent=11 // pred_fallthru
          _
        // Predicated region
        $region85: #{tpu_custom_call.1} parent=11 // pred_check
          %p930 = pneg %p556
        $region86: #{tpu_custom_call.1} parent=11 // pred_check_branch
          %932 = sbr.rel (%p930) target = $region88
        $region87: #{tpu_custom_call.1} parent=11 // pred_region
          _
        $region88: #{tpu_custom_call.1} parent=11 // pred_fallthru
          _
        // Predicated region
        $region89: #{tpu_custom_call.1} parent=11 // pred_check
          %p933 = pneg %p577
        $region90: #{tpu_custom_call.1} parent=11 // pred_check_branch
          %935 = sbr.rel (%p933) target = $region92
        $region91: #{tpu_custom_call.1} parent=11 // pred_region
          _
        $region92: #{tpu_custom_call.1} parent=11 // pred_fallthru
          _
        // Predicated region
        $region93: #{tpu_custom_call.1} parent=11 // pred_check
          %p936 = pneg %p598
        $region94: #{tpu_custom_call.1} parent=11 // pred_check_branch
          %938 = sbr.rel (%p936) target = $region96
        $region95: #{tpu_custom_call.1} parent=11 // pred_region
          %s940 = ssub.s32 256, 256
          %941 = vsyncadd [#allocation27], %s940
          %s942 = sshll.u32 [#allocation28], 4
          %s943 = int_to_ptr.vmem [resolvable:$true] %s942
          %948 = dma.hbm_to_vmem [thread:$0]  %s47, 256, %s943, [#allocation27], 64, 64, 4
        $region96: #{tpu_custom_call.1} parent=11 // pred_fallthru
          _
        // Predicated region
        $region97: #{tpu_custom_call.1} parent=11 // pred_check
          %p949 = pneg %p619
        $region98: #{tpu_custom_call.1} parent=11 // pred_check_branch
          %951 = sbr.rel (%p949) target = $region100
        $region99: #{tpu_custom_call.1} parent=11 // pred_region
          _
        $region100: #{tpu_custom_call.1} parent=11 // pred_fallthru
          _
        // Predicated region
        $region101: #{tpu_custom_call.1} parent=11 // pred_check
          %p952 = pneg %p640
        $region102: #{tpu_custom_call.1} parent=11 // pred_check_branch
          %954 = sbr.rel (%p952) target = $region104
        $region103: #{tpu_custom_call.1} parent=11 // pred_region
          _
        $region104: #{tpu_custom_call.1} parent=11 // pred_fallthru
          _
        // Predicated region
        $region105: #{tpu_custom_call.1} parent=11 // pred_check
          %p955 = pneg %p661
        $region106: #{tpu_custom_call.1} parent=11 // pred_check_branch
          %957 = sbr.rel (%p955) target = $region108
        $region107: #{tpu_custom_call.1} parent=11 // pred_region
          _
        $region108: #{tpu_custom_call.1} parent=11 // pred_fallthru
          _
        // Predicated region
        $region109: #{tpu_custom_call.1} parent=11 // pred_check
          %p958 = pneg %p682
        $region110: #{tpu_custom_call.1} parent=11 // pred_check_branch
          %960 = sbr.rel (%p958) target = $region112
        $region111: #{tpu_custom_call.1} parent=11 // pred_region
          _
        $region112: #{tpu_custom_call.1} parent=11 // pred_fallthru
          _
        // Predicated region
        $region113: #{tpu_custom_call.1} parent=11 // pred_check
          %p961 = pneg %p703
        $region114: #{tpu_custom_call.1} parent=11 // pred_check_branch
          %963 = sbr.rel (%p961) target = $region116
        $region115: #{tpu_custom_call.1} parent=11 // pred_region
          _
        $region116: #{tpu_custom_call.1} parent=11 // pred_fallthru
          _
      $region12: #{tpu_custom_call.1} parent=5 // pred_fallthru
        _
      %p964 = scmp.lt.s32.totalorder %s79, 2
      // Predicated region
      $region117: #{tpu_custom_call.1} parent=5 // pred_check
        %p965 = pneg %p964
      $region118: #{tpu_custom_call.1} parent=5 // pred_check_branch
        %967 = sbr.rel (%p965) target = $region120
      $region119: #{tpu_custom_call.1} parent=5 // pred_region
        // Predicated region
        $region121: #{tpu_custom_call.1} parent=119 // pred_check
          %p968 = pneg %p99
        $region122: #{tpu_custom_call.1} parent=119 // pred_check_branch
          %970 = sbr.rel (%p968) target = $region124
        $region123: #{tpu_custom_call.1} parent=119 // pred_region
          %p971 = scmp.lt.s32.totalorder %s79, 1
          %s972 = scalar_select %p971, %s79, 1
          %s973 = smul.addr %s972, 8
          %s974 = scalar_lea.vmem %s1, %s973
        $region124: #{tpu_custom_call.1} parent=119 // pred_fallthru
          _
        // Predicated region
        $region125: #{tpu_custom_call.1} parent=119 // pred_check
          %p975 = pneg %p125
        $region126: #{tpu_custom_call.1} parent=119 // pred_check_branch
          %977 = sbr.rel (%p975) target = $region128
        $region127: #{tpu_custom_call.1} parent=119 // pred_region
          %p978 = scmp.lt.s32.totalorder %s79, 1
          %s979 = scalar_select %p978, %s79, 1
          %s980 = smul.addr %s979, 8
          %s981 = scalar_lea.vmem %s3, %s980
        $region128: #{tpu_custom_call.1} parent=119 // pred_fallthru
          _
        // Predicated region
        $region129: #{tpu_custom_call.1} parent=119 // pred_check
          %p982 = pneg %p151
        $region130: #{tpu_custom_call.1} parent=119 // pred_check_branch
          %984 = sbr.rel (%p982) target = $region132
        $region131: #{tpu_custom_call.1} parent=119 // pred_region
          %s985 = sand.u32 %s141, 1
          %s986 = scalar_lea.sflag [#allocation3], %s985
          %s987 = sand.u32 %s141, 1
          %s988 = smul.addr %s987, 2
          %s989 = scalar_lea.vmem [#allocation2], %s988
          %s991 = ssub.s32 32, 32
          %992 = vsyncadd %s986, %s991
          %s993 = smul.addr %s79, 32
          %s994 = scalar_lea.hbm %s5, %s993
          %s996 = sshll.u32 %s989, 4
          %s997 = int_to_ptr.vmem [resolvable:$true] %s996
          %999 = dma.hbm_to_vmem [thread:$0]  %s994, 32, %s997, %s986
        $region132: #{tpu_custom_call.1} parent=119 // pred_fallthru
          _
      $region120: #{tpu_custom_call.1} parent=5 // pred_fallthru
        _
      %p1000 = scmp.le.s32.totalorder 1, %s79
      %p1001 = scmp.lt.s32.totalorder %s79, 3
      %p1002 = pnand %p1000, %p1001
      %p1003 = pneg %p1002
      // Predicated region
      $region133: #{tpu_custom_call.1} parent=5 // pred_check
        _
      $region134: #{tpu_custom_call.1} parent=5 // pred_check_branch
        %1005 = sbr.rel (%p1002) target = $region136
      $region135: #{tpu_custom_call.1} parent=5 // pred_region
        %s1006 = ssub.s32 %s79, 1
        %s1007 = sand.u32 %s144, 1
        %s1008 = scalar_lea.sflag [#allocation3], %s1007
        %s1009 = sand.u32 %s144, 1
        %s1010 = smul.addr %s1009, 2
        %s1011 = scalar_lea.vmem [#allocation2], %s1010
        // Predicated region
        $region137: #{tpu_custom_call.1} parent=135 // pred_check
          %p1012 = pneg %p157
        $region138: #{tpu_custom_call.1} parent=135 // pred_check_branch
          %1014 = sbr.rel (%p1012) target = $region140
        $region139: #{tpu_custom_call.1} parent=135 // pred_region
          %1015 = dma.done %s1008, 32
        $region140: #{tpu_custom_call.1} parent=135 // pred_fallthru
          _
        // Predicated region
        $region141: #{tpu_custom_call.1} parent=135 // pred_check
          %p1016 = pneg %p199
        $region142: #{tpu_custom_call.1} parent=135 // pred_check_branch
          %1018 = sbr.rel (%p1016) target = $region144
        $region143: #{tpu_custom_call.1} parent=135 // pred_region
          %1019 = dma.done [#allocation6], 16
        $region144: #{tpu_custom_call.1} parent=135 // pred_fallthru
          _
        // Predicated region
        $region145: #{tpu_custom_call.1} parent=135 // pred_check
          %p1020 = pneg %p220
        $region146: #{tpu_custom_call.1} parent=135 // pred_check_branch
          %1022 = sbr.rel (%p1020) target = $region148
        $region147: #{tpu_custom_call.1} parent=135 // pred_region
          %1023 = dma.done [#allocation6], 256
        $region148: #{tpu_custom_call.1} parent=135 // pred_fallthru
          _
        // Predicated region
        $region149: #{tpu_custom_call.1} parent=135 // pred_check
          %p1024 = pneg %p241
        $region150: #{tpu_custom_call.1} parent=135 // pred_check_branch
          %1026 = sbr.rel (%p1024) target = $region152
        $region151: #{tpu_custom_call.1} parent=135 // pred_region
          %1027 = dma.done [#allocation9], 16
        $region152: #{tpu_custom_call.1} parent=135 // pred_fallthru
          _
        // Predicated region
        $region153: #{tpu_custom_call.1} parent=135 // pred_check
          %p1028 = pneg %p262
        $region154: #{tpu_custom_call.1} parent=135 // pred_check_branch
          %1030 = sbr.rel (%p1028) target = $region156
        $region155: #{tpu_custom_call.1} parent=135 // pred_region
          %1031 = dma.done [#allocation9], 256
        $region156: #{tpu_custom_call.1} parent=135 // pred_fallthru
          _
        // Predicated region
        $region157: #{tpu_custom_call.1} parent=135 // pred_check
          %p1032 = pneg %p283
        $region158: #{tpu_custom_call.1} parent=135 // pred_check_branch
          %1034 = sbr.rel (%p1032) target = $region160
        $region159: #{tpu_custom_call.1} parent=135 // pred_region
          %1035 = dma.done [#allocation12], 16
        $region160: #{tpu_custom_call.1} parent=135 // pred_fallthru
          _
        // Predicated region
        $region161: #{tpu_custom_call.1} parent=135 // pred_check
          %p1036 = pneg %p325
        $region162: #{tpu_custom_call.1} parent=135 // pred_check_branch
          %1038 = sbr.rel (%p1036) target = $region164
        $region163: #{tpu_custom_call.1} parent=135 // pred_region
          %1039 = dma.done [#allocation12], 16
        $region164: #{tpu_custom_call.1} parent=135 // pred_fallthru
          _
        // Predicated region
        $region165: #{tpu_custom_call.1} parent=135 // pred_check
          %p1040 = pneg %p346
        $region166: #{tpu_custom_call.1} parent=135 // pred_check_branch
          %1042 = sbr.rel (%p1040) target = $region168
        $region167: #{tpu_custom_call.1} parent=135 // pred_region
          %1043 = dma.done [#allocation15], 16
        $region168: #{tpu_custom_call.1} parent=135 // pred_fallthru
          _
        // Predicated region
        $region169: #{tpu_custom_call.1} parent=135 // pred_check
          %p1044 = pneg %p367
        $region170: #{tpu_custom_call.1} parent=135 // pred_check_branch
          %1046 = sbr.rel (%p1044) target = $region172
        $region171: #{tpu_custom_call.1} parent=135 // pred_region
          %1047 = dma.done [#allocation15], 16
        $region172: #{tpu_custom_call.1} parent=135 // pred_fallthru
          _
        // Predicated region
        $region173: #{tpu_custom_call.1} parent=135 // pred_check
          %p1048 = pneg %p388
        $region174: #{tpu_custom_call.1} parent=135 // pred_check_branch
          %1050 = sbr.rel (%p1048) target = $region176
        $region175: #{tpu_custom_call.1} parent=135 // pred_region
          %1051 = dma.done [#allocation18], 256
        $region176: #{tpu_custom_call.1} parent=135 // pred_fallthru
          _
        // Predicated region
        $region177: #{tpu_custom_call.1} parent=135 // pred_check
          %p1052 = pneg %p409
        $region178: #{tpu_custom_call.1} parent=135 // pred_check_branch
          %1054 = sbr.rel (%p1052) target = $region180
        $region179: #{tpu_custom_call.1} parent=135 // pred_region
          %1055 = dma.done [#allocation18], 16
        $region180: #{tpu_custom_call.1} parent=135 // pred_fallthru
          _
        // Predicated region
        $region181: #{tpu_custom_call.1} parent=135 // pred_check
          %p1056 = pneg %p430
        $region182: #{tpu_custom_call.1} parent=135 // pred_check_branch
          %1058 = sbr.rel (%p1056) target = $region184
        $region183: #{tpu_custom_call.1} parent=135 // pred_region
          %1059 = dma.done [#allocation21], 256
        $region184: #{tpu_custom_call.1} parent=135 // pred_fallthru
          _
        // Predicated region
        $region185: #{tpu_custom_call.1} parent=135 // pred_check
          %p1060 = pneg %p451
        $region186: #{tpu_custom_call.1} parent=135 // pred_check_branch
          %1062 = sbr.rel (%p1060) target = $region188
        $region187: #{tpu_custom_call.1} parent=135 // pred_region
          %1063 = dma.done [#allocation21], 16
        $region188: #{tpu_custom_call.1} parent=135 // pred_fallthru
          _
        // Predicated region
        $region189: #{tpu_custom_call.1} parent=135 // pred_check
          %p1064 = pneg %p472
        $region190: #{tpu_custom_call.1} parent=135 // pred_check_branch
          %1066 = sbr.rel (%p1064) target = $region192
        $region191: #{tpu_custom_call.1} parent=135 // pred_region
          %1067 = dma.done [#allocation24], 256
        $region192: #{tpu_custom_call.1} parent=135 // pred_fallthru
          _
        // Predicated region
        $region193: #{tpu_custom_call.1} parent=135 // pred_check
          %p1068 = pneg %p493
        $region194: #{tpu_custom_call.1} parent=135 // pred_check_branch
          %1070 = sbr.rel (%p1068) target = $region196
        $region195: #{tpu_custom_call.1} parent=135 // pred_region
          %1071 = dma.done [#allocation24], 16
        $region196: #{tpu_custom_call.1} parent=135 // pred_fallthru
          _
        // Predicated region
        $region197: #{tpu_custom_call.1} parent=135 // pred_check
          %p1072 = pneg %p514
        $region198: #{tpu_custom_call.1} parent=135 // pred_check_branch
          %1074 = sbr.rel (%p1072) target = $region200
        $region199: #{tpu_custom_call.1} parent=135 // pred_region
          %1075 = dma.done [#allocation27], 256
        $region200: #{tpu_custom_call.1} parent=135 // pred_fallthru
          _
        // Predicated region
        $region201: #{tpu_custom_call.1} parent=135 // pred_check
          %p1076 = pneg %p598
        $region202: #{tpu_custom_call.1} parent=135 // pred_check_branch
          %1078 = sbr.rel (%p1076) target = $region204
        $region203: #{tpu_custom_call.1} parent=135 // pred_region
          %1079 = dma.done [#allocation27], 256
        $region204: #{tpu_custom_call.1} parent=135 // pred_fallthru
          _
        %p1080 = scmp.lt.s32.totalorder %s84, 1
        %s1081 = scalar_select %p1080, %s84, 1
        %s1082 = smul.addr %s1081, 8
        %s1083 = scalar_lea.vmem %s1, %s1082
        %p1084 = pneg %p105
        %p1085 = pneg %p102
        %p1086 = scmp.lt.s32.totalorder %s84, 1
        %s1087 = scalar_select %p1086, %s84, 1
        %s1088 = smul.addr %s1087, 8
        %s1089 = scalar_lea.vmem %s3, %s1088
        %p1090 = pneg %p131
        %p1091 = pneg %p128
        %s1092 = sand.u32 %s144, 1
        %s1093 = scalar_lea.sflag [#allocation3], %s1092
        %s1094 = sand.u32 %s144, 1
        %s1095 = smul.addr %s1094, 2
        %s1096 = scalar_lea.vmem [#allocation2], %s1095
        %p1097 = pneg %p157
        %p1098 = pneg %p154
        %p1099 = pneg %p178
        %p1100 = pneg %p175
        %p1101 = pneg %p199
        %p1102 = pneg %p196
        %p1103 = pneg %p220
        %p1104 = pneg %p217
        %p1105 = pneg %p241
        %p1106 = pneg %p238
        %p1107 = pneg %p262
        %p1108 = pneg %p259
        %p1109 = pneg %p283
        %p1110 = pneg %p280
        %p1111 = pneg %p304
        %p1112 = pneg %p301
        %p1113 = pneg %p325
        %p1114 = pneg %p322
        %p1115 = pneg %p346
        %p1116 = pneg %p343
        %p1117 = pneg %p367
        %p1118 = pneg %p364
        %p1119 = pneg %p388
        %p1120 = pneg %p385
        %p1121 = pneg %p409
        %p1122 = pneg %p406
        %p1123 = pneg %p430
        %p1124 = pneg %p427
        %p1125 = pneg %p451
        %p1126 = pneg %p448
        %p1127 = pneg %p472
        %p1128 = pneg %p469
        %p1129 = pneg %p493
        %p1130 = pneg %p490
        %p1131 = pneg %p514
        %p1132 = pneg %p511
        %p1133 = pneg %p535
        %p1134 = pneg %p532
        %p1135 = pneg %p556
        %p1136 = pneg %p553
        %p1137 = pneg %p577
        %p1138 = pneg %p574
        %p1139 = pneg %p598
        %p1140 = pneg %p595
        %p1141 = pneg %p619
        %p1142 = pneg %p616
        %p1143 = pneg %p640
        %p1144 = pneg %p637
        %p1145 = pneg %p661
        %p1146 = pneg %p658
        %p1147 = pneg %p682
        %p1148 = pneg %p679
        %p1149 = pneg %p703
        %p1150 = pneg %p700
        %p1151 = pneg %p729
        %p1152 = pneg %p726
        %s1153 = sand.u32 %s716, 1
        %s1154 = scalar_lea.sflag [#allocation4], %s1153
        %s1155 = sand.u32 %s716, 1
        %s1156 = smul.addr %s1155, 8
        %s1157 = scalar_lea.vmem [#allocation29], %s1156
        %p1158 = scmp.lt.s32.totalorder %s84, 1
        %s1159 = scalar_select %p1158, %s84, 1
        %s1160 = smul.addr %s1159, 8
        %s1161 = scalar_lea.vmem %s1, %s1160
        %p1162 = scmp.lt.s32.totalorder %s84, 1
        %s1163 = scalar_select %p1162, %s84, 1
        %s1164 = smul.addr %s1163, 8
        %s1165 = scalar_lea.vmem %s3, %s1164
        %v1169 = vld [vmem:[%s1161] sm:$0xff]
        %v1170 = vpack.c.bf16 %v1169, %v1169
        %v1171 = vld [vmem:[%s1165] sm:$0xff]
        %v1172 = vpack.c.bf16 %v1171, %v1171
        %v1173 = vld [vmem:[%s7] sm:$0xf]
        %v1174 = vld [vmem:[%s7 + $0x4] sm:$0xf]
        %v1175 = vld [vmem:[%s7 + $0x8] sm:$0xf]
        %v1176 = vld [vmem:[%s7 + $0xc] sm:$0xf]
        %v1177 = vld [vmem:[#allocation5] sm:$0x1]
        %v1179 = vlaneseq
        %v1180 = vshrl.u32 %v1179, 7
        %v1181 = vsub.s32 0, %v1180
        %v1182 = vrot.slane %v1177, %v1181
        %v1188 = vunpack.c.l.b16 %v1173
        %v1189 = vunpack.c.l.b16 %v1174
        %v1190 = vunpack.c.l.b16 %v1175
        %v1191 = vunpack.c.l.b16 %v1176
        %v1192 = vpack.c.b16 %v1189, %v1188
        %v1193 = vpack.c.b16 %v1191, %v1190
        %vm1196 = vcmask 261120
        %v1198 = vsel %vm1196, %v1170, 0
        %1200 = vmatprep.subr.bf16.mxu0 0
        %1201 = vmatpush1.bf16.msra.mxu0 0
        %1202 = vmatprep.subr.bf16.mxu0 0
        %1203 = vmatpush1.bf16.msra.mxu0 0
        %1204 = vmatprep.subr.bf16.mxu0 0
        %1205 = vmatpush1.bf16.msra.mxu0 0
        %1206 = vmatprep.subr.bf16.mxu0 0
        %1207 = vmatpush1.bf16.msra.mxu0 0
        %1208 = vmatprep.subr.bf16.mxu0 0
        %1209 = vmatpush1.bf16.msra.mxu0 0
        %1210 = vmatprep.subr.bf16.mxu0 0
        %1211 = vmatpush1.bf16.msra.mxu0 0
        %1212 = vmatprep.subr.bf16.mxu0 0
        %1213 = vmatpush1.bf16.msra.mxu0 %v1193
        %1214 = vmatprep.subr.bf16.mxu0 0
        %1215 = vmatpush1.bf16.msra.mxu0 %v1192
        %1216 = vmatprep.subr.bf16.mxu0 0
        %1217 = vmatpush2.bf16.msra.mxu0 0
        %1218 = vmatprep.subr.bf16.mxu0 0
        %1219 = vmatpush2.bf16.msra.mxu0 0
        %1220 = vmatprep.subr.bf16.mxu0 0
        %1221 = vmatpush2.bf16.msra.mxu0 0
        %1222 = vmatprep.subr.bf16.mxu0 0
        %1223 = vmatpush2.bf16.msra.mxu0 0
        %1224 = vmatprep.subr.bf16.mxu0 0
        %1225 = vmatpush2.bf16.msra.mxu0 0
        %1226 = vmatprep.subr.bf16.mxu0 0
        %1227 = vmatpush2.bf16.msra.mxu0 0
        %1228 = vmatprep.subr.bf16.mxu0 0
        %1229 = vmatpush2.bf16.msra.mxu0 0
        %1230 = vmatprep.subr.bf16.mxu0 0
        %1231 = vmatpush2.bf16.msra.mxu0 0
        %1232 = vmatprep.mubr.bf16.mxu0 0
        %1233 = vmatmul.mubr.bf16.gmra.mxu0 %v1198
        %v1234 = vpop.f32.mrf.mxu0
        %v1235 = vadd.f32 %v1182, %v1234
        %v1236 = vpop.f32.mrf.mxu0
        %v1237 = vpop.f32.mrf.mxu0
        %v1238 = vpop.f32.mrf.mxu0
        %1239 = vdwg.mxu0
        %v1240 = vpack.c.bf16 %v1235, %v1235
        %v1241 = vld [vmem:[#allocation7] sm:$0xf]
        %v1242 = vld [vmem:[#allocation7 + $0x4] sm:$0xf]
        %v1243 = vld [vmem:[#allocation7 + $0x8] sm:$0xf]
        %v1244 = vld [vmem:[#allocation7 + $0xc] sm:$0xf]
        %v1245 = vld [vmem:[#allocation8] sm:$0x1]
        %v1247 = vlaneseq
        %v1248 = vshrl.u32 %v1247, 7
        %v1249 = vsub.s32 0, %v1248
        %v1250 = vrot.slane %v1245, %v1249
        %v1256 = vunpack.c.l.b16 %v1241
        %v1257 = vunpack.c.l.b16 %v1242
        %v1258 = vunpack.c.l.b16 %v1243
        %v1259 = vunpack.c.l.b16 %v1244
        %v1260 = vpack.c.b16 %v1257, %v1256
        %v1261 = vpack.c.b16 %v1259, %v1258
        %1264 = vmatprep.subr.bf16.mxu0 0
        %1265 = vmatpush1.bf16.msra.mxu0 0
        %1266 = vmatprep.subr.bf16.mxu0 0
        %1267 = vmatpush1.bf16.msra.mxu0 0
        %1268 = vmatprep.subr.bf16.mxu0 0
        %1269 = vmatpush1.bf16.msra.mxu0 0
        %1270 = vmatprep.subr.bf16.mxu0 0
        %1271 = vmatpush1.bf16.msra.mxu0 0
        %1272 = vmatprep.subr.bf16.mxu0 0
        %1273 = vmatpush1.bf16.msra.mxu0 0
        %1274 = vmatprep.subr.bf16.mxu0 0
        %1275 = vmatpush1.bf16.msra.mxu0 0
        %1276 = vmatprep.subr.bf16.mxu0 0
        %1277 = vmatpush1.bf16.msra.mxu0 %v1261
        %1278 = vmatprep.subr.bf16.mxu0 0
        %1279 = vmatpush1.bf16.msra.mxu0 %v1260
        %1280 = vmatprep.subr.bf16.mxu0 0
        %1281 = vmatpush2.bf16.msra.mxu0 0
        %1282 = vmatprep.subr.bf16.mxu0 0
        %1283 = vmatpush2.bf16.msra.mxu0 0
        %1284 = vmatprep.subr.bf16.mxu0 0
        %1285 = vmatpush2.bf16.msra.mxu0 0
        %1286 = vmatprep.subr.bf16.mxu0 0
        %1287 = vmatpush2.bf16.msra.mxu0 0
        %1288 = vmatprep.subr.bf16.mxu0 0
        %1289 = vmatpush2.bf16.msra.mxu0 0
        %1290 = vmatprep.subr.bf16.mxu0 0
        %1291 = vmatpush2.bf16.msra.mxu0 0
        %1292 = vmatprep.subr.bf16.mxu0 0
        %1293 = vmatpush2.bf16.msra.mxu0 0
        %1294 = vmatprep.subr.bf16.mxu0 0
        %1295 = vmatpush2.bf16.msra.mxu0 0
        %1296 = vmatprep.mubr.bf16.mxu0 0
        %1297 = vmatmul.mubr.bf16.gmra.mxu0 %v1198
        %v1298 = vpop.f32.mrf.mxu0
        %v1299 = vadd.f32 %v1250, %v1298
        %v1300 = vpop.f32.mrf.mxu0
        %v1301 = vpop.f32.mrf.mxu0
        %v1302 = vpop.f32.mrf.mxu0
        %1303 = vdwg.mxu0
        %v1304 = vpack.c.bf16 %v1299, %v1299
        %v1305 = vld [vmem:[#allocation10] sm:$0xf]
        %v1306 = vld [vmem:[#allocation10 + $0x4] sm:$0xf]
        %v1307 = vld [vmem:[#allocation10 + $0x8] sm:$0xf]
        %v1308 = vld [vmem:[#allocation10 + $0xc] sm:$0xf]
        %v1309 = vld [vmem:[#allocation11] sm:$0x1]
        %v1311 = vlaneseq
        %v1312 = vshrl.u32 %v1311, 7
        %v1313 = vsub.s32 0, %v1312
        %v1314 = vrot.slane %v1309, %v1313
        %v1320 = vunpack.c.l.b16 %v1305
        %v1321 = vunpack.c.l.b16 %v1306
        %v1322 = vunpack.c.l.b16 %v1307
        %v1323 = vunpack.c.l.b16 %v1308
        %v1324 = vpack.c.b16 %v1321, %v1320
        %v1325 = vpack.c.b16 %v1323, %v1322
        %1328 = vmatprep.subr.bf16.mxu0 0
        %1329 = vmatpush1.bf16.msra.mxu0 0
        %1330 = vmatprep.subr.bf16.mxu0 0
        %1331 = vmatpush1.bf16.msra.mxu0 0
        %1332 = vmatprep.subr.bf16.mxu0 0
        %1333 = vmatpush1.bf16.msra.mxu0 0
        %1334 = vmatprep.subr.bf16.mxu0 0
        %1335 = vmatpush1.bf16.msra.mxu0 0
        %1336 = vmatprep.subr.bf16.mxu0 0
        %1337 = vmatpush1.bf16.msra.mxu0 0
        %1338 = vmatprep.subr.bf16.mxu0 0
        %1339 = vmatpush1.bf16.msra.mxu0 0
        %1340 = vmatprep.subr.bf16.mxu0 0
        %1341 = vmatpush1.bf16.msra.mxu0 %v1325
        %1342 = vmatprep.subr.bf16.mxu0 0
        %1343 = vmatpush1.bf16.msra.mxu0 %v1324
        %1344 = vmatprep.subr.bf16.mxu0 0
        %1345 = vmatpush2.bf16.msra.mxu0 0
        %1346 = vmatprep.subr.bf16.mxu0 0
        %1347 = vmatpush2.bf16.msra.mxu0 0
        %1348 = vmatprep.subr.bf16.mxu0 0
        %1349 = vmatpush2.bf16.msra.mxu0 0
        %1350 = vmatprep.subr.bf16.mxu0 0
        %1351 = vmatpush2.bf16.msra.mxu0 0
        %1352 = vmatprep.subr.bf16.mxu0 0
        %1353 = vmatpush2.bf16.msra.mxu0 0
        %1354 = vmatprep.subr.bf16.mxu0 0
        %1355 = vmatpush2.bf16.msra.mxu0 0
        %1356 = vmatprep.subr.bf16.mxu0 0
        %1357 = vmatpush2.bf16.msra.mxu0 0
        %1358 = vmatprep.subr.bf16.mxu0 0
        %1359 = vmatpush2.bf16.msra.mxu0 0
        %1360 = vmatprep.mubr.bf16.mxu0 0
        %1361 = vmatmul.mubr.bf16.gmra.mxu0 %v1198
        %v1362 = vpop.f32.mrf.mxu0
        %v1363 = vadd.f32 %v1314, %v1362
        %v1364 = vpop.f32.mrf.mxu0
        %v1365 = vpop.f32.mrf.mxu0
        %v1366 = vpop.f32.mrf.mxu0
        %1367 = vdwg.mxu0
        %v1368 = vpack.c.bf16 %v1363, %v1363
        %v1370 = vsel %vm1196, %v1240, 0
        %v1373 = vsel %vm1196, %v1304, 0
        %1375 = vmatprep.subr.bf16.mxu0 0
        %1376 = vmatpush1.bf16.xpose.msra.mxu0 0
        %1377 = vmatprep.subr.bf16.mxu0 0
        %1378 = vmatpush1.bf16.xpose.msra.mxu0 0
        %1379 = vmatprep.subr.bf16.mxu0 0
        %1380 = vmatpush1.bf16.xpose.msra.mxu0 0
        %1381 = vmatprep.subr.bf16.mxu0 0
        %1382 = vmatpush1.bf16.xpose.msra.mxu0 0
        %1383 = vmatprep.subr.bf16.mxu0 0
        %1384 = vmatpush1.bf16.xpose.msra.mxu0 0
        %1385 = vmatprep.subr.bf16.mxu0 0
        %1386 = vmatpush1.bf16.xpose.msra.mxu0 0
        %1387 = vmatprep.subr.bf16.mxu0 0
        %1388 = vmatpush1.bf16.xpose.msra.mxu0 0
        %1389 = vmatprep.subr.bf16.mxu0 0
        %1390 = vmatpush1.bf16.xpose.msra.mxu0 %v1373
        %1391 = vmatprep.subr.bf16.mxu0 0
        %1392 = vmatpush2.bf16.xpose.msra.mxu0 0
        %1393 = vmatprep.subr.bf16.mxu0 0
        %1394 = vmatpush2.bf16.xpose.msra.mxu0 0
        %1395 = vmatprep.subr.bf16.mxu0 0
        %1396 = vmatpush2.bf16.xpose.msra.mxu0 0
        %1397 = vmatprep.subr.bf16.mxu0 0
        %1398 = vmatpush2.bf16.xpose.msra.mxu0 0
        %1399 = vmatprep.subr.bf16.mxu0 0
        %1400 = vmatpush2.bf16.xpose.msra.mxu0 0
        %1401 = vmatprep.subr.bf16.mxu0 0
        %1402 = vmatpush2.bf16.xpose.msra.mxu0 0
        %1403 = vmatprep.subr.bf16.mxu0 0
        %1404 = vmatpush2.bf16.xpose.msra.mxu0 0
        %1405 = vmatprep.subr.bf16.mxu0 0
        %1406 = vmatpush2.bf16.xpose.msra.mxu0 0
        %1407 = vmatprep.mubr.bf16.mxu0 0
        %1408 = vmatmul.mubr.bf16.gmra.mxu0 %v1370
        %v1409 = vpop.f32.mrf.mxu0
        %v1410 = vadd.f32 0.0, %v1409
        %v1411 = vpop.f32.mrf.mxu0
        %v1412 = vpop.f32.mrf.mxu0
        %v1413 = vpop.f32.mrf.mxu0
        %1414 = vdwg.mxu0
        %v1415 = vld [vmem:[%s1011] sm:$0x3]
        %vm1416 = vnez %v1415
        %v1417 = vsel %vm1416, 16843009, 0
        %v1418 = vunpack.c.0.s8 %v1417
        %vm1419 = vcmp.ne.s32.totalorder %v1418, 0
        %v1420 = vsel %vm1419, -1e+09, %v1410
        %vm1421 = vcmask 64512
        %v1422 = vsel %vm1421, %v1420, -inf
        %1423 = vmax.xlane.f32.xlu0 %v1422
        %v1424 = vpop.xlane.xlu0 %1423
        %v1425 = vsub.f32 %v1420, %v1424
        %v1426 = vmul.f32 %v1425, 1.442695
        %v1427 = vpow.pop %v1426
        %v1428 = vsel %vm1421, %v1427, 0.0
        %1429 = vadd.xlane.f32.xlu0 %v1428
        %v1430 = vpop.xlane.xlu0 %1429
        %v1431 = vrcp.pop %v1430
        %v1432 = vmul.f32 %v1427, %v1431
        %v1433 = vpack.c.bf16 %v1432, %v1432
        %v1435 = vsel %vm1421, %v1433, 0
        %vm1437 = vcmask 1043456
        %v1439 = vsel %vm1437, %v1368, 0
        %1441 = vmatprep.subr.bf16.mxu0 0
        %1442 = vmatpush1.bf16.msra.mxu0 0
        %1443 = vmatprep.subr.bf16.mxu0 0
        %1444 = vmatpush1.bf16.msra.mxu0 0
        %1445 = vmatprep.subr.bf16.mxu0 0
        %1446 = vmatpush1.bf16.msra.mxu0 0
        %1447 = vmatprep.subr.bf16.mxu0 0
        %1448 = vmatpush1.bf16.msra.mxu0 0
        %1449 = vmatprep.subr.bf16.mxu0 0
        %1450 = vmatpush1.bf16.msra.mxu0 0
        %1451 = vmatprep.subr.bf16.mxu0 0
        %1452 = vmatpush1.bf16.msra.mxu0 0
        %1453 = vmatprep.subr.bf16.mxu0 0
        %1454 = vmatpush1.bf16.msra.mxu0 0
        %1455 = vmatprep.subr.bf16.mxu0 0
        %1456 = vmatpush1.bf16.msra.mxu0 %v1439
        %1457 = vmatprep.subr.bf16.mxu0 0
        %1458 = vmatpush2.bf16.msra.mxu0 0
        %1459 = vmatprep.subr.bf16.mxu0 0
        %1460 = vmatpush2.bf16.msra.mxu0 0
        %1461 = vmatprep.subr.bf16.mxu0 0
        %1462 = vmatpush2.bf16.msra.mxu0 0
        %1463 = vmatprep.subr.bf16.mxu0 0
        %1464 = vmatpush2.bf16.msra.mxu0 0
        %1465 = vmatprep.subr.bf16.mxu0 0
        %1466 = vmatpush2.bf16.msra.mxu0 0
        %1467 = vmatprep.subr.bf16.mxu0 0
        %1468 = vmatpush2.bf16.msra.mxu0 0
        %1469 = vmatprep.subr.bf16.mxu0 0
        %1470 = vmatpush2.bf16.msra.mxu0 0
        %1471 = vmatprep.subr.bf16.mxu0 0
        %1472 = vmatpush2.bf16.msra.mxu0 0
        %1473 = vmatprep.mubr.bf16.mxu0 0
        %1474 = vmatmul.mubr.bf16.gmra.mxu0 %v1435
        %v1475 = vpop.f32.mrf.mxu0
        %v1476 = vadd.f32 0.0, %v1475
        %v1477 = vpop.f32.mrf.mxu0
        %v1478 = vpop.f32.mrf.mxu0
        %v1479 = vpop.f32.mrf.mxu0
        %1480 = vdwg.mxu0
        %v1481 = vpack.c.bf16 %v1476, %v1476
        %v1482 = vld [vmem:[%s19] sm:$0xf]
        %v1483 = vld [vmem:[%s19 + $0x4] sm:$0xf]
        %v1484 = vld [vmem:[%s19 + $0x8] sm:$0xf]
        %v1485 = vld [vmem:[%s19 + $0xc] sm:$0xf]
        %v1486 = vld [vmem:[#allocation13] sm:$0x1]
        %v1488 = vlaneseq
        %v1489 = vshrl.u32 %v1488, 7
        %v1490 = vsub.s32 0, %v1489
        %v1491 = vrot.slane %v1486, %v1490
        %v1497 = vunpack.c.l.b16 %v1482
        %v1498 = vunpack.c.l.b16 %v1483
        %v1499 = vunpack.c.l.b16 %v1484
        %v1500 = vunpack.c.l.b16 %v1485
        %v1501 = vpack.c.b16 %v1498, %v1497
        %v1502 = vpack.c.b16 %v1500, %v1499
        %v1506 = vsel %vm1196, %v1481, 0
        %1508 = vmatprep.subr.bf16.mxu0 0
        %1509 = vmatpush1.bf16.msra.mxu0 0
        %1510 = vmatprep.subr.bf16.mxu0 0
        %1511 = vmatpush1.bf16.msra.mxu0 0
        %1512 = vmatprep.subr.bf16.mxu0 0
        %1513 = vmatpush1.bf16.msra.mxu0 0
        %1514 = vmatprep.subr.bf16.mxu0 0
        %1515 = vmatpush1.bf16.msra.mxu0 0
        %1516 = vmatprep.subr.bf16.mxu0 0
        %1517 = vmatpush1.bf16.msra.mxu0 0
        %1518 = vmatprep.subr.bf16.mxu0 0
        %1519 = vmatpush1.bf16.msra.mxu0 0
        %1520 = vmatprep.subr.bf16.mxu0 0
        %1521 = vmatpush1.bf16.msra.mxu0 %v1502
        %1522 = vmatprep.subr.bf16.mxu0 0
        %1523 = vmatpush1.bf16.msra.mxu0 %v1501
        %1524 = vmatprep.subr.bf16.mxu0 0
        %1525 = vmatpush2.bf16.msra.mxu0 0
        %1526 = vmatprep.subr.bf16.mxu0 0
        %1527 = vmatpush2.bf16.msra.mxu0 0
        %1528 = vmatprep.subr.bf16.mxu0 0
        %1529 = vmatpush2.bf16.msra.mxu0 0
        %1530 = vmatprep.subr.bf16.mxu0 0
        %1531 = vmatpush2.bf16.msra.mxu0 0
        %1532 = vmatprep.subr.bf16.mxu0 0
        %1533 = vmatpush2.bf16.msra.mxu0 0
        %1534 = vmatprep.subr.bf16.mxu0 0
        %1535 = vmatpush2.bf16.msra.mxu0 0
        %1536 = vmatprep.subr.bf16.mxu0 0
        %1537 = vmatpush2.bf16.msra.mxu0 0
        %1538 = vmatprep.subr.bf16.mxu0 0
        %1539 = vmatpush2.bf16.msra.mxu0 0
        %1540 = vmatprep.mubr.bf16.mxu0 0
        %1541 = vmatmul.mubr.bf16.gmra.mxu0 %v1506
        %v1542 = vpop.f32.mrf.mxu0
        %v1543 = vadd.f32 %v1491, %v1542
        %v1544 = vpop.f32.mrf.mxu0
        %v1545 = vpop.f32.mrf.mxu0
        %v1546 = vpop.f32.mrf.mxu0
        %1547 = vdwg.mxu0
        %v1548 = vadd.f32 %v1543, %v1169
        %v1549 = vsel %vm1196, %v1548, 0.0
        %1550 = vadd.xlane.f32.xlu0 %v1549
        %v1551 = vpop.xlane.xlu0 %1550
        %v1552 = vrcp.pop 32.0
        %v1553 = vmul.f32 %v1551, %v1552
        %v1554 = vsub.f32 %v1548, %v1553
        %v1555 = vmul.f32 %v1554, %v1554
        %v1556 = vsel %vm1196, %v1555, 0.0
        %1557 = vadd.xlane.f32.xlu0 %v1556
        %v1558 = vpop.xlane.xlu0 %1557
        %v1559 = vmul.f32 %v1558, %v1552
        %v1560 = vadd.f32 %v1559, 1e-05
        %v1561 = vrsqrt.pop %v1560
        %v1562 = vmul.f32 %v1554, %v1561
        %v1563 = vld [vmem:[#allocation14] sm:$0x1]
        %v1565 = vlaneseq
        %v1566 = vshrl.u32 %v1565, 7
        %v1567 = vsub.s32 0, %v1566
        %v1568 = vrot.slane %v1563, %v1567
        %v1570 = vmul.f32 %v1562, %v1568
        %v1571 = vld [vmem:[#allocation16] sm:$0x1]
        %v1573 = vlaneseq
        %v1574 = vshrl.u32 %v1573, 7
        %v1575 = vsub.s32 0, %v1574
        %v1576 = vrot.slane %v1571, %v1575
        %v1578 = vadd.f32 %v1570, %v1576
        %v1579 = vpack.c.bf16 %v1578, %v1578
        %v1580 = vld [vmem:[#allocation17] sm:$0xf]
        %v1581 = vld [vmem:[#allocation17 + $0x4] sm:$0xf]
        %v1582 = vld [vmem:[#allocation17 + $0x8] sm:$0xf]
        %v1583 = vld [vmem:[#allocation17 + $0xc] sm:$0xf]
        %v1584 = vld [vmem:[#allocation19] sm:$0x1]
        %v1586 = vlaneseq
        %v1587 = vshrl.u32 %v1586, 7
        %v1588 = vsub.s32 0, %v1587
        %v1589 = vrot.slane %v1584, %v1588
        %v1595 = vunpack.c.l.b16 %v1580
        %v1596 = vunpack.c.l.b16 %v1581
        %v1597 = vunpack.c.l.b16 %v1582
        %v1598 = vunpack.c.l.b16 %v1583
        %v1599 = vpack.c.b16 %v1596, %v1595
        %v1600 = vpack.c.b16 %v1598, %v1597
        %v1604 = vsel %vm1196, %v1579, 0
        %1606 = vmatprep.subr.bf16.mxu0 0
        %1607 = vmatpush1.bf16.msra.mxu0 0
        %1608 = vmatprep.subr.bf16.mxu0 0
        %1609 = vmatpush1.bf16.msra.mxu0 0
        %1610 = vmatprep.subr.bf16.mxu0 0
        %1611 = vmatpush1.bf16.msra.mxu0 0
        %1612 = vmatprep.subr.bf16.mxu0 0
        %1613 = vmatpush1.bf16.msra.mxu0 0
        %1614 = vmatprep.subr.bf16.mxu0 0
        %1615 = vmatpush1.bf16.msra.mxu0 0
        %1616 = vmatprep.subr.bf16.mxu0 0
        %1617 = vmatpush1.bf16.msra.mxu0 0
        %1618 = vmatprep.subr.bf16.mxu0 0
        %1619 = vmatpush1.bf16.msra.mxu0 %v1600
        %1620 = vmatprep.subr.bf16.mxu0 0
        %1621 = vmatpush1.bf16.msra.mxu0 %v1599
        %1622 = vmatprep.subr.bf16.mxu0 0
        %1623 = vmatpush2.bf16.msra.mxu0 0
        %1624 = vmatprep.subr.bf16.mxu0 0
        %1625 = vmatpush2.bf16.msra.mxu0 0
        %1626 = vmatprep.subr.bf16.mxu0 0
        %1627 = vmatpush2.bf16.msra.mxu0 0
        %1628 = vmatprep.subr.bf16.mxu0 0
        %1629 = vmatpush2.bf16.msra.mxu0 0
        %1630 = vmatprep.subr.bf16.mxu0 0
        %1631 = vmatpush2.bf16.msra.mxu0 0
        %1632 = vmatprep.subr.bf16.mxu0 0
        %1633 = vmatpush2.bf16.msra.mxu0 0
        %1634 = vmatprep.subr.bf16.mxu0 0
        %1635 = vmatpush2.bf16.msra.mxu0 0
        %1636 = vmatprep.subr.bf16.mxu0 0
        %1637 = vmatpush2.bf16.msra.mxu0 0
        %1638 = vmatprep.mubr.bf16.mxu0 0
        %1639 = vmatmul.mubr.bf16.gmra.mxu0 %v1604
        %v1640 = vpop.f32.mrf.mxu0
        %v1641 = vadd.f32 %v1589, %v1640
        %v1642 = vpop.f32.mrf.mxu0
        %v1643 = vpop.f32.mrf.mxu0
        %v1644 = vpop.f32.mrf.mxu0
        %1645 = vdwg.mxu0
        %v1646 = vpack.c.bf16 %v1641, %v1641
        %v1647 = vld [vmem:[#allocation20] sm:$0xf]
        %v1648 = vld [vmem:[#allocation20 + $0x4] sm:$0xf]
        %v1649 = vld [vmem:[#allocation20 + $0x8] sm:$0xf]
        %v1650 = vld [vmem:[#allocation20 + $0xc] sm:$0xf]
        %v1651 = vld [vmem:[#allocation22] sm:$0x1]
        %v1653 = vlaneseq
        %v1654 = vshrl.u32 %v1653, 7
        %v1655 = vsub.s32 0, %v1654
        %v1656 = vrot.slane %v1651, %v1655
        %v1662 = vunpack.c.l.b16 %v1647
        %v1663 = vunpack.c.l.b16 %v1648
        %v1664 = vunpack.c.l.b16 %v1649
        %v1665 = vunpack.c.l.b16 %v1650
        %v1666 = vpack.c.b16 %v1663, %v1662
        %v1667 = vpack.c.b16 %v1665, %v1664
        %v1671 = vsel %vm1196, %v1172, 0
        %1673 = vmatprep.subr.bf16.mxu0 0
        %1674 = vmatpush1.bf16.msra.mxu0 0
        %1675 = vmatprep.subr.bf16.mxu0 0
        %1676 = vmatpush1.bf16.msra.mxu0 0
        %1677 = vmatprep.subr.bf16.mxu0 0
        %1678 = vmatpush1.bf16.msra.mxu0 0
        %1679 = vmatprep.subr.bf16.mxu0 0
        %1680 = vmatpush1.bf16.msra.mxu0 0
        %1681 = vmatprep.subr.bf16.mxu0 0
        %1682 = vmatpush1.bf16.msra.mxu0 0
        %1683 = vmatprep.subr.bf16.mxu0 0
        %1684 = vmatpush1.bf16.msra.mxu0 0
        %1685 = vmatprep.subr.bf16.mxu0 0
        %1686 = vmatpush1.bf16.msra.mxu0 %v1667
        %1687 = vmatprep.subr.bf16.mxu0 0
        %1688 = vmatpush1.bf16.msra.mxu0 %v1666
        %1689 = vmatprep.subr.bf16.mxu0 0
        %1690 = vmatpush2.bf16.msra.mxu0 0
        %1691 = vmatprep.subr.bf16.mxu0 0
        %1692 = vmatpush2.bf16.msra.mxu0 0
        %1693 = vmatprep.subr.bf16.mxu0 0
        %1694 = vmatpush2.bf16.msra.mxu0 0
        %1695 = vmatprep.subr.bf16.mxu0 0
        %1696 = vmatpush2.bf16.msra.mxu0 0
        %1697 = vmatprep.subr.bf16.mxu0 0
        %1698 = vmatpush2.bf16.msra.mxu0 0
        %1699 = vmatprep.subr.bf16.mxu0 0
        %1700 = vmatpush2.bf16.msra.mxu0 0
        %1701 = vmatprep.subr.bf16.mxu0 0
        %1702 = vmatpush2.bf16.msra.mxu0 0
        %1703 = vmatprep.subr.bf16.mxu0 0
        %1704 = vmatpush2.bf16.msra.mxu0 0
        %1705 = vmatprep.mubr.bf16.mxu0 0
        %1706 = vmatmul.mubr.bf16.gmra.mxu0 %v1671
        %v1707 = vpop.f32.mrf.mxu0
        %v1708 = vadd.f32 %v1656, %v1707
        %v1709 = vpop.f32.mrf.mxu0
        %v1710 = vpop.f32.mrf.mxu0
        %v1711 = vpop.f32.mrf.mxu0
        %1712 = vdwg.mxu0
        %v1713 = vpack.c.bf16 %v1708, %v1708
        %v1714 = vld [vmem:[#allocation23] sm:$0xf]
        %v1715 = vld [vmem:[#allocation23 + $0x4] sm:$0xf]
        %v1716 = vld [vmem:[#allocation23 + $0x8] sm:$0xf]
        %v1717 = vld [vmem:[#allocation23 + $0xc] sm:$0xf]
        %v1718 = vld [vmem:[#allocation25] sm:$0x1]
        %v1720 = vlaneseq
        %v1721 = vshrl.u32 %v1720, 7
        %v1722 = vsub.s32 0, %v1721
        %v1723 = vrot.slane %v1718, %v1722
        %v1729 = vunpack.c.l.b16 %v1714
        %v1730 = vunpack.c.l.b16 %v1715
        %v1731 = vunpack.c.l.b16 %v1716
        %v1732 = vunpack.c.l.b16 %v1717
        %v1733 = vpack.c.b16 %v1730, %v1729
        %v1734 = vpack.c.b16 %v1732, %v1731
        %1737 = vmatprep.subr.bf16.mxu0 0
        %1738 = vmatpush1.bf16.msra.mxu0 0
        %1739 = vmatprep.subr.bf16.mxu0 0
        %1740 = vmatpush1.bf16.msra.mxu0 0
        %1741 = vmatprep.subr.bf16.mxu0 0
        %1742 = vmatpush1.bf16.msra.mxu0 0
        %1743 = vmatprep.subr.bf16.mxu0 0
        %1744 = vmatpush1.bf16.msra.mxu0 0
        %1745 = vmatprep.subr.bf16.mxu0 0
        %1746 = vmatpush1.bf16.msra.mxu0 0
        %1747 = vmatprep.subr.bf16.mxu0 0
        %1748 = vmatpush1.bf16.msra.mxu0 0
        %1749 = vmatprep.subr.bf16.mxu0 0
        %1750 = vmatpush1.bf16.msra.mxu0 %v1734
        %1751 = vmatprep.subr.bf16.mxu0 0
        %1752 = vmatpush1.bf16.msra.mxu0 %v1733
        %1753 = vmatprep.subr.bf16.mxu0 0
        %1754 = vmatpush2.bf16.msra.mxu0 0
        %1755 = vmatprep.subr.bf16.mxu0 0
        %1756 = vmatpush2.bf16.msra.mxu0 0
        %1757 = vmatprep.subr.bf16.mxu0 0
        %1758 = vmatpush2.bf16.msra.mxu0 0
        %1759 = vmatprep.subr.bf16.mxu0 0
        %1760 = vmatpush2.bf16.msra.mxu0 0
        %1761 = vmatprep.subr.bf16.mxu0 0
        %1762 = vmatpush2.bf16.msra.mxu0 0
        %1763 = vmatprep.subr.bf16.mxu0 0
        %1764 = vmatpush2.bf16.msra.mxu0 0
        %1765 = vmatprep.subr.bf16.mxu0 0
        %1766 = vmatpush2.bf16.msra.mxu0 0
        %1767 = vmatprep.subr.bf16.mxu0 0
        %1768 = vmatpush2.bf16.msra.mxu0 0
        %1769 = vmatprep.mubr.bf16.mxu0 0
        %1770 = vmatmul.mubr.bf16.gmra.mxu0 %v1671
        %v1771 = vpop.f32.mrf.mxu0
        %v1772 = vadd.f32 %v1723, %v1771
        %v1773 = vpop.f32.mrf.mxu0
        %v1774 = vpop.f32.mrf.mxu0
        %v1775 = vpop.f32.mrf.mxu0
        %1776 = vdwg.mxu0
        %v1777 = vpack.c.bf16 %v1772, %v1772
        %v1779 = vsel %vm1196, %v1646, 0
        %v1782 = vsel %vm1196, %v1713, 0
        %1784 = vmatprep.subr.bf16.mxu0 0
        %1785 = vmatpush1.bf16.xpose.msra.mxu0 0
        %1786 = vmatprep.subr.bf16.mxu0 0
        %1787 = vmatpush1.bf16.xpose.msra.mxu0 0
        %1788 = vmatprep.subr.bf16.mxu0 0
        %1789 = vmatpush1.bf16.xpose.msra.mxu0 0
        %1790 = vmatprep.subr.bf16.mxu0 0
        %1791 = vmatpush1.bf16.xpose.msra.mxu0 0
        %1792 = vmatprep.subr.bf16.mxu0 0
        %1793 = vmatpush1.bf16.xpose.msra.mxu0 0
        %1794 = vmatprep.subr.bf16.mxu0 0
        %1795 = vmatpush1.bf16.xpose.msra.mxu0 0
        %1796 = vmatprep.subr.bf16.mxu0 0
        %1797 = vmatpush1.bf16.xpose.msra.mxu0 0
        %1798 = vmatprep.subr.bf16.mxu0 0
        %1799 = vmatpush1.bf16.xpose.msra.mxu0 %v1782
        %1800 = vmatprep.subr.bf16.mxu0 0
        %1801 = vmatpush2.bf16.xpose.msra.mxu0 0
        %1802 = vmatprep.subr.bf16.mxu0 0
        %1803 = vmatpush2.bf16.xpose.msra.mxu0 0
        %1804 = vmatprep.subr.bf16.mxu0 0
        %1805 = vmatpush2.bf16.xpose.msra.mxu0 0
        %1806 = vmatprep.subr.bf16.mxu0 0
        %1807 = vmatpush2.bf16.xpose.msra.mxu0 0
        %1808 = vmatprep.subr.bf16.mxu0 0
        %1809 = vmatpush2.bf16.xpose.msra.mxu0 0
        %1810 = vmatprep.subr.bf16.mxu0 0
        %1811 = vmatpush2.bf16.xpose.msra.mxu0 0
        %1812 = vmatprep.subr.bf16.mxu0 0
        %1813 = vmatpush2.bf16.xpose.msra.mxu0 0
        %1814 = vmatprep.subr.bf16.mxu0 0
        %1815 = vmatpush2.bf16.xpose.msra.mxu0 0
        %1816 = vmatprep.mubr.bf16.mxu0 0
        %1817 = vmatmul.mubr.bf16.gmra.mxu0 %v1779
        %v1818 = vpop.f32.mrf.mxu0
        %v1819 = vadd.f32 0.0, %v1818
        %v1820 = vpop.f32.mrf.mxu0
        %v1821 = vpop.f32.mrf.mxu0
        %v1822 = vpop.f32.mrf.mxu0
        %1823 = vdwg.mxu0
        %v1824 = vsel %vm1421, %v1819, -inf
        %1825 = vmax.xlane.f32.xlu0 %v1824
        %v1826 = vpop.xlane.xlu0 %1825
        %v1827 = vsub.f32 %v1819, %v1826
        %v1828 = vmul.f32 %v1827, 1.442695
        %v1829 = vpow.pop %v1828
        %v1830 = vsel %vm1421, %v1829, 0.0
        %1831 = vadd.xlane.f32.xlu0 %v1830
        %v1832 = vpop.xlane.xlu0 %1831
        %v1833 = vrcp.pop %v1832
        %v1834 = vmul.f32 %v1829, %v1833
        %v1835 = vpack.c.bf16 %v1834, %v1834
        %v1837 = vsel %vm1421, %v1835, 0
        %v1840 = vsel %vm1437, %v1777, 0
        %1842 = vmatprep.subr.bf16.mxu0 0
        %1843 = vmatpush1.bf16.msra.mxu0 0
        %1844 = vmatprep.subr.bf16.mxu0 0
        %1845 = vmatpush1.bf16.msra.mxu0 0
        %1846 = vmatprep.subr.bf16.mxu0 0
        %1847 = vmatpush1.bf16.msra.mxu0 0
        %1848 = vmatprep.subr.bf16.mxu0 0
        %1849 = vmatpush1.bf16.msra.mxu0 0
        %1850 = vmatprep.subr.bf16.mxu0 0
        %1851 = vmatpush1.bf16.msra.mxu0 0
        %1852 = vmatprep.subr.bf16.mxu0 0
        %1853 = vmatpush1.bf16.msra.mxu0 0
        %1854 = vmatprep.subr.bf16.mxu0 0
        %1855 = vmatpush1.bf16.msra.mxu0 0
        %1856 = vmatprep.subr.bf16.mxu0 0
        %1857 = vmatpush1.bf16.msra.mxu0 %v1840
        %1858 = vmatprep.subr.bf16.mxu0 0
        %1859 = vmatpush2.bf16.msra.mxu0 0
        %1860 = vmatprep.subr.bf16.mxu0 0
        %1861 = vmatpush2.bf16.msra.mxu0 0
        %1862 = vmatprep.subr.bf16.mxu0 0
        %1863 = vmatpush2.bf16.msra.mxu0 0
        %1864 = vmatprep.subr.bf16.mxu0 0
        %1865 = vmatpush2.bf16.msra.mxu0 0
        %1866 = vmatprep.subr.bf16.mxu0 0
        %1867 = vmatpush2.bf16.msra.mxu0 0
        %1868 = vmatprep.subr.bf16.mxu0 0
        %1869 = vmatpush2.bf16.msra.mxu0 0
        %1870 = vmatprep.subr.bf16.mxu0 0
        %1871 = vmatpush2.bf16.msra.mxu0 0
        %1872 = vmatprep.subr.bf16.mxu0 0
        %1873 = vmatpush2.bf16.msra.mxu0 0
        %1874 = vmatprep.mubr.bf16.mxu0 0
        %1875 = vmatmul.mubr.bf16.gmra.mxu0 %v1837
        %v1876 = vpop.f32.mrf.mxu0
        %v1877 = vadd.f32 0.0, %v1876
        %v1878 = vpop.f32.mrf.mxu0
        %v1879 = vpop.f32.mrf.mxu0
        %v1880 = vpop.f32.mrf.mxu0
        %1881 = vdwg.mxu0
        %v1882 = vpack.c.bf16 %v1877, %v1877
        %v1883 = vld [vmem:[#allocation26] sm:$0xf]
        %v1884 = vld [vmem:[#allocation26 + $0x4] sm:$0xf]
        %v1885 = vld [vmem:[#allocation26 + $0x8] sm:$0xf]
        %v1886 = vld [vmem:[#allocation26 + $0xc] sm:$0xf]
        %v1887 = vld [vmem:[%s41] sm:$0x1]
        %v1889 = vlaneseq
        %v1890 = vshrl.u32 %v1889, 7
        %v1891 = vsub.s32 0, %v1890
        %v1892 = vrot.slane %v1887, %v1891
        %v1898 = vunpack.c.l.b16 %v1883
        %v1899 = vunpack.c.l.b16 %v1884
        %v1900 = vunpack.c.l.b16 %v1885
        %v1901 = vunpack.c.l.b16 %v1886
        %v1902 = vpack.c.b16 %v1899, %v1898
        %v1903 = vpack.c.b16 %v1901, %v1900
        %v1907 = vsel %vm1196, %v1882, 0
        %1909 = vmatprep.subr.bf16.mxu0 0
        %1910 = vmatpush1.bf16.msra.mxu0 0
        %1911 = vmatprep.subr.bf16.mxu0 0
        %1912 = vmatpush1.bf16.msra.mxu0 0
        %1913 = vmatprep.subr.bf16.mxu0 0
        %1914 = vmatpush1.bf16.msra.mxu0 0
        %1915 = vmatprep.subr.bf16.mxu0 0
        %1916 = vmatpush1.bf16.msra.mxu0 0
        %1917 = vmatprep.subr.bf16.mxu0 0
        %1918 = vmatpush1.bf16.msra.mxu0 0
        %1919 = vmatprep.subr.bf16.mxu0 0
        %1920 = vmatpush1.bf16.msra.mxu0 0
        %1921 = vmatprep.subr.bf16.mxu0 0
        %1922 = vmatpush1.bf16.msra.mxu0 %v1903
        %1923 = vmatprep.subr.bf16.mxu0 0
        %1924 = vmatpush1.bf16.msra.mxu0 %v1902
        %1925 = vmatprep.subr.bf16.mxu0 0
        %1926 = vmatpush2.bf16.msra.mxu0 0
        %1927 = vmatprep.subr.bf16.mxu0 0
        %1928 = vmatpush2.bf16.msra.mxu0 0
        %1929 = vmatprep.subr.bf16.mxu0 0
        %1930 = vmatpush2.bf16.msra.mxu0 0
        %1931 = vmatprep.subr.bf16.mxu0 0
        %1932 = vmatpush2.bf16.msra.mxu0 0
        %1933 = vmatprep.subr.bf16.mxu0 0
        %1934 = vmatpush2.bf16.msra.mxu0 0
        %1935 = vmatprep.subr.bf16.mxu0 0
        %1936 = vmatpush2.bf16.msra.mxu0 0
        %1937 = vmatprep.subr.bf16.mxu0 0
        %1938 = vmatpush2.bf16.msra.mxu0 0
        %1939 = vmatprep.subr.bf16.mxu0 0
        %1940 = vmatpush2.bf16.msra.mxu0 0
        %1941 = vmatprep.mubr.bf16.mxu0 0
        %1942 = vmatmul.mubr.bf16.gmra.mxu0 %v1907
        %v1943 = vpop.f32.mrf.mxu0
        %v1944 = vadd.f32 %v1892, %v1943
        %v1945 = vpop.f32.mrf.mxu0
        %v1946 = vpop.f32.mrf.mxu0
        %v1947 = vpop.f32.mrf.mxu0
        %1948 = vdwg.mxu0
        %v1949 = vadd.f32 %v1944, %v1578
        %v1950 = vsel %vm1196, %v1949, 0.0
        %1951 = vadd.xlane.f32.xlu0 %v1950
        %v1952 = vpop.xlane.xlu0 %1951
        %v1953 = vmul.f32 %v1952, %v1552
        %v1954 = vsub.f32 %v1949, %v1953
        %v1955 = vmul.f32 %v1954, %v1954
        %v1956 = vsel %vm1196, %v1955, 0.0
        %1957 = vadd.xlane.f32.xlu0 %v1956
        %v1958 = vpop.xlane.xlu0 %1957
        %v1959 = vmul.f32 %v1958, %v1552
        %v1960 = vadd.f32 %v1959, 1e-05
        %v1961 = vrsqrt.pop %v1960
        %v1962 = vmul.f32 %v1954, %v1961
        %v1963 = vld [vmem:[%s43] sm:$0x1]
        %v1965 = vlaneseq
        %v1966 = vshrl.u32 %v1965, 7
        %v1967 = vsub.s32 0, %v1966
        %v1968 = vrot.slane %v1963, %v1967
        %v1970 = vmul.f32 %v1962, %v1968
        %v1971 = vld [vmem:[%s45] sm:$0x1]
        %v1973 = vlaneseq
        %v1974 = vshrl.u32 %v1973, 7
        %v1975 = vsub.s32 0, %v1974
        %v1976 = vrot.slane %v1971, %v1975
        %v1978 = vadd.f32 %v1970, %v1976
        %v1979 = vpack.c.bf16 %v1978, %v1978
        %v1980 = vld [vmem:[#allocation28] sm:$0xf]
        %v1981 = vld [vmem:[#allocation28 + $0x4] sm:$0xf]
        %v1982 = vld [vmem:[#allocation28 + $0x8] sm:$0xf]
        %v1983 = vld [vmem:[#allocation28 + $0xc] sm:$0xf]
        %v1984 = vld [vmem:[%s49] sm:$0x1]
        %v1986 = vlaneseq
        %v1987 = vshrl.u32 %v1986, 7
        %v1988 = vsub.s32 0, %v1987
        %v1989 = vrot.slane %v1984, %v1988
        %v1995 = vunpack.c.l.b16 %v1980
        %v1996 = vunpack.c.l.b16 %v1981
        %v1997 = vunpack.c.l.b16 %v1982
        %v1998 = vunpack.c.l.b16 %v1983
        %v1999 = vpack.c.b16 %v1996, %v1995
        %v2000 = vpack.c.b16 %v1998, %v1997
        %v2004 = vsel %vm1196, %v1979, 0
        %2006 = vmatprep.subr.bf16.mxu0 0
        %2007 = vmatpush1.bf16.msra.mxu0 0
        %2008 = vmatprep.subr.bf16.mxu0 0
        %2009 = vmatpush1.bf16.msra.mxu0 0
        %2010 = vmatprep.subr.bf16.mxu0 0
        %2011 = vmatpush1.bf16.msra.mxu0 0
        %2012 = vmatprep.subr.bf16.mxu0 0
        %2013 = vmatpush1.bf16.msra.mxu0 0
        %2014 = vmatprep.subr.bf16.mxu0 0
        %2015 = vmatpush1.bf16.msra.mxu0 0
        %2016 = vmatprep.subr.bf16.mxu0 0
        %2017 = vmatpush1.bf16.msra.mxu0 0
        %2018 = vmatprep.subr.bf16.mxu0 0
        %2019 = vmatpush1.bf16.msra.mxu0 %v2000
        %2020 = vmatprep.subr.bf16.mxu0 0
        %2021 = vmatpush1.bf16.msra.mxu0 %v1999
        %2022 = vmatprep.subr.bf16.mxu0 0
        %2023 = vmatpush2.bf16.msra.mxu0 0
        %2024 = vmatprep.subr.bf16.mxu0 0
        %2025 = vmatpush2.bf16.msra.mxu0 0
        %2026 = vmatprep.subr.bf16.mxu0 0
        %2027 = vmatpush2.bf16.msra.mxu0 0
        %2028 = vmatprep.subr.bf16.mxu0 0
        %2029 = vmatpush2.bf16.msra.mxu0 0
        %2030 = vmatprep.subr.bf16.mxu0 0
        %2031 = vmatpush2.bf16.msra.mxu0 0
        %2032 = vmatprep.subr.bf16.mxu0 0
        %2033 = vmatpush2.bf16.msra.mxu0 0
        %2034 = vmatprep.subr.bf16.mxu0 0
        %2035 = vmatpush2.bf16.msra.mxu0 0
        %2036 = vmatprep.subr.bf16.mxu0 0
        %2037 = vmatpush2.bf16.msra.mxu0 0
        %2038 = vmatprep.mubr.bf16.mxu0 0
        %2039 = vmatmul.mubr.bf16.gmra.mxu0 %v2004
        %v2040 = vpop.f32.mrf.mxu0
        %v2041 = vadd.f32 %v1989, %v2040
        %v2042 = vpop.f32.mrf.mxu0
        %v2043 = vpop.f32.mrf.mxu0
        %v2044 = vpop.f32.mrf.mxu0
        %2045 = vdwg.mxu0
        %v2046 = vmax.f32 %v2041, 0.0
        %v2047 = vpack.c.bf16 %v2046, %v2046
        %v2048 = vld [vmem:[%s51] sm:$0xf]
        %v2049 = vld [vmem:[%s51 + $0x4] sm:$0xf]
        %v2050 = vld [vmem:[%s51 + $0x8] sm:$0xf]
        %v2051 = vld [vmem:[%s51 + $0xc] sm:$0xf]
        %v2052 = vld [vmem:[%s51 + $0x10] sm:$0xf]
        %v2053 = vld [vmem:[%s51 + $0x14] sm:$0xf]
        %v2054 = vld [vmem:[%s51 + $0x18] sm:$0xf]
        %v2055 = vld [vmem:[%s51 + $0x1c] sm:$0xf]
        %v2056 = vld [vmem:[%s53] sm:$0x1]
        %v2058 = vlaneseq
        %v2059 = vshrl.u32 %v2058, 7
        %v2060 = vsub.s32 0, %v2059
        %v2061 = vrot.slane %v2056, %v2060
        %v2071 = vunpack.c.l.b16 %v2048
        %v2072 = vunpack.c.l.b16 %v2049
        %v2073 = vunpack.c.l.b16 %v2050
        %v2074 = vunpack.c.l.b16 %v2051
        %v2075 = vunpack.c.l.b16 %v2052
        %v2076 = vunpack.c.l.b16 %v2053
        %v2077 = vunpack.c.l.b16 %v2054
        %v2078 = vunpack.c.l.b16 %v2055
        %v2079 = vpack.c.b16 %v2072, %v2071
        %v2080 = vpack.c.b16 %v2074, %v2073
        %v2081 = vpack.c.b16 %v2076, %v2075
        %v2082 = vpack.c.b16 %v2078, %v2077
        %vm2087 = vcmask 523264
        %v2089 = vsel %vm2087, %v2047, 0
        %2091 = vmatprep.subr.bf16.mxu0 0
        %2092 = vmatpush1.bf16.msra.mxu0 0
        %2093 = vmatprep.subr.bf16.mxu0 0
        %2094 = vmatpush1.bf16.msra.mxu0 0
        %2095 = vmatprep.subr.bf16.mxu0 0
        %2096 = vmatpush1.bf16.msra.mxu0 0
        %2097 = vmatprep.subr.bf16.mxu0 0
        %2098 = vmatpush1.bf16.msra.mxu0 0
        %2099 = vmatprep.subr.bf16.mxu0 0
        %2100 = vmatpush1.bf16.msra.mxu0 %v2082
        %2101 = vmatprep.subr.bf16.mxu0 0
        %2102 = vmatpush1.bf16.msra.mxu0 %v2081
        %2103 = vmatprep.subr.bf16.mxu0 0
        %2104 = vmatpush1.bf16.msra.mxu0 %v2080
        %2105 = vmatprep.subr.bf16.mxu0 0
        %2106 = vmatpush1.bf16.msra.mxu0 %v2079
        %2107 = vmatprep.subr.bf16.mxu0 0
        %2108 = vmatpush2.bf16.msra.mxu0 0
        %2109 = vmatprep.subr.bf16.mxu0 0
        %2110 = vmatpush2.bf16.msra.mxu0 0
        %2111 = vmatprep.subr.bf16.mxu0 0
        %2112 = vmatpush2.bf16.msra.mxu0 0
        %2113 = vmatprep.subr.bf16.mxu0 0
        %2114 = vmatpush2.bf16.msra.mxu0 0
        %2115 = vmatprep.subr.bf16.mxu0 0
        %2116 = vmatpush2.bf16.msra.mxu0 0
        %2117 = vmatprep.subr.bf16.mxu0 0
        %2118 = vmatpush2.bf16.msra.mxu0 0
        %2119 = vmatprep.subr.bf16.mxu0 0
        %2120 = vmatpush2.bf16.msra.mxu0 0
        %2121 = vmatprep.subr.bf16.mxu0 0
        %2122 = vmatpush2.bf16.msra.mxu0 0
        %2123 = vmatprep.mubr.bf16.mxu0 0
        %2124 = vmatmul.mubr.bf16.gmra.mxu0 %v2089
        %v2125 = vpop.f32.mrf.mxu0
        %v2126 = vadd.f32 %v2061, %v2125
        %v2127 = vpop.f32.mrf.mxu0
        %v2128 = vpop.f32.mrf.mxu0
        %v2129 = vpop.f32.mrf.mxu0
        %2130 = vdwg.mxu0
        %v2131 = vadd.f32 %v2126, %v1978
        %v2132 = vsel %vm1196, %v2131, 0.0
        %2133 = vadd.xlane.f32.xlu0 %v2132
        %v2134 = vpop.xlane.xlu0 %2133
        %v2135 = vmul.f32 %v2134, %v1552
        %v2136 = vsub.f32 %v2131, %v2135
        %v2137 = vmul.f32 %v2136, %v2136
        %v2138 = vsel %vm1196, %v2137, 0.0
        %2139 = vadd.xlane.f32.xlu0 %v2138
        %v2140 = vpop.xlane.xlu0 %2139
        %v2141 = vmul.f32 %v2140, %v1552
        %v2142 = vadd.f32 %v2141, 1e-05
        %v2143 = vrsqrt.pop %v2142
        %v2144 = vmul.f32 %v2136, %v2143
        %v2145 = vld [vmem:[%s55] sm:$0x1]
        %v2147 = vlaneseq
        %v2148 = vshrl.u32 %v2147, 7
        %v2149 = vsub.s32 0, %v2148
        %v2150 = vrot.slane %v2145, %v2149
        %v2152 = vmul.f32 %v2144, %v2150
        %v2153 = vld [vmem:[%s57] sm:$0x1]
        %v2155 = vlaneseq
        %v2156 = vshrl.u32 %v2155, 7
        %v2157 = vsub.s32 0, %v2156
        %v2158 = vrot.slane %v2153, %v2157
        %v2160 = vadd.f32 %v2152, %v2158
        %2161 = vst.msk [vmem:[%s1157] sm:$0xff] %vm1196, %v2160
        %s2162 = sand.u32 %s716, 1
        %s2163 = scalar_lea.sflag [#allocation4], %s2162
        %s2164 = sand.u32 %s716, 1
        %s2165 = smul.addr %s2164, 8
        %s2166 = scalar_lea.vmem [#allocation29], %s2165
        // Predicated region
        $region205: #{tpu_custom_call.1} parent=135 // pred_check
          %p2167 = pneg %p726
        $region206: #{tpu_custom_call.1} parent=135 // pred_check_branch
          %2169 = sbr.rel (%p2167) target = $region208
        $region207: #{tpu_custom_call.1} parent=135 // pred_region
          %s2171 = ssub.s32 128, 128
          %2172 = vsyncadd %s2163, %s2171
          %s2173 = smul.addr %s84, 128
          %s2174 = scalar_lea.hbm %s59, %s2173
          %s2176 = sshll.u32 %s2166, 4
          %s2177 = int_to_ptr.vmem [resolvable:$true] %s2176
          %2179 = dma.vmem_to_hbm [thread:$0]  %s2177, 128, %s2174, %s2163
        $region208: #{tpu_custom_call.1} parent=135 // pred_fallthru
          _
      $region136: #{tpu_custom_call.1} parent=5 // pred_fallthru
        _
      %p2180 = scmp.le.s32.totalorder 2, %s79
      // Predicated region
      $region209: #{tpu_custom_call.1} parent=5 // pred_check
        %p2181 = pneg %p2180
      $region210: #{tpu_custom_call.1} parent=5 // pred_check_branch
        %2183 = sbr.rel (%p2181) target = $region212
      $region211: #{tpu_custom_call.1} parent=5 // pred_region
        %s2184 = ssub.s32 %s79, 2
        // Predicated region
        $region213: #{tpu_custom_call.1} parent=211 // pred_check
          %p2185 = pneg %p732
        $region214: #{tpu_custom_call.1} parent=211 // pred_check_branch
          %2187 = sbr.rel (%p2185) target = $region216
        $region215: #{tpu_custom_call.1} parent=211 // pred_region
          %s2188 = sand.u32 %s717, 1
          %s2189 = scalar_lea.sflag [#allocation4], %s2188
          %s2190 = sand.u32 %s717, 1
          %s2191 = smul.addr %s2190, 8
          %s2192 = scalar_lea.vmem [#allocation29], %s2191
          %2193 = dma.done %s2189, 128
        $region216: #{tpu_custom_call.1} parent=211 // pred_fallthru
          _
      $region212: #{tpu_custom_call.1} parent=5 // pred_fallthru
        _
    $region6: #{tpu_custom_call.1} parent=1 // loop_footer
      %s83 = sadd.s32 1, %s79
    $region7: #{tpu_custom_call.1} parent=1 // loop_footer_branch
      %78 = sbr.rel target = $region3
    $region8: #{tpu_custom_call.1} parent=1 // loop_exit
      _
    %2194 = vsyncpa [#allocation3], 1
    %s2195 = scalar_lea.sflag [#allocation3], 1
    %2196 = vsyncpa %s2195, 1
    %2197 = vsyncpa [#allocation6], 1
    %2198 = vsyncpa [#allocation9], 1
    %2199 = vsyncpa [#allocation12], 1
    %2200 = vsyncpa [#allocation15], 1
    %2201 = vsyncpa [#allocation18], 1
    %2202 = vsyncpa [#allocation21], 1
    %2203 = vsyncpa [#allocation24], 1
    %2204 = vsyncpa [#allocation27], 1
    %2205 = vsyncpa [#allocation4], 1
    %s2206 = scalar_lea.sflag [#allocation4], 1
    %2207 = vsyncpa %s2206, 1

// kernel: tpu_custom_call.1
$region0: #{tpu_custom_call.1}
  #allocation0 [shape = 'u32[]', space=smem, size = 0x4, offset = 0x4, fixed_abs, tag = 'smem constant byte address 0x4 - core index']
  #allocation1 [shape = 'u32[144,128]{1,0:T(1,128)}', space=vmem, size = 0x12000, scoped, tag = 'internal scratch']
  %s0 = inlined_call_operand.smem [shape: u32[30], index: -1, kind: input, shape index: {}]
  %s1 = sld [smem:[%s0]]
  %s2 = scalar_lea.smem %s0, 1
  %s3 = sld [smem:[%s2]]
  %s4 = scalar_lea.smem %s0, 2
  %s5 = sld [smem:[%s4]]
  %s6 = scalar_lea.smem %s0, 3
  %s7 = sld [smem:[%s6]]
  %s8 = scalar_lea.smem %s0, 4
  %s9 = sld [smem:[%s8]]
  %s10 = scalar_lea.smem %s0, 5
  %s11 = sld [smem:[%s10]]
  %s12 = scalar_lea.smem %s0, 6
  %s13 = sld [smem:[%s12]]
  %s14 = scalar_lea.smem %s0, 7
  %s15 = sld [smem:[%s14]]
  %s16 = scalar_lea.smem %s0, 8
  %s17 = sld [smem:[%s16]]
  %s18 = scalar_lea.smem %s0, 9
  %s19 = sld [smem:[%s18]]
  %s20 = scalar_lea.smem %s0, 10
  %s21 = sld [smem:[%s20]]
  %s22 = scalar_lea.smem %s0, 11
  %s23 = sld [smem:[%s22]]
  %s24 = scalar_lea.smem %s0, 12
  %s25 = sld [smem:[%s24]]
  %s26 = scalar_lea.smem %s0, 13
  %s27 = sld [smem:[%s26]]
  %s28 = scalar_lea.smem %s0, 14
  %s29 = sld [smem:[%s28]]
  %s30 = scalar_lea.smem %s0, 15
  %s31 = sld [smem:[%s30]]
  %s32 = scalar_lea.smem %s0, 16
  %s33 = sld [smem:[%s32]]
  %s34 = scalar_lea.smem %s0, 17
  %s35 = sld [smem:[%s34]]
  %s36 = scalar_lea.smem %s0, 18
  %s37 = sld [smem:[%s36]]
  %s38 = scalar_lea.smem %s0, 19
  %s39 = sld [smem:[%s38]]
  %s40 = scalar_lea.smem %s0, 20
  %s41 = sld [smem:[%s40]]
  %s42 = scalar_lea.smem %s0, 21
  %s43 = sld [smem:[%s42]]
  %s44 = scalar_lea.smem %s0, 22
  %s45 = sld [smem:[%s44]]
  %s46 = scalar_lea.smem %s0, 23
  %s47 = sld [smem:[%s46]]
  %s48 = scalar_lea.smem %s0, 24
  %s49 = sld [smem:[%s48]]
  %s50 = scalar_lea.smem %s0, 25
  %s51 = sld [smem:[%s50]]
  %s52 = scalar_lea.smem %s0, 26
  %s53 = sld [smem:[%s52]]
  %s54 = scalar_lea.smem %s0, 27
  %s55 = sld [smem:[%s54]]
  %s56 = scalar_lea.smem %s0, 28
  %s57 = sld [smem:[%s56]]
  %s58 = scalar_lea.smem %s0, 29
  %s59 = sld [smem:[%s58]]
  %s60 = sld [smem:[#allocation0]]
  $region217: #{tpu_custom_call.1} parent=0
    _
  %s62 = ssub.s32 1, %s60
  %s63 = scalar_select 0, %s62, %s60
  $region1: #{tpu_custom_call.1} parent=0
    #allocation2 [shape = 'u8[2048]{0}', space=vmem, size = 0x800, scoped, tag = 'input window, operand 2']
    #allocation3 [shape = 's32[2]{0}', space=sflag, size = 0x8, scoped, tag = 'scoped memory for tpu_custom_call.1']
    #allocation4 [shape = 's32[2]{0}', space=sflag, size = 0x8, scoped, tag = 'scoped memory for tpu_custom_call.1']
    #allocation5 [shape = 'u8[512]{0}', space=vmem, size = 0x400, scoped, tag = 'input window, operand 4, single buffered']
    #allocation6 [shape = 's32[1]{0}', space=sflag, size = 0x4, scoped, tag = 'scoped memory for tpu_custom_call.1']
    #allocation7 [shape = 'u8[8192]{0}', space=vmem, size = 0x2000, scoped, tag = 'input window, operand 5, single buffered']
    #allocation8 [shape = 'u8[512]{0}', space=vmem, size = 0x400, scoped, tag = 'input window, operand 6, single buffered']
    #allocation9 [shape = 's32[1]{0}', space=sflag, size = 0x4, scoped, tag = 'scoped memory for tpu_custom_call.1']
    #allocation10 [shape = 'u8[8192]{0}', space=vmem, size = 0x2000, scoped, tag = 'input window, operand 7, single buffered']
    #allocation11 [shape = 'u8[512]{0}', space=vmem, size = 0x400, scoped, tag = 'input window, operand 8, single buffered']
    #allocation12 [shape = 's32[1]{0}', space=sflag, size = 0x4, scoped, tag = 'scoped memory for tpu_custom_call.1']
    #allocation13 [shape = 'u8[512]{0}', space=vmem, size = 0x400, scoped, tag = 'input window, operand 10, single buffered']
    #allocation14 [shape = 'u8[512]{0}', space=vmem, size = 0x400, scoped, tag = 'input window, operand 11, single buffered']
    #allocation15 [shape = 's32[1]{0}', space=sflag, size = 0x4, scoped, tag = 'scoped memory for tpu_custom_call.1']
    #allocation16 [shape = 'u8[512]{0}', space=vmem, size = 0x400, scoped, tag = 'input window, operand 12, single buffered']
    #allocation17 [shape = 'u8[8192]{0}', space=vmem, size = 0x2000, scoped, tag = 'input window, operand 13, single buffered']
    #allocation18 [shape = 's32[1]{0}', space=sflag, size = 0x4, scoped, tag = 'scoped memory for tpu_custom_call.1']
    #allocation19 [shape = 'u8[512]{0}', space=vmem, size = 0x400, scoped, tag = 'input window, operand 14, single buffered']
    #allocation20 [shape = 'u8[8192]{0}', space=vmem, size = 0x2000, scoped, tag = 'input window, operand 15, single buffered']
    #allocation21 [shape = 's32[1]{0}', space=sflag, size = 0x4, scoped, tag = 'scoped memory for tpu_custom_call.1']
    #allocation22 [shape = 'u8[512]{0}', space=vmem, size = 0x400, scoped, tag = 'input window, operand 16, single buffered']
    #allocation23 [shape = 'u8[8192]{0}', space=vmem, size = 0x2000, scoped, tag = 'input window, operand 17, single buffered']
    #allocation24 [shape = 's32[1]{0}', space=sflag, size = 0x4, scoped, tag = 'scoped memory for tpu_custom_call.1']
    #allocation25 [shape = 'u8[512]{0}', space=vmem, size = 0x400, scoped, tag = 'input window, operand 18, single buffered']
    #allocation26 [shape = 'u8[8192]{0}', space=vmem, size = 0x2000, scoped, tag = 'input window, operand 19, single buffered']
    #allocation27 [shape = 's32[1]{0}', space=sflag, size = 0x4, scoped, tag = 'scoped memory for tpu_custom_call.1']
    #allocation28 [shape = 'u8[8192]{0}', space=vmem, size = 0x2000, scoped, tag = 'input window, operand 23, single buffered']
    #allocation29 [shape = 'u8[8192]{0}', space=vmem, size = 0x2000, scoped, tag = 'output window, operand 0']
    %64 = vsyncpa [#allocation3], 0
    %s65 = scalar_lea.sflag [#allocation3], 1
    %66 = vsyncpa %s65, 0
    %67 = vsyncpa [#allocation6], 0
    %68 = vsyncpa [#allocation9], 0
    %69 = vsyncpa [#allocation12], 0
    %70 = vsyncpa [#allocation15], 0
    %71 = vsyncpa [#allocation18], 0
    %72 = vsyncpa [#allocation21], 0
    %73 = vsyncpa [#allocation24], 0
    %74 = vsyncpa [#allocation27], 0
    %75 = vsyncpa [#allocation4], 0
    %s76 = scalar_lea.sflag [#allocation4], 1
    %77 = vsyncpa %s76, 0
    loop: start=0, step=1, limit=4
    $region2: #{tpu_custom_call.1} parent=1 // loop_pre_header
      _
    $region3: #{tpu_custom_call.1} parent=1 // loop_header
      %s79 = sphi 0, %s83
      %p80 = scmp.ge.s32.totalorder %s79, 4
      %s89 = sphi 0, %s91
      %s92 = sphi 0, %s89
      %s93 = sphi 0, %s92
      %s109 = sphi 0, %s93
      %s115 = sphi 0, %s117
      %s118 = sphi 0, %s115
      %s119 = sphi 0, %s118
      %s135 = sphi 0, %s119
      %s141 = sphi 0, %s143
      %s144 = sphi 0, %s141
      %s145 = sphi 0, %s144
      %s161 = sphi 0, %s145
      %s165 = sphi 0, %s165
      %s167 = sphi 0, %s165
      %s168 = sphi 0, %s167
      %s182 = sphi 0, %s168
      %s186 = sphi 0, %s186
      %s188 = sphi 0, %s186
      %s189 = sphi 0, %s188
      %s203 = sphi 0, %s189
      %s207 = sphi 0, %s207
      %s209 = sphi 0, %s207
      %s210 = sphi 0, %s209
      %s224 = sphi 0, %s210
      %s228 = sphi 0, %s228
      %s230 = sphi 0, %s228
      %s231 = sphi 0, %s230
      %s245 = sphi 0, %s231
      %s249 = sphi 0, %s249
      %s251 = sphi 0, %s249
      %s252 = sphi 0, %s251
      %s266 = sphi 0, %s252
      %s270 = sphi 0, %s270
      %s272 = sphi 0, %s270
      %s273 = sphi 0, %s272
      %s287 = sphi 0, %s273
      %s291 = sphi 0, %s291
      %s293 = sphi 0, %s291
      %s294 = sphi 0, %s293
      %s308 = sphi 0, %s294
      %s312 = sphi 0, %s312
      %s314 = sphi 0, %s312
      %s315 = sphi 0, %s314
      %s329 = sphi 0, %s315
      %s333 = sphi 0, %s333
      %s335 = sphi 0, %s333
      %s336 = sphi 0, %s335
      %s350 = sphi 0, %s336
      %s354 = sphi 0, %s354
      %s356 = sphi 0, %s354
      %s357 = sphi 0, %s356
      %s371 = sphi 0, %s357
      %s375 = sphi 0, %s375
      %s377 = sphi 0, %s375
      %s378 = sphi 0, %s377
      %s392 = sphi 0, %s378
      %s396 = sphi 0, %s396
      %s398 = sphi 0, %s396
      %s399 = sphi 0, %s398
      %s413 = sphi 0, %s399
      %s417 = sphi 0, %s417
      %s419 = sphi 0, %s417
      %s420 = sphi 0, %s419
      %s434 = sphi 0, %s420
      %s438 = sphi 0, %s438
      %s440 = sphi 0, %s438
      %s441 = sphi 0, %s440
      %s455 = sphi 0, %s441
      %s459 = sphi 0, %s459
      %s461 = sphi 0, %s459
      %s462 = sphi 0, %s461
      %s476 = sphi 0, %s462
      %s480 = sphi 0, %s480
      %s482 = sphi 0, %s480
      %s483 = sphi 0, %s482
      %s497 = sphi 0, %s483
      %s501 = sphi 0, %s501
      %s503 = sphi 0, %s501
      %s504 = sphi 0, %s503
      %s518 = sphi 0, %s504
      %s522 = sphi 0, %s522
      %s524 = sphi 0, %s522
      %s525 = sphi 0, %s524
      %s539 = sphi 0, %s525
      %s543 = sphi 0, %s543
      %s545 = sphi 0, %s543
      %s546 = sphi 0, %s545
      %s560 = sphi 0, %s546
      %s564 = sphi 0, %s564
      %s566 = sphi 0, %s564
      %s567 = sphi 0, %s566
      %s581 = sphi 0, %s567
      %s585 = sphi 0, %s585
      %s587 = sphi 0, %s585
      %s588 = sphi 0, %s587
      %s602 = sphi 0, %s588
      %s606 = sphi 0, %s606
      %s608 = sphi 0, %s606
      %s609 = sphi 0, %s608
      %s623 = sphi 0, %s609
      %s627 = sphi 0, %s627
      %s629 = sphi 0, %s627
      %s630 = sphi 0, %s629
      %s644 = sphi 0, %s630
      %s648 = sphi 0, %s648
      %s650 = sphi 0, %s648
      %s651 = sphi 0, %s650
      %s665 = sphi 0, %s651
      %s669 = sphi 0, %s669
      %s671 = sphi 0, %s669
      %s672 = sphi 0, %s671
      %s686 = sphi 0, %s672
      %s690 = sphi 0, %s690
      %s692 = sphi 0, %s690
      %s693 = sphi 0, %s692
      %s707 = sphi 0, %s693
      %s713 = sphi 0, %s715
      %s716 = sphi 0, %s713
      %s717 = sphi 0, %s716
      %s733 = sphi 0, %s717
    $region4: #{tpu_custom_call.1} parent=1 // loop_header_branch
      %82 = sbr.rel (%p80) target = $region8
    $region5: #{tpu_custom_call.1} parent=1 // loop_body
      %s84 = ssub.s32 %s79, 1
      %s85 = ssub.s32 %s79, 2
      %s86 = sadd.s32 %s79, 1
      %s87 = ssub.s32 %s79, %s86
      %p88 = scmp.eq.s32.totalorder %s87, 0
      %s90 = sadd.s32 %s89, 1
      %s91 = scalar_select %p88, %s89, %s90
      %p94 = pneg %p88
      %p95 = scmp.eq.s32.totalorder %s79, 1
      %p96 = por %p94, %p95
      %p97 = scmp.ne.s32.totalorder %s89, %s92
      %p98 = scmp.eq.s32.totalorder %s79, 0
      %p99 = por %p97, %p98
      %p100 = scmp.ne.s32.totalorder %s89, %s92
      %p101 = scmp.eq.s32.totalorder %s84, 1
      %p102 = por %p100, %p101
      %p103 = scmp.ne.s32.totalorder %s92, %s93
      %p104 = scmp.eq.s32.totalorder %s84, 0
      %p105 = por %p103, %p104
      %p106 = scmp.ne.s32.totalorder %s92, %s93
      %p107 = scmp.eq.s32.totalorder %s85, 1
      %p108 = por %p106, %p107
      %p110 = scmp.ne.s32.totalorder %s93, %s109
      %p111 = scmp.eq.s32.totalorder %s85, 0
      %p112 = por %p110, %p111
      %s113 = ssub.s32 %s79, %s86
      %p114 = scmp.eq.s32.totalorder %s113, 0
      %s116 = sadd.s32 %s115, 1
      %s117 = scalar_select %p114, %s115, %s116
      %p120 = pneg %p114
      %p121 = scmp.eq.s32.totalorder %s79, 1
      %p122 = por %p120, %p121
      %p123 = scmp.ne.s32.totalorder %s115, %s118
      %p124 = scmp.eq.s32.totalorder %s79, 0
      %p125 = por %p123, %p124
      %p126 = scmp.ne.s32.totalorder %s115, %s118
      %p127 = scmp.eq.s32.totalorder %s84, 1
      %p128 = por %p126, %p127
      %p129 = scmp.ne.s32.totalorder %s118, %s119
      %p130 = scmp.eq.s32.totalorder %s84, 0
      %p131 = por %p129, %p130
      %p132 = scmp.ne.s32.totalorder %s118, %s119
      %p133 = scmp.eq.s32.totalorder %s85, 1
      %p134 = por %p132, %p133
      %p136 = scmp.ne.s32.totalorder %s119, %s135
      %p137 = scmp.eq.s32.totalorder %s85, 0
      %p138 = por %p136, %p137
      %s139 = ssub.s32 %s79, %s86
      %p140 = scmp.eq.s32.totalorder %s139, 0
      %s142 = sadd.s32 %s141, 1
      %s143 = scalar_select %p140, %s141, %s142
      %p146 = pneg %p140
      %p147 = scmp.eq.s32.totalorder %s79, 1
      %p148 = por %p146, %p147
      %p149 = scmp.ne.s32.totalorder %s141, %s144
      %p150 = scmp.eq.s32.totalorder %s79, 0
      %p151 = por %p149, %p150
      %p152 = scmp.ne.s32.totalorder %s141, %s144
      %p153 = scmp.eq.s32.totalorder %s84, 1
      %p154 = por %p152, %p153
      %p155 = scmp.ne.s32.totalorder %s144, %s145
      %p156 = scmp.eq.s32.totalorder %s84, 0
      %p157 = por %p155, %p156
      %p158 = scmp.ne.s32.totalorder %s144, %s145
      %p159 = scmp.eq.s32.totalorder %s85, 1
      %p160 = por %p158, %p159
      %p162 = scmp.ne.s32.totalorder %s145, %s161
      %p163 = scmp.eq.s32.totalorder %s85, 0
      %p164 = por %p162, %p163
      %s166 = sadd.s32 %s165, 1
      %p169 = scmp.eq.s32.totalorder %s79, 1
      %p170 = scmp.ne.s32.totalorder %s165, %s167
      %p171 = scmp.eq.s32.totalorder %s79, 0
      %p172 = por %p170, %p171
      %p173 = scmp.ne.s32.totalorder %s165, %s167
      %p174 = scmp.eq.s32.totalorder %s84, 1
      %p175 = por %p173, %p174
      %p176 = scmp.ne.s32.totalorder %s167, %s168
      %p177 = scmp.eq.s32.totalorder %s84, 0
      %p178 = por %p176, %p177
      %p179 = scmp.ne.s32.totalorder %s167, %s168
      %p180 = scmp.eq.s32.totalorder %s85, 1
      %p181 = por %p179, %p180
      %p183 = scmp.ne.s32.totalorder %s168, %s182
      %p184 = scmp.eq.s32.totalorder %s85, 0
      %p185 = por %p183, %p184
      %s187 = sadd.s32 %s186, 1
      %p190 = scmp.eq.s32.totalorder %s79, 1
      %p191 = scmp.ne.s32.totalorder %s186, %s188
      %p192 = scmp.eq.s32.totalorder %s79, 0
      %p193 = por %p191, %p192
      %p194 = scmp.ne.s32.totalorder %s186, %s188
      %p195 = scmp.eq.s32.totalorder %s84, 1
      %p196 = por %p194, %p195
      %p197 = scmp.ne.s32.totalorder %s188, %s189
      %p198 = scmp.eq.s32.totalorder %s84, 0
      %p199 = por %p197, %p198
      %p200 = scmp.ne.s32.totalorder %s188, %s189
      %p201 = scmp.eq.s32.totalorder %s85, 1
      %p202 = por %p200, %p201
      %p204 = scmp.ne.s32.totalorder %s189, %s203
      %p205 = scmp.eq.s32.totalorder %s85, 0
      %p206 = por %p204, %p205
      %s208 = sadd.s32 %s207, 1
      %p211 = scmp.eq.s32.totalorder %s79, 1
      %p212 = scmp.ne.s32.totalorder %s207, %s209
      %p213 = scmp.eq.s32.totalorder %s79, 0
      %p214 = por %p212, %p213
      %p215 = scmp.ne.s32.totalorder %s207, %s209
      %p216 = scmp.eq.s32.totalorder %s84, 1
      %p217 = por %p215, %p216
      %p218 = scmp.ne.s32.totalorder %s209, %s210
      %p219 = scmp.eq.s32.totalorder %s84, 0
      %p220 = por %p218, %p219
      %p221 = scmp.ne.s32.totalorder %s209, %s210
      %p222 = scmp.eq.s32.totalorder %s85, 1
      %p223 = por %p221, %p222
      %p225 = scmp.ne.s32.totalorder %s210, %s224
      %p226 = scmp.eq.s32.totalorder %s85, 0
      %p227 = por %p225, %p226
      %s229 = sadd.s32 %s228, 1
      %p232 = scmp.eq.s32.totalorder %s79, 1
      %p233 = scmp.ne.s32.totalorder %s228, %s230
      %p234 = scmp.eq.s32.totalorder %s79, 0
      %p235 = por %p233, %p234
      %p236 = scmp.ne.s32.totalorder %s228, %s230
      %p237 = scmp.eq.s32.totalorder %s84, 1
      %p238 = por %p236, %p237
      %p239 = scmp.ne.s32.totalorder %s230, %s231
      %p240 = scmp.eq.s32.totalorder %s84, 0
      %p241 = por %p239, %p240
      %p242 = scmp.ne.s32.totalorder %s230, %s231
      %p243 = scmp.eq.s32.totalorder %s85, 1
      %p244 = por %p242, %p243
      %p246 = scmp.ne.s32.totalorder %s231, %s245
      %p247 = scmp.eq.s32.totalorder %s85, 0
      %p248 = por %p246, %p247
      %s250 = sadd.s32 %s249, 1
      %p253 = scmp.eq.s32.totalorder %s79, 1
      %p254 = scmp.ne.s32.totalorder %s249, %s251
      %p255 = scmp.eq.s32.totalorder %s79, 0
      %p256 = por %p254, %p255
      %p257 = scmp.ne.s32.totalorder %s249, %s251
      %p258 = scmp.eq.s32.totalorder %s84, 1
      %p259 = por %p257, %p258
      %p260 = scmp.ne.s32.totalorder %s251, %s252
      %p261 = scmp.eq.s32.totalorder %s84, 0
      %p262 = por %p260, %p261
      %p263 = scmp.ne.s32.totalorder %s251, %s252
      %p264 = scmp.eq.s32.totalorder %s85, 1
      %p265 = por %p263, %p264
      %p267 = scmp.ne.s32.totalorder %s252, %s266
      %p268 = scmp.eq.s32.totalorder %s85, 0
      %p269 = por %p267, %p268
      %s271 = sadd.s32 %s270, 1
      %p274 = scmp.eq.s32.totalorder %s79, 1
      %p275 = scmp.ne.s32.totalorder %s270, %s272
      %p276 = scmp.eq.s32.totalorder %s79, 0
      %p277 = por %p275, %p276
      %p278 = scmp.ne.s32.totalorder %s270, %s272
      %p279 = scmp.eq.s32.totalorder %s84, 1
      %p280 = por %p278, %p279
      %p281 = scmp.ne.s32.totalorder %s272, %s273
      %p282 = scmp.eq.s32.totalorder %s84, 0
      %p283 = por %p281, %p282
      %p284 = scmp.ne.s32.totalorder %s272, %s273
      %p285 = scmp.eq.s32.totalorder %s85, 1
      %p286 = por %p284, %p285
      %p288 = scmp.ne.s32.totalorder %s273, %s287
      %p289 = scmp.eq.s32.totalorder %s85, 0
      %p290 = por %p288, %p289
      %s292 = sadd.s32 %s291, 1
      %p295 = scmp.eq.s32.totalorder %s79, 1
      %p296 = scmp.ne.s32.totalorder %s291, %s293
      %p297 = scmp.eq.s32.totalorder %s79, 0
      %p298 = por %p296, %p297
      %p299 = scmp.ne.s32.totalorder %s291, %s293
      %p300 = scmp.eq.s32.totalorder %s84, 1
      %p301 = por %p299, %p300
      %p302 = scmp.ne.s32.totalorder %s293, %s294
      %p303 = scmp.eq.s32.totalorder %s84, 0
      %p304 = por %p302, %p303
      %p305 = scmp.ne.s32.totalorder %s293, %s294
      %p306 = scmp.eq.s32.totalorder %s85, 1
      %p307 = por %p305, %p306
      %p309 = scmp.ne.s32.totalorder %s294, %s308
      %p310 = scmp.eq.s32.totalorder %s85, 0
      %p311 = por %p309, %p310
      %s313 = sadd.s32 %s312, 1
      %p316 = scmp.eq.s32.totalorder %s79, 1
      %p317 = scmp.ne.s32.totalorder %s312, %s314
      %p318 = scmp.eq.s32.totalorder %s79, 0
      %p319 = por %p317, %p318
      %p320 = scmp.ne.s32.totalorder %s312, %s314
      %p321 = scmp.eq.s32.totalorder %s84, 1
      %p322 = por %p320, %p321
      %p323 = scmp.ne.s32.totalorder %s314, %s315
      %p324 = scmp.eq.s32.totalorder %s84, 0
      %p325 = por %p323, %p324
      %p326 = scmp.ne.s32.totalorder %s314, %s315
      %p327 = scmp.eq.s32.totalorder %s85, 1
      %p328 = por %p326, %p327
      %p330 = scmp.ne.s32.totalorder %s315, %s329
      %p331 = scmp.eq.s32.totalorder %s85, 0
      %p332 = por %p330, %p331
      %s334 = sadd.s32 %s333, 1
      %p337 = scmp.eq.s32.totalorder %s79, 1
      %p338 = scmp.ne.s32.totalorder %s333, %s335
      %p339 = scmp.eq.s32.totalorder %s79, 0
      %p340 = por %p338, %p339
      %p341 = scmp.ne.s32.totalorder %s333, %s335
      %p342 = scmp.eq.s32.totalorder %s84, 1
      %p343 = por %p341, %p342
      %p344 = scmp.ne.s32.totalorder %s335, %s336
      %p345 = scmp.eq.s32.totalorder %s84, 0
      %p346 = por %p344, %p345
      %p347 = scmp.ne.s32.totalorder %s335, %s336
      %p348 = scmp.eq.s32.totalorder %s85, 1
      %p349 = por %p347, %p348
      %p351 = scmp.ne.s32.totalorder %s336, %s350
      %p352 = scmp.eq.s32.totalorder %s85, 0
      %p353 = por %p351, %p352
      %s355 = sadd.s32 %s354, 1
      %p358 = scmp.eq.s32.totalorder %s79, 1
      %p359 = scmp.ne.s32.totalorder %s354, %s356
      %p360 = scmp.eq.s32.totalorder %s79, 0
      %p361 = por %p359, %p360
      %p362 = scmp.ne.s32.totalorder %s354, %s356
      %p363 = scmp.eq.s32.totalorder %s84, 1
      %p364 = por %p362, %p363
      %p365 = scmp.ne.s32.totalorder %s356, %s357
      %p366 = scmp.eq.s32.totalorder %s84, 0
      %p367 = por %p365, %p366
      %p368 = scmp.ne.s32.totalorder %s356, %s357
      %p369 = scmp.eq.s32.totalorder %s85, 1
      %p370 = por %p368, %p369
      %p372 = scmp.ne.s32.totalorder %s357, %s371
      %p373 = scmp.eq.s32.totalorder %s85, 0
      %p374 = por %p372, %p373
      %s376 = sadd.s32 %s375, 1
      %p379 = scmp.eq.s32.totalorder %s79, 1
      %p380 = scmp.ne.s32.totalorder %s375, %s377
      %p381 = scmp.eq.s32.totalorder %s79, 0
      %p382 = por %p380, %p381
      %p383 = scmp.ne.s32.totalorder %s375, %s377
      %p384 = scmp.eq.s32.totalorder %s84, 1
      %p385 = por %p383, %p384
      %p386 = scmp.ne.s32.totalorder %s377, %s378
      %p387 = scmp.eq.s32.totalorder %s84, 0
      %p388 = por %p386, %p387
      %p389 = scmp.ne.s32.totalorder %s377, %s378
      %p390 = scmp.eq.s32.totalorder %s85, 1
      %p391 = por %p389, %p390
      %p393 = scmp.ne.s32.totalorder %s378, %s392
      %p394 = scmp.eq.s32.totalorder %s85, 0
      %p395 = por %p393, %p394
      %s397 = sadd.s32 %s396, 1
      %p400 = scmp.eq.s32.totalorder %s79, 1
      %p401 = scmp.ne.s32.totalorder %s396, %s398
      %p402 = scmp.eq.s32.totalorder %s79, 0
      %p403 = por %p401, %p402
      %p404 = scmp.ne.s32.totalorder %s396, %s398
      %p405 = scmp.eq.s32.totalorder %s84, 1
      %p406 = por %p404, %p405
      %p407 = scmp.ne.s32.totalorder %s398, %s399
      %p408 = scmp.eq.s32.totalorder %s84, 0
      %p409 = por %p407, %p408
      %p410 = scmp.ne.s32.totalorder %s398, %s399
      %p411 = scmp.eq.s32.totalorder %s85, 1
      %p412 = por %p410, %p411
      %p414 = scmp.ne.s32.totalorder %s399, %s413
      %p415 = scmp.eq.s32.totalorder %s85, 0
      %p416 = por %p414, %p415
      %s418 = sadd.s32 %s417, 1
      %p421 = scmp.eq.s32.totalorder %s79, 1
      %p422 = scmp.ne.s32.totalorder %s417, %s419
      %p423 = scmp.eq.s32.totalorder %s79, 0
      %p424 = por %p422, %p423
      %p425 = scmp.ne.s32.totalorder %s417, %s419
      %p426 = scmp.eq.s32.totalorder %s84, 1
      %p427 = por %p425, %p426
      %p428 = scmp.ne.s32.totalorder %s419, %s420
      %p429 = scmp.eq.s32.totalorder %s84, 0
      %p430 = por %p428, %p429
      %p431 = scmp.ne.s32.totalorder %s419, %s420
      %p432 = scmp.eq.s32.totalorder %s85, 1
      %p433 = por %p431, %p432
      %p435 = scmp.ne.s32.totalorder %s420, %s434
      %p436 = scmp.eq.s32.totalorder %s85, 0
      %p437 = por %p435, %p436
      %s439 = sadd.s32 %s438, 1
      %p442 = scmp.eq.s32.totalorder %s79, 1
      %p443 = scmp.ne.s32.totalorder %s438, %s440
      %p444 = scmp.eq.s32.totalorder %s79, 0
      %p445 = por %p443, %p444
      %p446 = scmp.ne.s32.totalorder %s438, %s440
      %p447 = scmp.eq.s32.totalorder %s84, 1
      %p448 = por %p446, %p447
      %p449 = scmp.ne.s32.totalorder %s440, %s441
      %p450 = scmp.eq.s32.totalorder %s84, 0
      %p451 = por %p449, %p450
      %p452 = scmp.ne.s32.totalorder %s440, %s441
      %p453 = scmp.eq.s32.totalorder %s85, 1
      %p454 = por %p452, %p453
      %p456 = scmp.ne.s32.totalorder %s441, %s455
      %p457 = scmp.eq.s32.totalorder %s85, 0
      %p458 = por %p456, %p457
      %s460 = sadd.s32 %s459, 1
      %p463 = scmp.eq.s32.totalorder %s79, 1
      %p464 = scmp.ne.s32.totalorder %s459, %s461
      %p465 = scmp.eq.s32.totalorder %s79, 0
      %p466 = por %p464, %p465
      %p467 = scmp.ne.s32.totalorder %s459, %s461
      %p468 = scmp.eq.s32.totalorder %s84, 1
      %p469 = por %p467, %p468
      %p470 = scmp.ne.s32.totalorder %s461, %s462
      %p471 = scmp.eq.s32.totalorder %s84, 0
      %p472 = por %p470, %p471
      %p473 = scmp.ne.s32.totalorder %s461, %s462
      %p474 = scmp.eq.s32.totalorder %s85, 1
      %p475 = por %p473, %p474
      %p477 = scmp.ne.s32.totalorder %s462, %s476
      %p478 = scmp.eq.s32.totalorder %s85, 0
      %p479 = por %p477, %p478
      %s481 = sadd.s32 %s480, 1
      %p484 = scmp.eq.s32.totalorder %s79, 1
      %p485 = scmp.ne.s32.totalorder %s480, %s482
      %p486 = scmp.eq.s32.totalorder %s79, 0
      %p487 = por %p485, %p486
      %p488 = scmp.ne.s32.totalorder %s480, %s482
      %p489 = scmp.eq.s32.totalorder %s84, 1
      %p490 = por %p488, %p489
      %p491 = scmp.ne.s32.totalorder %s482, %s483
      %p492 = scmp.eq.s32.totalorder %s84, 0
      %p493 = por %p491, %p492
      %p494 = scmp.ne.s32.totalorder %s482, %s483
      %p495 = scmp.eq.s32.totalorder %s85, 1
      %p496 = por %p494, %p495
      %p498 = scmp.ne.s32.totalorder %s483, %s497
      %p499 = scmp.eq.s32.totalorder %s85, 0
      %p500 = por %p498, %p499
      %s502 = sadd.s32 %s501, 1
      %p505 = scmp.eq.s32.totalorder %s79, 1
      %p506 = scmp.ne.s32.totalorder %s501, %s503
      %p507 = scmp.eq.s32.totalorder %s79, 0
      %p508 = por %p506, %p507
      %p509 = scmp.ne.s32.totalorder %s501, %s503
      %p510 = scmp.eq.s32.totalorder %s84, 1
      %p511 = por %p509, %p510
      %p512 = scmp.ne.s32.totalorder %s503, %s504
      %p513 = scmp.eq.s32.totalorder %s84, 0
      %p514 = por %p512, %p513
      %p515 = scmp.ne.s32.totalorder %s503, %s504
      %p516 = scmp.eq.s32.totalorder %s85, 1
      %p517 = por %p515, %p516
      %p519 = scmp.ne.s32.totalorder %s504, %s518
      %p520 = scmp.eq.s32.totalorder %s85, 0
      %p521 = por %p519, %p520
      %s523 = sadd.s32 %s522, 1
      %p526 = scmp.eq.s32.totalorder %s79, 1
      %p527 = scmp.ne.s32.totalorder %s522, %s524
      %p528 = scmp.eq.s32.totalorder %s79, 0
      %p529 = por %p527, %p528
      %p530 = scmp.ne.s32.totalorder %s522, %s524
      %p531 = scmp.eq.s32.totalorder %s84, 1
      %p532 = por %p530, %p531
      %p533 = scmp.ne.s32.totalorder %s524, %s525
      %p534 = scmp.eq.s32.totalorder %s84, 0
      %p535 = por %p533, %p534
      %p536 = scmp.ne.s32.totalorder %s524, %s525
      %p537 = scmp.eq.s32.totalorder %s85, 1
      %p538 = por %p536, %p537
      %p540 = scmp.ne.s32.totalorder %s525, %s539
      %p541 = scmp.eq.s32.totalorder %s85, 0
      %p542 = por %p540, %p541
      %s544 = sadd.s32 %s543, 1
      %p547 = scmp.eq.s32.totalorder %s79, 1
      %p548 = scmp.ne.s32.totalorder %s543, %s545
      %p549 = scmp.eq.s32.totalorder %s79, 0
      %p550 = por %p548, %p549
      %p551 = scmp.ne.s32.totalorder %s543, %s545
      %p552 = scmp.eq.s32.totalorder %s84, 1
      %p553 = por %p551, %p552
      %p554 = scmp.ne.s32.totalorder %s545, %s546
      %p555 = scmp.eq.s32.totalorder %s84, 0
      %p556 = por %p554, %p555
      %p557 = scmp.ne.s32.totalorder %s545, %s546
      %p558 = scmp.eq.s32.totalorder %s85, 1
      %p559 = por %p557, %p558
      %p561 = scmp.ne.s32.totalorder %s546, %s560
      %p562 = scmp.eq.s32.totalorder %s85, 0
      %p563 = por %p561, %p562
      %s565 = sadd.s32 %s564, 1
      %p568 = scmp.eq.s32.totalorder %s79, 1
      %p569 = scmp.ne.s32.totalorder %s564, %s566
      %p570 = scmp.eq.s32.totalorder %s79, 0
      %p571 = por %p569, %p570
      %p572 = scmp.ne.s32.totalorder %s564, %s566
      %p573 = scmp.eq.s32.totalorder %s84, 1
      %p574 = por %p572, %p573
      %p575 = scmp.ne.s32.totalorder %s566, %s567
      %p576 = scmp.eq.s32.totalorder %s84, 0
      %p577 = por %p575, %p576
      %p578 = scmp.ne.s32.totalorder %s566, %s567
      %p579 = scmp.eq.s32.totalorder %s85, 1
      %p580 = por %p578, %p579
      %p582 = scmp.ne.s32.totalorder %s567, %s581
      %p583 = scmp.eq.s32.totalorder %s85, 0
      %p584 = por %p582, %p583
      %s586 = sadd.s32 %s585, 1
      %p589 = scmp.eq.s32.totalorder %s79, 1
      %p590 = scmp.ne.s32.totalorder %s585, %s587
      %p591 = scmp.eq.s32.totalorder %s79, 0
      %p592 = por %p590, %p591
      %p593 = scmp.ne.s32.totalorder %s585, %s587
      %p594 = scmp.eq.s32.totalorder %s84, 1
      %p595 = por %p593, %p594
      %p596 = scmp.ne.s32.totalorder %s587, %s588
      %p597 = scmp.eq.s32.totalorder %s84, 0
      %p598 = por %p596, %p597
      %p599 = scmp.ne.s32.totalorder %s587, %s588
      %p600 = scmp.eq.s32.totalorder %s85, 1
      %p601 = por %p599, %p600
      %p603 = scmp.ne.s32.totalorder %s588, %s602
      %p604 = scmp.eq.s32.totalorder %s85, 0
      %p605 = por %p603, %p604
      %s607 = sadd.s32 %s606, 1
      %p610 = scmp.eq.s32.totalorder %s79, 1
      %p611 = scmp.ne.s32.totalorder %s606, %s608
      %p612 = scmp.eq.s32.totalorder %s79, 0
      %p613 = por %p611, %p612
      %p614 = scmp.ne.s32.totalorder %s606, %s608
      %p615 = scmp.eq.s32.totalorder %s84, 1
      %p616 = por %p614, %p615
      %p617 = scmp.ne.s32.totalorder %s608, %s609
      %p618 = scmp.eq.s32.totalorder %s84, 0
      %p619 = por %p617, %p618
      %p620 = scmp.ne.s32.totalorder %s608, %s609
      %p621 = scmp.eq.s32.totalorder %s85, 1
      %p622 = por %p620, %p621
      %p624 = scmp.ne.s32.totalorder %s609, %s623
      %p625 = scmp.eq.s32.totalorder %s85, 0
      %p626 = por %p624, %p625
      %s628 = sadd.s32 %s627, 1
      %p631 = scmp.eq.s32.totalorder %s79, 1
      %p632 = scmp.ne.s32.totalorder %s627, %s629
      %p633 = scmp.eq.s32.totalorder %s79, 0
      %p634 = por %p632, %p633
      %p635 = scmp.ne.s32.totalorder %s627, %s629
      %p636 = scmp.eq.s32.totalorder %s84, 1
      %p637 = por %p635, %p636
      %p638 = scmp.ne.s32.totalorder %s629, %s630
      %p639 = scmp.eq.s32.totalorder %s84, 0
      %p640 = por %p638, %p639
      %p641 = scmp.ne.s32.totalorder %s629, %s630
      %p642 = scmp.eq.s32.totalorder %s85, 1
      %p643 = por %p641, %p642
      %p645 = scmp.ne.s32.totalorder %s630, %s644
      %p646 = scmp.eq.s32.totalorder %s85, 0
      %p647 = por %p645, %p646
      %s649 = sadd.s32 %s648, 1
      %p652 = scmp.eq.s32.totalorder %s79, 1
      %p653 = scmp.ne.s32.totalorder %s648, %s650
      %p654 = scmp.eq.s32.totalorder %s79, 0
      %p655 = por %p653, %p654
      %p656 = scmp.ne.s32.totalorder %s648, %s650
      %p657 = scmp.eq.s32.totalorder %s84, 1
      %p658 = por %p656, %p657
      %p659 = scmp.ne.s32.totalorder %s650, %s651
      %p660 = scmp.eq.s32.totalorder %s84, 0
      %p661 = por %p659, %p660
      %p662 = scmp.ne.s32.totalorder %s650, %s651
      %p663 = scmp.eq.s32.totalorder %s85, 1
      %p664 = por %p662, %p663
      %p666 = scmp.ne.s32.totalorder %s651, %s665
      %p667 = scmp.eq.s32.totalorder %s85, 0
      %p668 = por %p666, %p667
      %s670 = sadd.s32 %s669, 1
      %p673 = scmp.eq.s32.totalorder %s79, 1
      %p674 = scmp.ne.s32.totalorder %s669, %s671
      %p675 = scmp.eq.s32.totalorder %s79, 0
      %p676 = por %p674, %p675
      %p677 = scmp.ne.s32.totalorder %s669, %s671
      %p678 = scmp.eq.s32.totalorder %s84, 1
      %p679 = por %p677, %p678
      %p680 = scmp.ne.s32.totalorder %s671, %s672
      %p681 = scmp.eq.s32.totalorder %s84, 0
      %p682 = por %p680, %p681
      %p683 = scmp.ne.s32.totalorder %s671, %s672
      %p684 = scmp.eq.s32.totalorder %s85, 1
      %p685 = por %p683, %p684
      %p687 = scmp.ne.s32.totalorder %s672, %s686
      %p688 = scmp.eq.s32.totalorder %s85, 0
      %p689 = por %p687, %p688
      %s691 = sadd.s32 %s690, 1
      %p694 = scmp.eq.s32.totalorder %s79, 1
      %p695 = scmp.ne.s32.totalorder %s690, %s692
      %p696 = scmp.eq.s32.totalorder %s79, 0
      %p697 = por %p695, %p696
      %p698 = scmp.ne.s32.totalorder %s690, %s692
      %p699 = scmp.eq.s32.totalorder %s84, 1
      %p700 = por %p698, %p699
      %p701 = scmp.ne.s32.totalorder %s692, %s693
      %p702 = scmp.eq.s32.totalorder %s84, 0
      %p703 = por %p701, %p702
      %p704 = scmp.ne.s32.totalorder %s692, %s693
      %p705 = scmp.eq.s32.totalorder %s85, 1
      %p706 = por %p704, %p705
      %p708 = scmp.ne.s32.totalorder %s693, %s707
      %p709 = scmp.eq.s32.totalorder %s85, 0
      %p710 = por %p708, %p709
      %s711 = ssub.s32 %s79, %s86
      %p712 = scmp.eq.s32.totalorder %s711, 0
      %s714 = sadd.s32 %s713, 1
      %s715 = scalar_select %p712, %s713, %s714
      %p718 = pneg %p712
      %p719 = scmp.eq.s32.totalorder %s79, 1
      %p720 = por %p718, %p719
      %p721 = scmp.ne.s32.totalorder %s713, %s716
      %p722 = scmp.eq.s32.totalorder %s79, 0
      %p723 = por %p721, %p722
      %p724 = scmp.ne.s32.totalorder %s713, %s716
      %p725 = scmp.eq.s32.totalorder %s84, 1
      %p726 = por %p724, %p725
      %p727 = scmp.ne.s32.totalorder %s716, %s717
      %p728 = scmp.eq.s32.totalorder %s84, 0
      %p729 = por %p727, %p728
      %p730 = scmp.ne.s32.totalorder %s716, %s717
      %p731 = scmp.eq.s32.totalorder %s85, 1
      %p732 = por %p730, %p731
      %p734 = scmp.ne.s32.totalorder %s717, %s733
      %p735 = scmp.eq.s32.totalorder %s85, 0
      %p736 = por %p734, %p735
      %p737 = scmp.le.s32.totalorder 1, %s79
      %p738 = scmp.lt.s32.totalorder %s79, 3
      %p739 = pnand %p737, %p738
      %p740 = pneg %p739
      // Predicated region
      $region9: #{tpu_custom_call.1} parent=5 // pred_check
        _
      $region10: #{tpu_custom_call.1} parent=5 // pred_check_branch
        %742 = sbr.rel (%p739) target = $region12
      $region11: #{tpu_custom_call.1} parent=5 // pred_region
        %s743 = ssub.s32 %s79, 1
        // Predicated region
        $region13: #{tpu_custom_call.1} parent=11 // pred_check
          %p744 = pneg %p178
        $region14: #{tpu_custom_call.1} parent=11 // pred_check_branch
          %746 = sbr.rel (%p744) target = $region16
        $region15: #{tpu_custom_call.1} parent=11 // pred_region
          _
        $region16: #{tpu_custom_call.1} parent=11 // pred_fallthru
          _
        // Predicated region
        $region17: #{tpu_custom_call.1} parent=11 // pred_check
          %p747 = pneg %p199
        $region18: #{tpu_custom_call.1} parent=11 // pred_check_branch
          %749 = sbr.rel (%p747) target = $region20
        $region19: #{tpu_custom_call.1} parent=11 // pred_region
          %s751 = ssub.s32 16, 16
          %752 = vsyncadd [#allocation6], %s751
          %s754 = sshll.u32 [#allocation5], 4
          %s755 = int_to_ptr.vmem [resolvable:$true] %s754
          %757 = dma.hbm_to_vmem [thread:$0]  %s9, 16, %s755, [#allocation6]
        $region20: #{tpu_custom_call.1} parent=11 // pred_fallthru
          _
        // Predicated region
        $region21: #{tpu_custom_call.1} parent=11 // pred_check
          %p758 = pneg %p220
        $region22: #{tpu_custom_call.1} parent=11 // pred_check_branch
          %760 = sbr.rel (%p758) target = $region24
        $region23: #{tpu_custom_call.1} parent=11 // pred_region
          %s762 = ssub.s32 256, 256
          %763 = vsyncadd [#allocation6], %s762
          %s764 = sshll.u32 [#allocation7], 4
          %s765 = int_to_ptr.vmem [resolvable:$true] %s764
          %770 = dma.hbm_to_vmem [thread:$0]  %s11, 256, %s765, [#allocation6], 64, 64, 4
        $region24: #{tpu_custom_call.1} parent=11 // pred_fallthru
          _
        // Predicated region
        $region25: #{tpu_custom_call.1} parent=11 // pred_check
          %p771 = pneg %p241
        $region26: #{tpu_custom_call.1} parent=11 // pred_check_branch
          %773 = sbr.rel (%p771) target = $region28
        $region27: #{tpu_custom_call.1} parent=11 // pred_region
          %s775 = ssub.s32 16, 16
          %776 = vsyncadd [#allocation9], %s775
          %s778 = sshll.u32 [#allocation8], 4
          %s779 = int_to_ptr.vmem [resolvable:$true] %s778
          %781 = dma.hbm_to_vmem [thread:$0]  %s13, 16, %s779, [#allocation9]
        $region28: #{tpu_custom_call.1} parent=11 // pred_fallthru
          _
        // Predicated region
        $region29: #{tpu_custom_call.1} parent=11 // pred_check
          %p782 = pneg %p262
        $region30: #{tpu_custom_call.1} parent=11 // pred_check_branch
          %784 = sbr.rel (%p782) target = $region32
        $region31: #{tpu_custom_call.1} parent=11 // pred_region
          %s786 = ssub.s32 256, 256
          %787 = vsyncadd [#allocation9], %s786
          %s788 = sshll.u32 [#allocation10], 4
          %s789 = int_to_ptr.vmem [resolvable:$true] %s788
          %794 = dma.hbm_to_vmem [thread:$0]  %s15, 256, %s789, [#allocation9], 64, 64, 4
        $region32: #{tpu_custom_call.1} parent=11 // pred_fallthru
          _
        // Predicated region
        $region33: #{tpu_custom_call.1} parent=11 // pred_check
          %p795 = pneg %p283
        $region34: #{tpu_custom_call.1} parent=11 // pred_check_branch
          %797 = sbr.rel (%p795) target = $region36
        $region35: #{tpu_custom_call.1} parent=11 // pred_region
          %s799 = ssub.s32 16, 16
          %800 = vsyncadd [#allocation12], %s799
          %s802 = sshll.u32 [#allocation11], 4
          %s803 = int_to_ptr.vmem [resolvable:$true] %s802
          %805 = dma.hbm_to_vmem [thread:$0]  %s17, 16, %s803, [#allocation12]
        $region36: #{tpu_custom_call.1} parent=11 // pred_fallthru
          _
        // Predicated region
        $region37: #{tpu_custom_call.1} parent=11 // pred_check
          %p806 = pneg %p304
        $region38: #{tpu_custom_call.1} parent=11 // pred_check_branch
          %808 = sbr.rel (%p806) target = $region40
        $region39: #{tpu_custom_call.1} parent=11 // pred_region
          _
        $region40: #{tpu_custom_call.1} parent=11 // pred_fallthru
          _
        // Predicated region
        $region41: #{tpu_custom_call.1} parent=11 // pred_check
          %p809 = pneg %p325
        $region42: #{tpu_custom_call.1} parent=11 // pred_check_branch
          %811 = sbr.rel (%p809) target = $region44
        $region43: #{tpu_custom_call.1} parent=11 // pred_region
          %s813 = ssub.s32 16, 16
          %814 = vsyncadd [#allocation12], %s813
          %s816 = sshll.u32 [#allocation13], 4
          %s817 = int_to_ptr.vmem [resolvable:$true] %s816
          %819 = dma.hbm_to_vmem [thread:$0]  %s21, 16, %s817, [#allocation12]
        $region44: #{tpu_custom_call.1} parent=11 // pred_fallthru
          _
        // Predicated region
        $region45: #{tpu_custom_call.1} parent=11 // pred_check
          %p820 = pneg %p346
        $region46: #{tpu_custom_call.1} parent=11 // pred_check_branch
          %822 = sbr.rel (%p820) target = $region48
        $region47: #{tpu_custom_call.1} parent=11 // pred_region
          %s824 = ssub.s32 16, 16
          %825 = vsyncadd [#allocation15], %s824
          %s827 = sshll.u32 [#allocation14], 4
          %s828 = int_to_ptr.vmem [resolvable:$true] %s827
          %830 = dma.hbm_to_vmem [thread:$0]  %s23, 16, %s828, [#allocation15]
        $region48: #{tpu_custom_call.1} parent=11 // pred_fallthru
          _
        // Predicated region
        $region49: #{tpu_custom_call.1} parent=11 // pred_check
          %p831 = pneg %p367
        $region50: #{tpu_custom_call.1} parent=11 // pred_check_branch
          %833 = sbr.rel (%p831) target = $region52
        $region51: #{tpu_custom_call.1} parent=11 // pred_region
          %s835 = ssub.s32 16, 16
          %836 = vsyncadd [#allocation15], %s835
          %s838 = sshll.u32 [#allocation16], 4
          %s839 = int_to_ptr.vmem [resolvable:$true] %s838
          %841 = dma.hbm_to_vmem [thread:$0]  %s25, 16, %s839, [#allocation15]
        $region52: #{tpu_custom_call.1} parent=11 // pred_fallthru
          _
        // Predicated region
        $region53: #{tpu_custom_call.1} parent=11 // pred_check
          %p842 = pneg %p388
        $region54: #{tpu_custom_call.1} parent=11 // pred_check_branch
          %844 = sbr.rel (%p842) target = $region56
        $region55: #{tpu_custom_call.1} parent=11 // pred_region
          %s846 = ssub.s32 256, 256
          %847 = vsyncadd [#allocation18], %s846
          %s848 = sshll.u32 [#allocation17], 4
          %s849 = int_to_ptr.vmem [resolvable:$true] %s848
          %854 = dma.hbm_to_vmem [thread:$0]  %s27, 256, %s849, [#allocation18], 64, 64, 4
        $region56: #{tpu_custom_call.1} parent=11 // pred_fallthru
          _
        // Predicated region
        $region57: #{tpu_custom_call.1} parent=11 // pred_check
          %p855 = pneg %p409
        $region58: #{tpu_custom_call.1} parent=11 // pred_check_branch
          %857 = sbr.rel (%p855) target = $region60
        $region59: #{tpu_custom_call.1} parent=11 // pred_region
          %s859 = ssub.s32 16, 16
          %860 = vsyncadd [#allocation18], %s859
          %s862 = sshll.u32 [#allocation19], 4
          %s863 = int_to_ptr.vmem [resolvable:$true] %s862
          %865 = dma.hbm_to_vmem [thread:$0]  %s29, 16, %s863, [#allocation18]
        $region60: #{tpu_custom_call.1} parent=11 // pred_fallthru
          _
        // Predicated region
        $region61: #{tpu_custom_call.1} parent=11 // pred_check
          %p866 = pneg %p430
        $region62: #{tpu_custom_call.1} parent=11 // pred_check_branch
          %868 = sbr.rel (%p866) target = $region64
        $region63: #{tpu_custom_call.1} parent=11 // pred_region
          %s870 = ssub.s32 256, 256
          %871 = vsyncadd [#allocation21], %s870
          %s872 = sshll.u32 [#allocation20], 4
          %s873 = int_to_ptr.vmem [resolvable:$true] %s872
          %878 = dma.hbm_to_vmem [thread:$0]  %s31, 256, %s873, [#allocation21], 64, 64, 4
        $region64: #{tpu_custom_call.1} parent=11 // pred_fallthru
          _
        // Predicated region
        $region65: #{tpu_custom_call.1} parent=11 // pred_check
          %p879 = pneg %p451
        $region66: #{tpu_custom_call.1} parent=11 // pred_check_branch
          %881 = sbr.rel (%p879) target = $region68
        $region67: #{tpu_custom_call.1} parent=11 // pred_region
          %s883 = ssub.s32 16, 16
          %884 = vsyncadd [#allocation21], %s883
          %s886 = sshll.u32 [#allocation22], 4
          %s887 = int_to_ptr.vmem [resolvable:$true] %s886
          %889 = dma.hbm_to_vmem [thread:$0]  %s33, 16, %s887, [#allocation21]
        $region68: #{tpu_custom_call.1} parent=11 // pred_fallthru
          _
        // Predicated region
        $region69: #{tpu_custom_call.1} parent=11 // pred_check
          %p890 = pneg %p472
        $region70: #{tpu_custom_call.1} parent=11 // pred_check_branch
          %892 = sbr.rel (%p890) target = $region72
        $region71: #{tpu_custom_call.1} parent=11 // pred_region
          %s894 = ssub.s32 256, 256
          %895 = vsyncadd [#allocation24], %s894
          %s896 = sshll.u32 [#allocation23], 4
          %s897 = int_to_ptr.vmem [resolvable:$true] %s896
          %902 = dma.hbm_to_vmem [thread:$0]  %s35, 256, %s897, [#allocation24], 64, 64, 4
        $region72: #{tpu_custom_call.1} parent=11 // pred_fallthru
          _
        // Predicated region
        $region73: #{tpu_custom_call.1} parent=11 // pred_check
          %p903 = pneg %p493
        $region74: #{tpu_custom_call.1} parent=11 // pred_check_branch
          %905 = sbr.rel (%p903) target = $region76
        $region75: #{tpu_custom_call.1} parent=11 // pred_region
          %s907 = ssub.s32 16, 16
          %908 = vsyncadd [#allocation24], %s907
          %s910 = sshll.u32 [#allocation25], 4
          %s911 = int_to_ptr.vmem [resolvable:$true] %s910
          %913 = dma.hbm_to_vmem [thread:$0]  %s37, 16, %s911, [#allocation24]
        $region76: #{tpu_custom_call.1} parent=11 // pred_fallthru
          _
        // Predicated region
        $region77: #{tpu_custom_call.1} parent=11 // pred_check
          %p914 = pneg %p514
        $region78: #{tpu_custom_call.1} parent=11 // pred_check_branch
          %916 = sbr.rel (%p914) target = $region80
        $region79: #{tpu_custom_call.1} parent=11 // pred_region
          %s918 = ssub.s32 256, 256
          %919 = vsyncadd [#allocation27], %s918
          %s920 = sshll.u32 [#allocation26], 4
          %s921 = int_to_ptr.vmem [resolvable:$true] %s920
          %926 = dma.hbm_to_vmem [thread:$0]  %s39, 256, %s921, [#allocation27], 64, 64, 4
        $region80: #{tpu_custom_call.1} parent=11 // pred_fallthru
          _
        // Predicated region
        $region81: #{tpu_custom_call.1} parent=11 // pred_check
          %p927 = pneg %p535
        $region82: #{tpu_custom_call.1} parent=11 // pred_check_branch
          %929 = sbr.rel (%p927) target = $region84
        $region83: #{tpu_custom_call.1} parent=11 // pred_region
          _
        $region84: #{tpu_custom_call.1} parent=11 // pred_fallthru
          _
        // Predicated region
        $region85: #{tpu_custom_call.1} parent=11 // pred_check
          %p930 = pneg %p556
        $region86: #{tpu_custom_call.1} parent=11 // pred_check_branch
          %932 = sbr.rel (%p930) target = $region88
        $region87: #{tpu_custom_call.1} parent=11 // pred_region
          _
        $region88: #{tpu_custom_call.1} parent=11 // pred_fallthru
          _
        // Predicated region
        $region89: #{tpu_custom_call.1} parent=11 // pred_check
          %p933 = pneg %p577
        $region90: #{tpu_custom_call.1} parent=11 // pred_check_branch
          %935 = sbr.rel (%p933) target = $region92
        $region91: #{tpu_custom_call.1} parent=11 // pred_region
          _
        $region92: #{tpu_custom_call.1} parent=11 // pred_fallthru
          _
        // Predicated region
        $region93: #{tpu_custom_call.1} parent=11 // pred_check
          %p936 = pneg %p598
        $region94: #{tpu_custom_call.1} parent=11 // pred_check_branch
          %938 = sbr.rel (%p936) target = $region96
        $region95: #{tpu_custom_call.1} parent=11 // pred_region
          %s940 = ssub.s32 256, 256
          %941 = vsyncadd [#allocation27], %s940
          %s942 = sshll.u32 [#allocation28], 4
          %s943 = int_to_ptr.vmem [resolvable:$true] %s942
          %948 = dma.hbm_to_vmem [thread:$0]  %s47, 256, %s943, [#allocation27], 64, 64, 4
        $region96: #{tpu_custom_call.1} parent=11 // pred_fallthru
          _
        // Predicated region
        $region97: #{tpu_custom_call.1} parent=11 // pred_check
          %p949 = pneg %p619
        $region98: #{tpu_custom_call.1} parent=11 // pred_check_branch
          %951 = sbr.rel (%p949) target = $region100
        $region99: #{tpu_custom_call.1} parent=11 // pred_region
          _
        $region100: #{tpu_custom_call.1} parent=11 // pred_fallthru
          _
        // Predicated region
        $region101: #{tpu_custom_call.1} parent=11 // pred_check
          %p952 = pneg %p640
        $region102: #{tpu_custom_call.1} parent=11 // pred_check_branch
          %954 = sbr.rel (%p952) target = $region104
        $region103: #{tpu_custom_call.1} parent=11 // pred_region
          _
        $region104: #{tpu_custom_call.1} parent=11 // pred_fallthru
          _
        // Predicated region
        $region105: #{tpu_custom_call.1} parent=11 // pred_check
          %p955 = pneg %p661
        $region106: #{tpu_custom_call.1} parent=11 // pred_check_branch
          %957 = sbr.rel (%p955) target = $region108
        $region107: #{tpu_custom_call.1} parent=11 // pred_region
          _
        $region108: #{tpu_custom_call.1} parent=11 // pred_fallthru
          _
        // Predicated region
        $region109: #{tpu_custom_call.1} parent=11 // pred_check
          %p958 = pneg %p682
        $region110: #{tpu_custom_call.1} parent=11 // pred_check_branch
          %960 = sbr.rel (%p958) target = $region112
        $region111: #{tpu_custom_call.1} parent=11 // pred_region
          _
        $region112: #{tpu_custom_call.1} parent=11 // pred_fallthru
          _
        // Predicated region
        $region113: #{tpu_custom_call.1} parent=11 // pred_check
          %p961 = pneg %p703
        $region114: #{tpu_custom_call.1} parent=11 // pred_check_branch
          %963 = sbr.rel (%p961) target = $region116
        $region115: #{tpu_custom_call.1} parent=11 // pred_region
          _
        $region116: #{tpu_custom_call.1} parent=11 // pred_fallthru
          _
      $region12: #{tpu_custom_call.1} parent=5 // pred_fallthru
        _
      %p964 = scmp.lt.s32.totalorder %s79, 2
      // Predicated region
      $region117: #{tpu_custom_call.1} parent=5 // pred_check
        %p965 = pneg %p964
      $region118: #{tpu_custom_call.1} parent=5 // pred_check_branch
        %967 = sbr.rel (%p965) target = $region120
      $region119: #{tpu_custom_call.1} parent=5 // pred_region
        // Predicated region
        $region121: #{tpu_custom_call.1} parent=119 // pred_check
          %p968 = pneg %p99
        $region122: #{tpu_custom_call.1} parent=119 // pred_check_branch
          %970 = sbr.rel (%p968) target = $region124
        $region123: #{tpu_custom_call.1} parent=119 // pred_region
          %p971 = scmp.lt.s32.totalorder %s79, 1
          %s972 = scalar_select %p971, %s79, 1
          %s973 = smul.addr %s972, 8
          %s974 = scalar_lea.vmem %s1, %s973
        $region124: #{tpu_custom_call.1} parent=119 // pred_fallthru
          _
        // Predicated region
        $region125: #{tpu_custom_call.1} parent=119 // pred_check
          %p975 = pneg %p125
        $region126: #{tpu_custom_call.1} parent=119 // pred_check_branch
          %977 = sbr.rel (%p975) target = $region128
        $region127: #{tpu_custom_call.1} parent=119 // pred_region
          %p978 = scmp.lt.s32.totalorder %s79, 1
          %s979 = scalar_select %p978, %s79, 1
          %s980 = smul.addr %s979, 8
          %s981 = scalar_lea.vmem %s3, %s980
        $region128: #{tpu_custom_call.1} parent=119 // pred_fallthru
          _
        // Predicated region
        $region129: #{tpu_custom_call.1} parent=119 // pred_check
          %p982 = pneg %p151
        $region130: #{tpu_custom_call.1} parent=119 // pred_check_branch
          %984 = sbr.rel (%p982) target = $region132
        $region131: #{tpu_custom_call.1} parent=119 // pred_region
          %s985 = sand.u32 %s141, 1
          %s986 = scalar_lea.sflag [#allocation3], %s985
          %s987 = sand.u32 %s141, 1
          %s988 = smul.addr %s987, 2
          %s989 = scalar_lea.vmem [#allocation2], %s988
          %s991 = ssub.s32 32, 32
          %992 = vsyncadd %s986, %s991
          %s993 = smul.addr %s79, 32
          %s994 = scalar_lea.hbm %s5, %s993
          %s996 = sshll.u32 %s989, 4
          %s997 = int_to_ptr.vmem [resolvable:$true] %s996
          %999 = dma.hbm_to_vmem [thread:$0]  %s994, 32, %s997, %s986
        $region132: #{tpu_custom_call.1} parent=119 // pred_fallthru
          _
      $region120: #{tpu_custom_call.1} parent=5 // pred_fallthru
        _
      %p1000 = scmp.le.s32.totalorder 1, %s79
      %p1001 = scmp.lt.s32.totalorder %s79, 3
      %p1002 = pnand %p1000, %p1001
      %p1003 = pneg %p1002
      // Predicated region
      $region133: #{tpu_custom_call.1} parent=5 // pred_check
        _
      $region134: #{tpu_custom_call.1} parent=5 // pred_check_branch
        %1005 = sbr.rel (%p1002) target = $region136
      $region135: #{tpu_custom_call.1} parent=5 // pred_region
        %s1006 = ssub.s32 %s79, 1
        %s1007 = sand.u32 %s144, 1
        %s1008 = scalar_lea.sflag [#allocation3], %s1007
        %s1009 = sand.u32 %s144, 1
        %s1010 = smul.addr %s1009, 2
        %s1011 = scalar_lea.vmem [#allocation2], %s1010
        // Predicated region
        $region137: #{tpu_custom_call.1} parent=135 // pred_check
          %p1012 = pneg %p157
        $region138: #{tpu_custom_call.1} parent=135 // pred_check_branch
          %1014 = sbr.rel (%p1012) target = $region140
        $region139: #{tpu_custom_call.1} parent=135 // pred_region
          %1015 = dma.done %s1008, 32
        $region140: #{tpu_custom_call.1} parent=135 // pred_fallthru
          _
        // Predicated region
        $region141: #{tpu_custom_call.1} parent=135 // pred_check
          %p1016 = pneg %p199
        $region142: #{tpu_custom_call.1} parent=135 // pred_check_branch
          %1018 = sbr.rel (%p1016) target = $region144
        $region143: #{tpu_custom_call.1} parent=135 // pred_region
          %1019 = dma.done [#allocation6], 16
        $region144: #{tpu_custom_call.1} parent=135 // pred_fallthru
          _
        // Predicated region
        $region145: #{tpu_custom_call.1} parent=135 // pred_check
          %p1020 = pneg %p220
        $region146: #{tpu_custom_call.1} parent=135 // pred_check_branch
          %1022 = sbr.rel (%p1020) target = $region148
        $region147: #{tpu_custom_call.1} parent=135 // pred_region
          %1023 = dma.done [#allocation6], 256
        $region148: #{tpu_custom_call.1} parent=135 // pred_fallthru
          _
        // Predicated region
        $region149: #{tpu_custom_call.1} parent=135 // pred_check
          %p1024 = pneg %p241
        $region150: #{tpu_custom_call.1} parent=135 // pred_check_branch
          %1026 = sbr.rel (%p1024) target = $region152
        $region151: #{tpu_custom_call.1} parent=135 // pred_region
          %1027 = dma.done [#allocation9], 16
        $region152: #{tpu_custom_call.1} parent=135 // pred_fallthru
          _
        // Predicated region
        $region153: #{tpu_custom_call.1} parent=135 // pred_check
          %p1028 = pneg %p262
        $region154: #{tpu_custom_call.1} parent=135 // pred_check_branch
          %1030 = sbr.rel (%p1028) target = $region156
        $region155: #{tpu_custom_call.1} parent=135 // pred_region
          %1031 = dma.done [#allocation9], 256
        $region156: #{tpu_custom_call.1} parent=135 // pred_fallthru
          _
        // Predicated region
        $region157: #{tpu_custom_call.1} parent=135 // pred_check
          %p1032 = pneg %p283
        $region158: #{tpu_custom_call.1} parent=135 // pred_check_branch
          %1034 = sbr.rel (%p1032) target = $region160
        $region159: #{tpu_custom_call.1} parent=135 // pred_region
          %1035 = dma.done [#allocation12], 16
        $region160: #{tpu_custom_call.1} parent=135 // pred_fallthru
          _
        // Predicated region
        $region161: #{tpu_custom_call.1} parent=135 // pred_check
          %p1036 = pneg %p325
        $region162: #{tpu_custom_call.1} parent=135 // pred_check_branch
          %1038 = sbr.rel (%p1036) target = $region164
        $region163: #{tpu_custom_call.1} parent=135 // pred_region
          %1039 = dma.done [#allocation12], 16
        $region164: #{tpu_custom_call.1} parent=135 // pred_fallthru
          _
        // Predicated region
        $region165: #{tpu_custom_call.1} parent=135 // pred_check
          %p1040 = pneg %p346
        $region166: #{tpu_custom_call.1} parent=135 // pred_check_branch
          %1042 = sbr.rel (%p1040) target = $region168
        $region167: #{tpu_custom_call.1} parent=135 // pred_region
          %1043 = dma.done [#allocation15], 16
        $region168: #{tpu_custom_call.1} parent=135 // pred_fallthru
          _
        // Predicated region
        $region169: #{tpu_custom_call.1} parent=135 // pred_check
          %p1044 = pneg %p367
        $region170: #{tpu_custom_call.1} parent=135 // pred_check_branch
          %1046 = sbr.rel (%p1044) target = $region172
        $region171: #{tpu_custom_call.1} parent=135 // pred_region
          %1047 = dma.done [#allocation15], 16
        $region172: #{tpu_custom_call.1} parent=135 // pred_fallthru
          _
        // Predicated region
        $region173: #{tpu_custom_call.1} parent=135 // pred_check
          %p1048 = pneg %p388
        $region174: #{tpu_custom_call.1} parent=135 // pred_check_branch
          %1050 = sbr.rel (%p1048) target = $region176
        $region175: #{tpu_custom_call.1} parent=135 // pred_region
          %1051 = dma.done [#allocation18], 256
        $region176: #{tpu_custom_call.1} parent=135 // pred_fallthru
          _
        // Predicated region
        $region177: #{tpu_custom_call.1} parent=135 // pred_check
          %p1052 = pneg %p409
        $region178: #{tpu_custom_call.1} parent=135 // pred_check_branch
          %1054 = sbr.rel (%p1052) target = $region180
        $region179: #{tpu_custom_call.1} parent=135 // pred_region
          %1055 = dma.done [#allocation18], 16
        $region180: #{tpu_custom_call.1} parent=135 // pred_fallthru
          _
        // Predicated region
        $region181: #{tpu_custom_call.1} parent=135 // pred_check
          %p1056 = pneg %p430
        $region182: #{tpu_custom_call.1} parent=135 // pred_check_branch
          %1058 = sbr.rel (%p1056) target = $region184
        $region183: #{tpu_custom_call.1} parent=135 // pred_region
          %1059 = dma.done [#allocation21], 256
        $region184: #{tpu_custom_call.1} parent=135 // pred_fallthru
          _
        // Predicated region
        $region185: #{tpu_custom_call.1} parent=135 // pred_check
          %p1060 = pneg %p451
        $region186: #{tpu_custom_call.1} parent=135 // pred_check_branch
          %1062 = sbr.rel (%p1060) target = $region188
        $region187: #{tpu_custom_call.1} parent=135 // pred_region
          %1063 = dma.done [#allocation21], 16
        $region188: #{tpu_custom_call.1} parent=135 // pred_fallthru
          _
        // Predicated region
        $region189: #{tpu_custom_call.1} parent=135 // pred_check
          %p1064 = pneg %p472
        $region190: #{tpu_custom_call.1} parent=135 // pred_check_branch
          %1066 = sbr.rel (%p1064) target = $region192
        $region191: #{tpu_custom_call.1} parent=135 // pred_region
          %1067 = dma.done [#allocation24], 256
        $region192: #{tpu_custom_call.1} parent=135 // pred_fallthru
          _
        // Predicated region
        $region193: #{tpu_custom_call.1} parent=135 // pred_check
          %p1068 = pneg %p493
        $region194: #{tpu_custom_call.1} parent=135 // pred_check_branch
          %1070 = sbr.rel (%p1068) target = $region196
        $region195: #{tpu_custom_call.1} parent=135 // pred_region
          %1071 = dma.done [#allocation24], 16
        $region196: #{tpu_custom_call.1} parent=135 // pred_fallthru
          _
        // Predicated region
        $region197: #{tpu_custom_call.1} parent=135 // pred_check
          %p1072 = pneg %p514
        $region198: #{tpu_custom_call.1} parent=135 // pred_check_branch
          %1074 = sbr.rel (%p1072) target = $region200
        $region199: #{tpu_custom_call.1} parent=135 // pred_region
          %1075 = dma.done [#allocation27], 256
        $region200: #{tpu_custom_call.1} parent=135 // pred_fallthru
          _
        // Predicated region
        $region201: #{tpu_custom_call.1} parent=135 // pred_check
          %p1076 = pneg %p598
        $region202: #{tpu_custom_call.1} parent=135 // pred_check_branch
          %1078 = sbr.rel (%p1076) target = $region204
        $region203: #{tpu_custom_call.1} parent=135 // pred_region
          %1079 = dma.done [#allocation27], 256
        $region204: #{tpu_custom_call.1} parent=135 // pred_fallthru
          _
        %p1080 = scmp.lt.s32.totalorder %s84, 1
        %s1081 = scalar_select %p1080, %s84, 1
        %s1082 = smul.addr %s1081, 8
        %s1083 = scalar_lea.vmem %s1, %s1082
        %p1084 = pneg %p105
        %p1085 = pneg %p102
        %p1086 = scmp.lt.s32.totalorder %s84, 1
        %s1087 = scalar_select %p1086, %s84, 1
        %s1088 = smul.addr %s1087, 8
        %s1089 = scalar_lea.vmem %s3, %s1088
        %p1090 = pneg %p131
        %p1091 = pneg %p128
        %s1092 = sand.u32 %s144, 1
        %s1093 = scalar_lea.sflag [#allocation3], %s1092
        %s1094 = sand.u32 %s144, 1
        %s1095 = smul.addr %s1094, 2
        %s1096 = scalar_lea.vmem [#allocation2], %s1095
        %p1097 = pneg %p157
        %p1098 = pneg %p154
        %p1099 = pneg %p178
        %p1100 = pneg %p175
        %p1101 = pneg %p199
        %p1102 = pneg %p196
        %p1103 = pneg %p220
        %p1104 = pneg %p217
        %p1105 = pneg %p241
        %p1106 = pneg %p238
        %p1107 = pneg %p262
        %p1108 = pneg %p259
        %p1109 = pneg %p283
        %p1110 = pneg %p280
        %p1111 = pneg %p304
        %p1112 = pneg %p301
        %p1113 = pneg %p325
        %p1114 = pneg %p322
        %p1115 = pneg %p346
        %p1116 = pneg %p343
        %p1117 = pneg %p367
        %p1118 = pneg %p364
        %p1119 = pneg %p388
        %p1120 = pneg %p385
        %p1121 = pneg %p409
        %p1122 = pneg %p406
        %p1123 = pneg %p430
        %p1124 = pneg %p427
        %p1125 = pneg %p451
        %p1126 = pneg %p448
        %p1127 = pneg %p472
        %p1128 = pneg %p469
        %p1129 = pneg %p493
        %p1130 = pneg %p490
        %p1131 = pneg %p514
        %p1132 = pneg %p511
        %p1133 = pneg %p535
        %p1134 = pneg %p532
        %p1135 = pneg %p556
        %p1136 = pneg %p553
        %p1137 = pneg %p577
        %p1138 = pneg %p574
        %p1139 = pneg %p598
        %p1140 = pneg %p595
        %p1141 = pneg %p619
        %p1142 = pneg %p616
        %p1143 = pneg %p640
        %p1144 = pneg %p637
        %p1145 = pneg %p661
        %p1146 = pneg %p658
        %p1147 = pneg %p682
        %p1148 = pneg %p679
        %p1149 = pneg %p703
        %p1150 = pneg %p700
        %p1151 = pneg %p729
        %p1152 = pneg %p726
        %s1153 = sand.u32 %s716, 1
        %s1154 = scalar_lea.sflag [#allocation4], %s1153
        %s1155 = sand.u32 %s716, 1
        %s1156 = smul.addr %s1155, 8
        %s1157 = scalar_lea.vmem [#allocation29], %s1156
        %p1158 = scmp.lt.s32.totalorder %s84, 1
        %s1159 = scalar_select %p1158, %s84, 1
        %s1160 = smul.addr %s1159, 8
        %s1161 = scalar_lea.vmem %s1, %s1160
        %p1162 = scmp.lt.s32.totalorder %s84, 1
        %s1163 = scalar_select %p1162, %s84, 1
        %s1164 = smul.addr %s1163, 8
        %s1165 = scalar_lea.vmem %s3, %s1164
        %v1169 = vld [vmem:[%s1161] sm:$0xff]
        %v1170 = vpack.c.bf16 %v1169, %v1169
        %v1171 = vld [vmem:[%s1165] sm:$0xff]
        %v1172 = vpack.c.bf16 %v1171, %v1171
        %v1173 = vld [vmem:[%s7] sm:$0xf]
        %v1174 = vld [vmem:[%s7 + $0x4] sm:$0xf]
        %v1175 = vld [vmem:[%s7 + $0x8] sm:$0xf]
        %v1176 = vld [vmem:[%s7 + $0xc] sm:$0xf]
        %v1177 = vld [vmem:[#allocation5] sm:$0x1]
        %v1179 = vlaneseq
        %v1180 = vshrl.u32 %v1179, 7
        %v1181 = vsub.s32 0, %v1180
        %v1182 = vrot.slane %v1177, %v1181
        %v1188 = vunpack.c.l.b16 %v1173
        %v1189 = vunpack.c.l.b16 %v1174
        %v1190 = vunpack.c.l.b16 %v1175
        %v1191 = vunpack.c.l.b16 %v1176
        %v1192 = vpack.c.b16 %v1189, %v1188
        %v1193 = vpack.c.b16 %v1191, %v1190
        %vm1196 = vcmask 261120
        %v1198 = vsel %vm1196, %v1170, 0
        %1200 = vmatprep.subr.bf16.mxu0 0
        %1201 = vmatpush1.bf16.msra.mxu0 0
        %1202 = vmatprep.subr.bf16.mxu0 0
        %1203 = vmatpush1.bf16.msra.mxu0 0
        %1204 = vmatprep.subr.bf16.mxu0 0
        %1205 = vmatpush1.bf16.msra.mxu0 0
        %1206 = vmatprep.subr.bf16.mxu0 0
        %1207 = vmatpush1.bf16.msra.mxu0 0
        %1208 = vmatprep.subr.bf16.mxu0 0
        %1209 = vmatpush1.bf16.msra.mxu0 0
        %1210 = vmatprep.subr.bf16.mxu0 0
        %1211 = vmatpush1.bf16.msra.mxu0 0
        %1212 = vmatprep.subr.bf16.mxu0 0
        %1213 = vmatpush1.bf16.msra.mxu0 %v1193
        %1214 = vmatprep.subr.bf16.mxu0 0
        %1215 = vmatpush1.bf16.msra.mxu0 %v1192
        %1216 = vmatprep.subr.bf16.mxu0 0
        %1217 = vmatpush2.bf16.msra.mxu0 0
        %1218 = vmatprep.subr.bf16.mxu0 0
        %1219 = vmatpush2.bf16.msra.mxu0 0
        %1220 = vmatprep.subr.bf16.mxu0 0
        %1221 = vmatpush2.bf16.msra.mxu0 0
        %1222 = vmatprep.subr.bf16.mxu0 0
        %1223 = vmatpush2.bf16.msra.mxu0 0
        %1224 = vmatprep.subr.bf16.mxu0 0
        %1225 = vmatpush2.bf16.msra.mxu0 0
        %1226 = vmatprep.subr.bf16.mxu0 0
        %1227 = vmatpush2.bf16.msra.mxu0 0
        %1228 = vmatprep.subr.bf16.mxu0 0
        %1229 = vmatpush2.bf16.msra.mxu0 0
        %1230 = vmatprep.subr.bf16.mxu0 0
        %1231 = vmatpush2.bf16.msra.mxu0 0
        %1232 = vmatprep.mubr.bf16.mxu0 0
        %1233 = vmatmul.mubr.bf16.gmra.mxu0 %v1198
        %v1234 = vpop.f32.mrf.mxu0
        %v1235 = vadd.f32 %v1182, %v1234
        %v1236 = vpop.f32.mrf.mxu0
        %v1237 = vpop.f32.mrf.mxu0
        %v1238 = vpop.f32.mrf.mxu0
        %1239 = vdwg.mxu0
        %v1240 = vpack.c.bf16 %v1235, %v1235
        %v1241 = vld [vmem:[#allocation7] sm:$0xf]
        %v1242 = vld [vmem:[#allocation7 + $0x4] sm:$0xf]
        %v1243 = vld [vmem:[#allocation7 + $0x8] sm:$0xf]
        %v1244 = vld [vmem:[#allocation7 + $0xc] sm:$0xf]
        %v1245 = vld [vmem:[#allocation8] sm:$0x1]
        %v1247 = vlaneseq
        %v1248 = vshrl.u32 %v1247, 7
        %v1249 = vsub.s32 0, %v1248
        %v1250 = vrot.slane %v1245, %v1249
        %v1256 = vunpack.c.l.b16 %v1241
        %v1257 = vunpack.c.l.b16 %v1242
        %v1258 = vunpack.c.l.b16 %v1243
        %v1259 = vunpack.c.l.b16 %v1244
        %v1260 = vpack.c.b16 %v1257, %v1256
        %v1261 = vpack.c.b16 %v1259, %v1258
        %1264 = vmatprep.subr.bf16.mxu0 0
        %1265 = vmatpush1.bf16.msra.mxu0 0
        %1266 = vmatprep.subr.bf16.mxu0 0
        %1267 = vmatpush1.bf16.msra.mxu0 0
        %1268 = vmatprep.subr.bf16.mxu0 0
        %1269 = vmatpush1.bf16.msra.mxu0 0
        %1270 = vmatprep.subr.bf16.mxu0 0
        %1271 = vmatpush1.bf16.msra.mxu0 0
        %1272 = vmatprep.subr.bf16.mxu0 0
        %1273 = vmatpush1.bf16.msra.mxu0 0
        %1274 = vmatprep.subr.bf16.mxu0 0
        %1275 = vmatpush1.bf16.msra.mxu0 0
        %1276 = vmatprep.subr.bf16.mxu0 0
        %1277 = vmatpush1.bf16.msra.mxu0 %v1261
        %1278 = vmatprep.subr.bf16.mxu0 0
        %1279 = vmatpush1.bf16.msra.mxu0 %v1260
        %1280 = vmatprep.subr.bf16.mxu0 0
        %1281 = vmatpush2.bf16.msra.mxu0 0
        %1282 = vmatprep.subr.bf16.mxu0 0
        %1283 = vmatpush2.bf16.msra.mxu0 0
        %1284 = vmatprep.subr.bf16.mxu0 0
        %1285 = vmatpush2.bf16.msra.mxu0 0
        %1286 = vmatprep.subr.bf16.mxu0 0
        %1287 = vmatpush2.bf16.msra.mxu0 0
        %1288 = vmatprep.subr.bf16.mxu0 0
        %1289 = vmatpush2.bf16.msra.mxu0 0
        %1290 = vmatprep.subr.bf16.mxu0 0
        %1291 = vmatpush2.bf16.msra.mxu0 0
        %1292 = vmatprep.subr.bf16.mxu0 0
        %1293 = vmatpush2.bf16.msra.mxu0 0
        %1294 = vmatprep.subr.bf16.mxu0 0
        %1295 = vmatpush2.bf16.msra.mxu0 0
        %1296 = vmatprep.mubr.bf16.mxu0 0
        %1297 = vmatmul.mubr.bf16.gmra.mxu0 %v1198
        %v1298 = vpop.f32.mrf.mxu0
        %v1299 = vadd.f32 %v1250, %v1298
        %v1300 = vpop.f32.mrf.mxu0
        %v1301 = vpop.f32.mrf.mxu0
        %v1302 = vpop.f32.mrf.mxu0
        %1303 = vdwg.mxu0
        %v1304 = vpack.c.bf16 %v1299, %v1299
        %v1305 = vld [vmem:[#allocation10] sm:$0xf]
        %v1306 = vld [vmem:[#allocation10 + $0x4] sm:$0xf]
        %v1307 = vld [vmem:[#allocation10 + $0x8] sm:$0xf]
        %v1308 = vld [vmem:[#allocation10 + $0xc] sm:$0xf]
        %v1309 = vld [vmem:[#allocation11] sm:$0x1]
        %v1311 = vlaneseq
        %v1312 = vshrl.u32 %v1311, 7
        %v1313 = vsub.s32 0, %v1312
        %v1314 = vrot.slane %v1309, %v1313
        %v1320 = vunpack.c.l.b16 %v1305
        %v1321 = vunpack.c.l.b16 %v1306
        %v1322 = vunpack.c.l.b16 %v1307
        %v1323 = vunpack.c.l.b16 %v1308
        %v1324 = vpack.c.b16 %v1321, %v1320
        %v1325 = vpack.c.b16 %v1323, %v1322
        %1328 = vmatprep.subr.bf16.mxu0 0
        %1329 = vmatpush1.bf16.msra.mxu0 0
        %1330 = vmatprep.subr.bf16.mxu0 0
        %1331 = vmatpush1.bf16.msra.mxu0 0
        %1332 = vmatprep.subr.bf16.mxu0 0
        %1333 = vmatpush1.bf16.msra.mxu0 0
        %1334 = vmatprep.subr.bf16.mxu0 0
        %1335 = vmatpush1.bf16.msra.mxu0 0
        %1336 = vmatprep.subr.bf16.mxu0 0
        %1337 = vmatpush1.bf16.msra.mxu0 0
        %1338 = vmatprep.subr.bf16.mxu0 0
        %1339 = vmatpush1.bf16.msra.mxu0 0
        %1340 = vmatprep.subr.bf16.mxu0 0
        %1341 = vmatpush1.bf16.msra.mxu0 %v1325
        %1342 = vmatprep.subr.bf16.mxu0 0
        %1343 = vmatpush1.bf16.msra.mxu0 %v1324
        %1344 = vmatprep.subr.bf16.mxu0 0
        %1345 = vmatpush2.bf16.msra.mxu0 0
        %1346 = vmatprep.subr.bf16.mxu0 0
        %1347 = vmatpush2.bf16.msra.mxu0 0
        %1348 = vmatprep.subr.bf16.mxu0 0
        %1349 = vmatpush2.bf16.msra.mxu0 0
        %1350 = vmatprep.subr.bf16.mxu0 0
        %1351 = vmatpush2.bf16.msra.mxu0 0
        %1352 = vmatprep.subr.bf16.mxu0 0
        %1353 = vmatpush2.bf16.msra.mxu0 0
        %1354 = vmatprep.subr.bf16.mxu0 0
        %1355 = vmatpush2.bf16.msra.mxu0 0
        %1356 = vmatprep.subr.bf16.mxu0 0
        %1357 = vmatpush2.bf16.msra.mxu0 0
        %1358 = vmatprep.subr.bf16.mxu0 0
        %1359 = vmatpush2.bf16.msra.mxu0 0
        %1360 = vmatprep.mubr.bf16.mxu0 0
        %1361 = vmatmul.mubr.bf16.gmra.mxu0 %v1198
        %v1362 = vpop.f32.mrf.mxu0
        %v1363 = vadd.f32 %v1314, %v1362
        %v1364 = vpop.f32.mrf.mxu0
        %v1365 = vpop.f32.mrf.mxu0
        %v1366 = vpop.f32.mrf.mxu0
        %1367 = vdwg.mxu0
        %v1368 = vpack.c.bf16 %v1363, %v1363
        %v1370 = vsel %vm1196, %v1240, 0
        %v1373 = vsel %vm1196, %v1304, 0
        %1375 = vmatprep.subr.bf16.mxu0 0
        %1376 = vmatpush1.bf16.xpose.msra.mxu0 0
        %1377 = vmatprep.subr.bf16.mxu0 0
        %1378 = vmatpush1.bf16.xpose.msra.mxu0 0
        %1379 = vmatprep.subr.bf16.mxu0 0
        %1380 = vmatpush1.bf16.xpose.msra.mxu0 0
        %1381 = vmatprep.subr.bf16.mxu0 0
        %1382 = vmatpush1.bf16.xpose.msra.mxu0 0
        %1383 = vmatprep.subr.bf16.mxu0 0
        %1384 = vmatpush1.bf16.xpose.msra.mxu0 0
        %1385 = vmatprep.subr.bf16.mxu0 0
        %1386 = vmatpush1.bf16.xpose.msra.mxu0 0
        %1387 = vmatprep.subr.bf16.mxu0 0
        %1388 = vmatpush1.bf16.xpose.msra.mxu0 0
        %1389 = vmatprep.subr.bf16.mxu0 0
        %1390 = vmatpush1.bf16.xpose.msra.mxu0 %v1373
        %1391 = vmatprep.subr.bf16.mxu0 0
        %1392 = vmatpush2.bf16.xpose.msra.mxu0 0
        %1393 = vmatprep.subr.bf16.mxu0 0
        %1394 = vmatpush2.bf16.xpose.msra.mxu0 0
        %1395 = vmatprep.subr.bf16.mxu0 0
        %1396 = vmatpush2.bf16.xpose.msra.mxu0 0
        %1397 = vmatprep.subr.bf16.mxu0 0
        %1398 = vmatpush2.bf16.xpose.msra.mxu0 0
        %1399 = vmatprep.subr.bf16.mxu0 0
        %1400 = vmatpush2.bf16.xpose.msra.mxu0 0
        %1401 = vmatprep.subr.bf16.mxu0 0
        %1402 = vmatpush2.bf16.xpose.msra.mxu0 0
        %1403 = vmatprep.subr.bf16.mxu0 0
        %1404 = vmatpush2.bf16.xpose.msra.mxu0 0
        %1405 = vmatprep.subr.bf16.mxu0 0
        %1406 = vmatpush2.bf16.xpose.msra.mxu0 0
        %1407 = vmatprep.mubr.bf16.mxu0 0
        %1408 = vmatmul.mubr.bf16.gmra.mxu0 %v1370
        %v1409 = vpop.f32.mrf.mxu0
        %v1410 = vadd.f32 0.0, %v1409
        %v1411 = vpop.f32.mrf.mxu0
        %v1412 = vpop.f32.mrf.mxu0
        %v1413 = vpop.f32.mrf.mxu0
        %1414 = vdwg.mxu0
        %v1415 = vld [vmem:[%s1011] sm:$0x3]
        %vm1416 = vnez %v1415
        %v1417 = vsel %vm1416, 16843009, 0
        %v1418 = vunpack.c.0.s8 %v1417
        %vm1419 = vcmp.ne.s32.totalorder %v1418, 0
        %v1420 = vsel %vm1419, -1e+09, %v1410
        %vm1421 = vcmask 64512
        %v1422 = vsel %vm1421, %v1420, -inf
        %1423 = vmax.xlane.f32.xlu0 %v1422
        %v1424 = vpop.xlane.xlu0 %1423
        %v1425 = vsub.f32 %v1420, %v1424
        %v1426 = vmul.f32 %v1425, 1.442695
        %v1427 = vpow.pop %v1426
        %v1428 = vsel %vm1421, %v1427, 0.0
        %1429 = vadd.xlane.f32.xlu0 %v1428
        %v1430 = vpop.xlane.xlu0 %1429
        %v1431 = vrcp.pop %v1430
        %v1432 = vmul.f32 %v1427, %v1431
        %v1433 = vpack.c.bf16 %v1432, %v1432
        %v1435 = vsel %vm1421, %v1433, 0
        %vm1437 = vcmask 1043456
        %v1439 = vsel %vm1437, %v1368, 0
        %1441 = vmatprep.subr.bf16.mxu0 0
        %1442 = vmatpush1.bf16.msra.mxu0 0
        %1443 = vmatprep.subr.bf16.mxu0 0
        %1444 = vmatpush1.bf16.msra.mxu0 0
        %1445 = vmatprep.subr.bf16.mxu0 0
        %1446 = vmatpush1.bf16.msra.mxu0 0
        %1447 = vmatprep.subr.bf16.mxu0 0
        %1448 = vmatpush1.bf16.msra.mxu0 0
        %1449 = vmatprep.subr.bf16.mxu0 0
        %1450 = vmatpush1.bf16.msra.mxu0 0
        %1451 = vmatprep.subr.bf16.mxu0 0
        %1452 = vmatpush1.bf16.msra.mxu0 0
        %1453 = vmatprep.subr.bf16.mxu0 0
        %1454 = vmatpush1.bf16.msra.mxu0 0
        %1455 = vmatprep.subr.bf16.mxu0 0
        %1456 = vmatpush1.bf16.msra.mxu0 %v1439
        %1457 = vmatprep.subr.bf16.mxu0 0
        %1458 = vmatpush2.bf16.msra.mxu0 0
        %1459 = vmatprep.subr.bf16.mxu0 0
        %1460 = vmatpush2.bf16.msra.mxu0 0
        %1461 = vmatprep.subr.bf16.mxu0 0
        %1462 = vmatpush2.bf16.msra.mxu0 0
        %1463 = vmatprep.subr.bf16.mxu0 0
        %1464 = vmatpush2.bf16.msra.mxu0 0
        %1465 = vmatprep.subr.bf16.mxu0 0
        %1466 = vmatpush2.bf16.msra.mxu0 0
        %1467 = vmatprep.subr.bf16.mxu0 0
        %1468 = vmatpush2.bf16.msra.mxu0 0
        %1469 = vmatprep.subr.bf16.mxu0 0
        %1470 = vmatpush2.bf16.msra.mxu0 0
        %1471 = vmatprep.subr.bf16.mxu0 0
        %1472 = vmatpush2.bf16.msra.mxu0 0
        %1473 = vmatprep.mubr.bf16.mxu0 0
        %1474 = vmatmul.mubr.bf16.gmra.mxu0 %v1435
        %v1475 = vpop.f32.mrf.mxu0
        %v1476 = vadd.f32 0.0, %v1475
        %v1477 = vpop.f32.mrf.mxu0
        %v1478 = vpop.f32.mrf.mxu0
        %v1479 = vpop.f32.mrf.mxu0
        %1480 = vdwg.mxu0
        %v1481 = vpack.c.bf16 %v1476, %v1476
        %v1482 = vld [vmem:[%s19] sm:$0xf]
        %v1483 = vld [vmem:[%s19 + $0x4] sm:$0xf]
        %v1484 = vld [vmem:[%s19 + $0x8] sm:$0xf]
        %v1485 = vld [vmem:[%s19 + $0xc] sm:$0xf]
        %v1486 = vld [vmem:[#allocation13] sm:$0x1]
        %v1488 = vlaneseq
        %v1489 = vshrl.u32 %v1488, 7
        %v1490 = vsub.s32 0, %v1489
        %v1491 = vrot.slane %v1486, %v1490
        %v1497 = vunpack.c.l.b16 %v1482
        %v1498 = vunpack.c.l.b16 %v1483
        %v1499 = vunpack.c.l.b16 %v1484
        %v1500 = vunpack.c.l.b16 %v1485
        %v1501 = vpack.c.b16 %v1498, %v1497
        %v1502 = vpack.c.b16 %v1500, %v1499
        %v1506 = vsel %vm1196, %v1481, 0
        %1508 = vmatprep.subr.bf16.mxu0 0
        %1509 = vmatpush1.bf16.msra.mxu0 0
        %1510 = vmatprep.subr.bf16.mxu0 0
        %1511 = vmatpush1.bf16.msra.mxu0 0
        %1512 = vmatprep.subr.bf16.mxu0 0
        %1513 = vmatpush1.bf16.msra.mxu0 0
        %1514 = vmatprep.subr.bf16.mxu0 0
        %1515 = vmatpush1.bf16.msra.mxu0 0
        %1516 = vmatprep.subr.bf16.mxu0 0
        %1517 = vmatpush1.bf16.msra.mxu0 0
        %1518 = vmatprep.subr.bf16.mxu0 0
        %1519 = vmatpush1.bf16.msra.mxu0 0
        %1520 = vmatprep.subr.bf16.mxu0 0
        %1521 = vmatpush1.bf16.msra.mxu0 %v1502
        %1522 = vmatprep.subr.bf16.mxu0 0
        %1523 = vmatpush1.bf16.msra.mxu0 %v1501
        %1524 = vmatprep.subr.bf16.mxu0 0
        %1525 = vmatpush2.bf16.msra.mxu0 0
        %1526 = vmatprep.subr.bf16.mxu0 0
        %1527 = vmatpush2.bf16.msra.mxu0 0
        %1528 = vmatprep.subr.bf16.mxu0 0
        %1529 = vmatpush2.bf16.msra.mxu0 0
        %1530 = vmatprep.subr.bf16.mxu0 0
        %1531 = vmatpush2.bf16.msra.mxu0 0
        %1532 = vmatprep.subr.bf16.mxu0 0
        %1533 = vmatpush2.bf16.msra.mxu0 0
        %1534 = vmatprep.subr.bf16.mxu0 0
        %1535 = vmatpush2.bf16.msra.mxu0 0
        %1536 = vmatprep.subr.bf16.mxu0 0
        %1537 = vmatpush2.bf16.msra.mxu0 0
        %1538 = vmatprep.subr.bf16.mxu0 0
        %1539 = vmatpush2.bf16.msra.mxu0 0
        %1540 = vmatprep.mubr.bf16.mxu0 0
        %1541 = vmatmul.mubr.bf16.gmra.mxu0 %v1506
        %v1542 = vpop.f32.mrf.mxu0
        %v1543 = vadd.f32 %v1491, %v1542
        %v1544 = vpop.f32.mrf.mxu0
        %v1545 = vpop.f32.mrf.mxu0
        %v1546 = vpop.f32.mrf.mxu0
        %1547 = vdwg.mxu0
        %v1548 = vadd.f32 %v1543, %v1169
        %v1549 = vsel %vm1196, %v1548, 0.0
        %1550 = vadd.xlane.f32.xlu0 %v1549
        %v1551 = vpop.xlane.xlu0 %1550
        %v1552 = vrcp.pop 32.0
        %v1553 = vmul.f32 %v1551, %v1552
        %v1554 = vsub.f32 %v1548, %v1553
        %v1555 = vmul.f32 %v1554, %v1554
        %v1556 = vsel %vm1196, %v1555, 0.0
        %1557 = vadd.xlane.f32.xlu0 %v1556
        %v1558 = vpop.xlane.xlu0 %1557
        %v1559 = vmul.f32 %v1558, %v1552
        %v1560 = vadd.f32 %v1559, 1e-05
        %v1561 = vrsqrt.pop %v1560
        %v1562 = vmul.f32 %v1554, %v1561
        %v1563 = vld [vmem:[#allocation14] sm:$0x1]
        %v1565 = vlaneseq
        %v1566 = vshrl.u32 %v1565, 7
        %v1567 = vsub.s32 0, %v1566
        %v1568 = vrot.slane %v1563, %v1567
        %v1570 = vmul.f32 %v1562, %v1568
        %v1571 = vld [vmem:[#allocation16] sm:$0x1]
        %v1573 = vlaneseq
        %v1574 = vshrl.u32 %v1573, 7
        %v1575 = vsub.s32 0, %v1574
        %v1576 = vrot.slane %v1571, %v1575
        %v1578 = vadd.f32 %v1570, %v1576
        %v1579 = vpack.c.bf16 %v1578, %v1578
        %v1580 = vld [vmem:[#allocation17] sm:$0xf]
        %v1581 = vld [vmem:[#allocation17 + $0x4] sm:$0xf]
        %v1582 = vld [vmem:[#allocation17 + $0x8] sm:$0xf]
        %v1583 = vld [vmem:[#allocation17 + $0xc] sm:$0xf]
        %v1584 = vld [vmem:[#allocation19] sm:$0x1]
        %v1586 = vlaneseq
        %v1587 = vshrl.u32 %v1586, 7
        %v1588 = vsub.s32 0, %v1587
        %v1589 = vrot.slane %v1584, %v1588
        %v1595 = vunpack.c.l.b16 %v1580
        %v1596 = vunpack.c.l.b16 %v1581
        %v1597 = vunpack.c.l.b16 %v1582
        %v1598 = vunpack.c.l.b16 %v1583
        %v1599 = vpack.c.b16 %v1596, %v1595
        %v1600 = vpack.c.b16 %v1598, %v1597
        %v1604 = vsel %vm1196, %v1579, 0
        %1606 = vmatprep.subr.bf16.mxu0 0
        %1607 = vmatpush1.bf16.msra.mxu0 0
        %1608 = vmatprep.subr.bf16.mxu0 0
        %1609 = vmatpush1.bf16.msra.mxu0 0
        %1610 = vmatprep.subr.bf16.mxu0 0
        %1611 = vmatpush1.bf16.msra.mxu0 0
        %1612 = vmatprep.subr.bf16.mxu0 0
        %1613 = vmatpush1.bf16.msra.mxu0 0
        %1614 = vmatprep.subr.bf16.mxu0 0
        %1615 = vmatpush1.bf16.msra.mxu0 0
        %1616 = vmatprep.subr.bf16.mxu0 0
        %1617 = vmatpush1.bf16.msra.mxu0 0
        %1618 = vmatprep.subr.bf16.mxu0 0
        %1619 = vmatpush1.bf16.msra.mxu0 %v1600
        %1620 = vmatprep.subr.bf16.mxu0 0
        %1621 = vmatpush1.bf16.msra.mxu0 %v1599
        %1622 = vmatprep.subr.bf16.mxu0 0
        %1623 = vmatpush2.bf16.msra.mxu0 0
        %1624 = vmatprep.subr.bf16.mxu0 0
        %1625 = vmatpush2.bf16.msra.mxu0 0
        %1626 = vmatprep.subr.bf16.mxu0 0
        %1627 = vmatpush2.bf16.msra.mxu0 0
        %1628 = vmatprep.subr.bf16.mxu0 0
        %1629 = vmatpush2.bf16.msra.mxu0 0
        %1630 = vmatprep.subr.bf16.mxu0 0
        %1631 = vmatpush2.bf16.msra.mxu0 0
        %1632 = vmatprep.subr.bf16.mxu0 0
        %1633 = vmatpush2.bf16.msra.mxu0 0
        %1634 = vmatprep.subr.bf16.mxu0 0
        %1635 = vmatpush2.bf16.msra.mxu0 0
        %1636 = vmatprep.subr.bf16.mxu0 0
        %1637 = vmatpush2.bf16.msra.mxu0 0
        %1638 = vmatprep.mubr.bf16.mxu0 0
        %1639 = vmatmul.mubr.bf16.gmra.mxu0 %v1604
        %v1640 = vpop.f32.mrf.mxu0
        %v1641 = vadd.f32 %v1589, %v1640
        %v1642 = vpop.f32.mrf.mxu0
        %v1643 = vpop.f32.mrf.mxu0
        %v1644 = vpop.f32.mrf.mxu0
        %1645 = vdwg.mxu0
        %v1646 = vpack.c.bf16 %v1641, %v1641
        %v1647 = vld [vmem:[#allocation20] sm:$0xf]
        %v1648 = vld [vmem:[#allocation20 + $0x4] sm:$0xf]
        %v1649 = vld [vmem:[#allocation20 + $0x8] sm:$0xf]
        %v1650 = vld [vmem:[#allocation20 + $0xc] sm:$0xf]
        %v1651 = vld [vmem:[#allocation22] sm:$0x1]
        %v1653 = vlaneseq
        %v1654 = vshrl.u32 %v1653, 7
        %v1655 = vsub.s32 0, %v1654
        %v1656 = vrot.slane %v1651, %v1655
        %v1662 = vunpack.c.l.b16 %v1647
        %v1663 = vunpack.c.l.b16 %v1648
        %v1664 = vunpack.c.l.b16 %v1649
        %v1665 = vunpack.c.l.b16 %v1650
        %v1666 = vpack.c.b16 %v1663, %v1662
        %v1667 = vpack.c.b16 %v1665, %v1664
        %v1671 = vsel %vm1196, %v1172, 0
        %1673 = vmatprep.subr.bf16.mxu0 0
        %1674 = vmatpush1.bf16.msra.mxu0 0
        %1675 = vmatprep.subr.bf16.mxu0 0
        %1676 = vmatpush1.bf16.msra.mxu0 0
        %1677 = vmatprep.subr.bf16.mxu0 0
        %1678 = vmatpush1.bf16.msra.mxu0 0
        %1679 = vmatprep.subr.bf16.mxu0 0
        %1680 = vmatpush1.bf16.msra.mxu0 0
        %1681 = vmatprep.subr.bf16.mxu0 0
        %1682 = vmatpush1.bf16.msra.mxu0 0
        %1683 = vmatprep.subr.bf16.mxu0 0
        %1684 = vmatpush1.bf16.msra.mxu0 0
        %1685 = vmatprep.subr.bf16.mxu0 0
        %1686 = vmatpush1.bf16.msra.mxu0 %v1667
        %1687 = vmatprep.subr.bf16.mxu0 0
        %1688 = vmatpush1.bf16.msra.mxu0 %v1666
        %1689 = vmatprep.subr.bf16.mxu0 0
        %1690 = vmatpush2.bf16.msra.mxu0 0
        %1691 = vmatprep.subr.bf16.mxu0 0
        %1692 = vmatpush2.bf16.msra.mxu0 0
        %1693 = vmatprep.subr.bf16.mxu0 0
        %1694 = vmatpush2.bf16.msra.mxu0 0
        %1695 = vmatprep.subr.bf16.mxu0 0
        %1696 = vmatpush2.bf16.msra.mxu0 0
        %1697 = vmatprep.subr.bf16.mxu0 0
        %1698 = vmatpush2.bf16.msra.mxu0 0
        %1699 = vmatprep.subr.bf16.mxu0 0
        %1700 = vmatpush2.bf16.msra.mxu0 0
        %1701 = vmatprep.subr.bf16.mxu0 0
        %1702 = vmatpush2.bf16.msra.mxu0 0
        %1703 = vmatprep.subr.bf16.mxu0 0
        %1704 = vmatpush2.bf16.msra.mxu0 0
        %1705 = vmatprep.mubr.bf16.mxu0 0
        %1706 = vmatmul.mubr.bf16.gmra.mxu0 %v1671
        %v1707 = vpop.f32.mrf.mxu0
        %v1708 = vadd.f32 %v1656, %v1707
        %v1709 = vpop.f32.mrf.mxu0
        %v1710 = vpop.f32.mrf.mxu0
        %v1711 = vpop.f32.mrf.mxu0
        %1712 = vdwg.mxu0
        %v1713 = vpack.c.bf16 %v1708, %v1708
        %v1714 = vld [vmem:[#allocation23] sm:$0xf]
        %v1715 = vld [vmem:[#allocation23 + $0x4] sm:$0xf]
        %v1716 = vld [vmem:[#allocation23 + $0x8] sm:$0xf]
        %v1717 = vld [vmem:[#allocation23 + $0xc] sm:$0xf]
        %v1718 = vld [vmem:[#allocation25] sm:$0x1]
        %v1720 = vlaneseq
        %v1721 = vshrl.u32 %v1720, 7
        %v1722 = vsub.s32 0, %v1721
        %v1723 = vrot.slane %v1718, %v1722
        %v1729 = vunpack.c.l.b16 %v1714
        %v1730 = vunpack.c.l.b16 %v1715
        %v1731 = vunpack.c.l.b16 %v1716
        %v1732 = vunpack.c.l.b16 %v1717
        %v1733 = vpack.c.b16 %v1730, %v1729
        %v1734 = vpack.c.b16 %v1732, %v1731
        %1737 = vmatprep.subr.bf16.mxu0 0
        %1738 = vmatpush1.bf16.msra.mxu0 0
        %1739 = vmatprep.subr.bf16.mxu0 0
        %1740 = vmatpush1.bf16.msra.mxu0 0
        %1741 = vmatprep.subr.bf16.mxu0 0
        %1742 = vmatpush1.bf16.msra.mxu0 0
        %1743 = vmatprep.subr.bf16.mxu0 0
        %1744 = vmatpush1.bf16.msra.mxu0 0
        %1745 = vmatprep.subr.bf16.mxu0 0
        %1746 = vmatpush1.bf16.msra.mxu0 0
        %1747 = vmatprep.subr.bf16.mxu0 0
        %1748 = vmatpush1.bf16.msra.mxu0 0
        %1749 = vmatprep.subr.bf16.mxu0 0
        %1750 = vmatpush1.bf16.msra.mxu0 %v1734
        %1751 = vmatprep.subr.bf16.mxu0 0
        %1752 = vmatpush1.bf16.msra.mxu0 %v1733
        %1753 = vmatprep.subr.bf16.mxu0 0
        %1754 = vmatpush2.bf16.msra.mxu0 0
        %1755 = vmatprep.subr.bf16.mxu0 0
        %1756 = vmatpush2.bf16.msra.mxu0 0
        %1757 = vmatprep.subr.bf16.mxu0 0
        %1758 = vmatpush2.bf16.msra.mxu0 0
        %1759 = vmatprep.subr.bf16.mxu0 0
        %1760 = vmatpush2.bf16.msra.mxu0 0
        %1761 = vmatprep.subr.bf16.mxu0 0
        %1762 = vmatpush2.bf16.msra.mxu0 0
        %1763 = vmatprep.subr.bf16.mxu0 0
        %1764 = vmatpush2.bf16.msra.mxu0 0
        %1765 = vmatprep.subr.bf16.mxu0 0
        %1766 = vmatpush2.bf16.msra.mxu0 0
        %1767 = vmatprep.subr.bf16.mxu0 0
        %1768 = vmatpush2.bf16.msra.mxu0 0
        %1769 = vmatprep.mubr.bf16.mxu0 0
        %1770 = vmatmul.mubr.bf16.gmra.mxu0 %v1671
        %v1771 = vpop.f32.mrf.mxu0
        %v1772 = vadd.f32 %v1723, %v1771
        %v1773 = vpop.f32.mrf.mxu0
        %v1774 = vpop.f32.mrf.mxu0
        %v1775 = vpop.f32.mrf.mxu0
        %1776 = vdwg.mxu0
        %v1777 = vpack.c.bf16 %v1772, %v1772
        %v1779 = vsel %vm1196, %v1646, 0
        %v1782 = vsel %vm1196, %v1713, 0
        %1784 = vmatprep.subr.bf16.mxu0 0
        %1785 = vmatpush1.bf16.xpose.msra.mxu0 0
        %1786 = vmatprep.subr.bf16.mxu0 0
        %1787 = vmatpush1.bf16.xpose.msra.mxu0 0
        %1788 = vmatprep.subr.bf16.mxu0 0
        %1789 = vmatpush1.bf16.xpose.msra.mxu0 0
        %1790 = vmatprep.subr.bf16.mxu0 0
        %1791 = vmatpush1.bf16.xpose.msra.mxu0 0
        %1792 = vmatprep.subr.bf16.mxu0 0
        %1793 = vmatpush1.bf16.xpose.msra.mxu0 0
        %1794 = vmatprep.subr.bf16.mxu0 0
        %1795 = vmatpush1.bf16.xpose.msra.mxu0 0
        %1796 = vmatprep.subr.bf16.mxu0 0
        %1797 = vmatpush1.bf16.xpose.msra.mxu0 0
        %1798 = vmatprep.subr.bf16.mxu0 0
        %1799 = vmatpush1.bf16.xpose.msra.mxu0 %v1782
        %1800 = vmatprep.subr.bf16.mxu0 0
        %1801 = vmatpush2.bf16.xpose.msra.mxu0 0
        %1802 = vmatprep.subr.bf16.mxu0 0
        %1803 = vmatpush2.bf16.xpose.msra.mxu0 0
        %1804 = vmatprep.subr.bf16.mxu0 0
        %1805 = vmatpush2.bf16.xpose.msra.mxu0 0
        %1806 = vmatprep.subr.bf16.mxu0 0
        %1807 = vmatpush2.bf16.xpose.msra.mxu0 0
        %1808 = vmatprep.subr.bf16.mxu0 0
        %1809 = vmatpush2.bf16.xpose.msra.mxu0 0
        %1810 = vmatprep.subr.bf16.mxu0 0
        %1811 = vmatpush2.bf16.xpose.msra.mxu0 0
        %1812 = vmatprep.subr.bf16.mxu0 0
        %1813 = vmatpush2.bf16.xpose.msra.mxu0 0
        %1814 = vmatprep.subr.bf16.mxu0 0
        %1815 = vmatpush2.bf16.xpose.msra.mxu0 0
        %1816 = vmatprep.mubr.bf16.mxu0 0
        %1817 = vmatmul.mubr.bf16.gmra.mxu0 %v1779
        %v1818 = vpop.f32.mrf.mxu0
        %v1819 = vadd.f32 0.0, %v1818
        %v1820 = vpop.f32.mrf.mxu0
        %v1821 = vpop.f32.mrf.mxu0
        %v1822 = vpop.f32.mrf.mxu0
        %1823 = vdwg.mxu0
        %v1824 = vsel %vm1421, %v1819, -inf
        %1825 = vmax.xlane.f32.xlu0 %v1824
        %v1826 = vpop.xlane.xlu0 %1825
        %v1827 = vsub.f32 %v1819, %v1826
        %v1828 = vmul.f32 %v1827, 1.442695
        %v1829 = vpow.pop %v1828
        %v1830 = vsel %vm1421, %v1829, 0.0
        %1831 = vadd.xlane.f32.xlu0 %v1830
        %v1832 = vpop.xlane.xlu0 %1831
        %v1833 = vrcp.pop %v1832
        %v1834 = vmul.f32 %v1829, %v1833
        %v1835 = vpack.c.bf16 %v1834, %v1834
        %v1837 = vsel %vm1421, %v1835, 0
        %v1840 = vsel %vm1437, %v1777, 0
        %1842 = vmatprep.subr.bf16.mxu0 0
        %1843 = vmatpush1.bf16.msra.mxu0 0
        %1844 = vmatprep.subr.bf16.mxu0 0
        %1845 = vmatpush1.bf16.msra.mxu0 0
        %1846 = vmatprep.subr.bf16.mxu0 0
        %1847 = vmatpush1.bf16.msra.mxu0 0
        %1848 = vmatprep.subr.bf16.mxu0 0
        %1849 = vmatpush1.bf16.msra.mxu0 0
        %1850 = vmatprep.subr.bf16.mxu0 0
        %1851 = vmatpush1.bf16.msra.mxu0 0
        %1852 = vmatprep.subr.bf16.mxu0 0
        %1853 = vmatpush1.bf16.msra.mxu0 0
        %1854 = vmatprep.subr.bf16.mxu0 0
        %1855 = vmatpush1.bf16.msra.mxu0 0
        %1856 = vmatprep.subr.bf16.mxu0 0
        %1857 = vmatpush1.bf16.msra.mxu0 %v1840
        %1858 = vmatprep.subr.bf16.mxu0 0
        %1859 = vmatpush2.bf16.msra.mxu0 0
        %1860 = vmatprep.subr.bf16.mxu0 0
        %1861 = vmatpush2.bf16.msra.mxu0 0
        %1862 = vmatprep.subr.bf16.mxu0 0
        %1863 = vmatpush2.bf16.msra.mxu0 0
        %1864 = vmatprep.subr.bf16.mxu0 0
        %1865 = vmatpush2.bf16.msra.mxu0 0
        %1866 = vmatprep.subr.bf16.mxu0 0
        %1867 = vmatpush2.bf16.msra.mxu0 0
        %1868 = vmatprep.subr.bf16.mxu0 0
        %1869 = vmatpush2.bf16.msra.mxu0 0
        %1870 = vmatprep.subr.bf16.mxu0 0
        %1871 = vmatpush2.bf16.msra.mxu0 0
        %1872 = vmatprep.subr.bf16.mxu0 0
        %1873 = vmatpush2.bf16.msra.mxu0 0
        %1874 = vmatprep.mubr.bf16.mxu0 0
        %1875 = vmatmul.mubr.bf16.gmra.mxu0 %v1837
        %v1876 = vpop.f32.mrf.mxu0
        %v1877 = vadd.f32 0.0, %v1876
        %v1878 = vpop.f32.mrf.mxu0
        %v1879 = vpop.f32.mrf.mxu0
        %v1880 = vpop.f32.mrf.mxu0
        %1881 = vdwg.mxu0
        %v1882 = vpack.c.bf16 %v1877, %v1877
        %v1883 = vld [vmem:[#allocation26] sm:$0xf]
        %v1884 = vld [vmem:[#allocation26 + $0x4] sm:$0xf]
        %v1885 = vld [vmem:[#allocation26 + $0x8] sm:$0xf]
        %v1886 = vld [vmem:[#allocation26 + $0xc] sm:$0xf]
        %v1887 = vld [vmem:[%s41] sm:$0x1]
        %v1889 = vlaneseq
        %v1890 = vshrl.u32 %v1889, 7
        %v1891 = vsub.s32 0, %v1890
        %v1892 = vrot.slane %v1887, %v1891
        %v1898 = vunpack.c.l.b16 %v1883
        %v1899 = vunpack.c.l.b16 %v1884
        %v1900 = vunpack.c.l.b16 %v1885
        %v1901 = vunpack.c.l.b16 %v1886
        %v1902 = vpack.c.b16 %v1899, %v1898
        %v1903 = vpack.c.b16 %v1901, %v1900
        %v1907 = vsel %vm1196, %v1882, 0
        %1909 = vmatprep.subr.bf16.mxu0 0
        %1910 = vmatpush1.bf16.msra.mxu0 0
        %1911 = vmatprep.subr.bf16.mxu0 0
        %1912 = vmatpush1.bf16.msra.mxu0 0
        %1913 = vmatprep.subr.bf16.mxu0 0
        %1914 = vmatpush1.bf16.msra.mxu0 0
        %1915 = vmatprep.subr.bf16.mxu0 0
        %1916 = vmatpush1.bf16.msra.mxu0 0
        %1917 = vmatprep.subr.bf16.mxu0 0
        %1918 = vmatpush1.bf16.msra.mxu0 0
        %1919 = vmatprep.subr.bf16.mxu0 0
        %1920 = vmatpush1.bf16.msra.mxu0 0
        %1921 = vmatprep.subr.bf16.mxu0 0
        %1922 = vmatpush1.bf16.msra.mxu0 %v1903
        %1923 = vmatprep.subr.bf16.mxu0 0
        %1924 = vmatpush1.bf16.msra.mxu0 %v1902
        %1925 = vmatprep.subr.bf16.mxu0 0
        %1926 = vmatpush2.bf16.msra.mxu0 0
        %1927 = vmatprep.subr.bf16.mxu0 0
        %1928 = vmatpush2.bf16.msra.mxu0 0
        %1929 = vmatprep.subr.bf16.mxu0 0
        %1930 = vmatpush2.bf16.msra.mxu0 0
        %1931 = vmatprep.subr.bf16.mxu0 0
        %1932 = vmatpush2.bf16.msra.mxu0 0
        %1933 = vmatprep.subr.bf16.mxu0 0
        %1934 = vmatpush2.bf16.msra.mxu0 0
        %1935 = vmatprep.subr.bf16.mxu0 0
        %1936 = vmatpush2.bf16.msra.mxu0 0
        %1937 = vmatprep.subr.bf16.mxu0 0
        %1938 = vmatpush2.bf16.msra.mxu0 0
        %1939 = vmatprep.subr.bf16.mxu0 0
        %1940 = vmatpush2.bf16.msra.mxu0 0
        %1941 = vmatprep.mubr.bf16.mxu0 0
        %1942 = vmatmul.mubr.bf16.gmra.mxu0 %v1907
        %v1943 = vpop.f32.mrf.mxu0
        %v1944 = vadd.f32 %v1892, %v1943
        %v1945 = vpop.f32.mrf.mxu0
        %v1946 = vpop.f32.mrf.mxu0
        %v1947 = vpop.f32.mrf.mxu0
        %1948 = vdwg.mxu0
        %v1949 = vadd.f32 %v1944, %v1578
        %v1950 = vsel %vm1196, %v1949, 0.0
        %1951 = vadd.xlane.f32.xlu0 %v1950
        %v1952 = vpop.xlane.xlu0 %1951
        %v1953 = vmul.f32 %v1952, %v1552
        %v1954 = vsub.f32 %v1949, %v1953
        %v1955 = vmul.f32 %v1954, %v1954
        %v1956 = vsel %vm1196, %v1955, 0.0
        %1957 = vadd.xlane.f32.xlu0 %v1956
        %v1958 = vpop.xlane.xlu0 %1957
        %v1959 = vmul.f32 %v1958, %v1552
        %v1960 = vadd.f32 %v1959, 1e-05
        %v1961 = vrsqrt.pop %v1960
        %v1962 = vmul.f32 %v1954, %v1961
        %v1963 = vld [vmem:[%s43] sm:$0x1]
        %v1965 = vlaneseq
        %v1966 = vshrl.u32 %v1965, 7
        %v1967 = vsub.s32 0, %v1966
        %v1968 = vrot.slane %v1963, %v1967
        %v1970 = vmul.f32 %v1962, %v1968
        %v1971 = vld [vmem:[%s45] sm:$0x1]
        %v1973 = vlaneseq
        %v1974 = vshrl.u32 %v1973, 7
        %v1975 = vsub.s32 0, %v1974
        %v1976 = vrot.slane %v1971, %v1975
        %v1978 = vadd.f32 %v1970, %v1976
        %v1979 = vpack.c.bf16 %v1978, %v1978
        %v1980 = vld [vmem:[#allocation28] sm:$0xf]
        %v1981 = vld [vmem:[#allocation28 + $0x4] sm:$0xf]
        %v1982 = vld [vmem:[#allocation28 + $0x8] sm:$0xf]
        %v1983 = vld [vmem:[#allocation28 + $0xc] sm:$0xf]
        %v1984 = vld [vmem:[%s49] sm:$0x1]
        %v1986 = vlaneseq
        %v1987 = vshrl.u32 %v1986, 7
        %v1988 = vsub.s32 0, %v1987
        %v1989 = vrot.slane %v1984, %v1988
        %v1995 = vunpack.c.l.b16 %v1980
        %v1996 = vunpack.c.l.b16 %v1981
        %v1997 = vunpack.c.l.b16 %v1982
        %v1998 = vunpack.c.l.b16 %v1983
        %v1999 = vpack.c.b16 %v1996, %v1995
        %v2000 = vpack.c.b16 %v1998, %v1997
        %v2004 = vsel %vm1196, %v1979, 0
        %2006 = vmatprep.subr.bf16.mxu0 0
        %2007 = vmatpush1.bf16.msra.mxu0 0
        %2008 = vmatprep.subr.bf16.mxu0 0
        %2009 = vmatpush1.bf16.msra.mxu0 0
        %2010 = vmatprep.subr.bf16.mxu0 0
        %2011 = vmatpush1.bf16.msra.mxu0 0
        %2012 = vmatprep.subr.bf16.mxu0 0
        %2013 = vmatpush1.bf16.msra.mxu0 0
        %2014 = vmatprep.subr.bf16.mxu0 0
        %2015 = vmatpush1.bf16.msra.mxu0 0
        %2016 = vmatprep.subr.bf16.mxu0 0
        %2017 = vmatpush1.bf16.msra.mxu0 0
        %2018 = vmatprep.subr.bf16.mxu0 0
        %2019 = vmatpush1.bf16.msra.mxu0 %v2000
        %2020 = vmatprep.subr.bf16.mxu0 0
        %2021 = vmatpush1.bf16.msra.mxu0 %v1999
        %2022 = vmatprep.subr.bf16.mxu0 0
        %2023 = vmatpush2.bf16.msra.mxu0 0
        %2024 = vmatprep.subr.bf16.mxu0 0
        %2025 = vmatpush2.bf16.msra.mxu0 0
        %2026 = vmatprep.subr.bf16.mxu0 0
        %2027 = vmatpush2.bf16.msra.mxu0 0
        %2028 = vmatprep.subr.bf16.mxu0 0
        %2029 = vmatpush2.bf16.msra.mxu0 0
        %2030 = vmatprep.subr.bf16.mxu0 0
        %2031 = vmatpush2.bf16.msra.mxu0 0
        %2032 = vmatprep.subr.bf16.mxu0 0
        %2033 = vmatpush2.bf16.msra.mxu0 0
        %2034 = vmatprep.subr.bf16.mxu0 0
        %2035 = vmatpush2.bf16.msra.mxu0 0
        %2036 = vmatprep.subr.bf16.mxu0 0
        %2037 = vmatpush2.bf16.msra.mxu0 0
        %2038 = vmatprep.mubr.bf16.mxu0 0
        %2039 = vmatmul.mubr.bf16.gmra.mxu0 %v2004
        %v2040 = vpop.f32.mrf.mxu0
        %v2041 = vadd.f32 %v1989, %v2040
        %v2042 = vpop.f32.mrf.mxu0
        %v2043 = vpop.f32.mrf.mxu0
        %v2044 = vpop.f32.mrf.mxu0
        %2045 = vdwg.mxu0
        %v2046 = vmax.f32 %v2041, 0.0
        %v2047 = vpack.c.bf16 %v2046, %v2046
        %v2048 = vld [vmem:[%s51] sm:$0xf]
        %v2049 = vld [vmem:[%s51 + $0x4] sm:$0xf]
        %v2050 = vld [vmem:[%s51 + $0x8] sm:$0xf]
        %v2051 = vld [vmem:[%s51 + $0xc] sm:$0xf]
        %v2052 = vld [vmem:[%s51 + $0x10] sm:$0xf]
        %v2053 = vld [vmem:[%s51 + $0x14] sm:$0xf]
        %v2054 = vld [vmem:[%s51 + $0x18] sm:$0xf]
        %v2055 = vld [vmem:[%s51 + $0x1c] sm:$0xf]
        %v2056 = vld [vmem:[%s53] sm:$0x1]
        %v2058 = vlaneseq
        %v2059 = vshrl.u32 %v2058, 7
        %v2060 = vsub.s32 0, %v2059
        %v2061 = vrot.slane %v2056, %v2060
        %v2071 = vunpack.c.l.b16 %v2048
        %v2072 = vunpack.c.l.b16 %v2049
        %v2073 = vunpack.c.l.b16 %v2050
        %v2074 = vunpack.c.l.b16 %v2051
        %v2075 = vunpack.c.l.b16 %v2052
        %v2076 = vunpack.c.l.b16 %v2053
        %v2077 = vunpack.c.l.b16 %v2054
        %v2078 = vunpack.c.l.b16 %v2055
        %v2079 = vpack.c.b16 %v2072, %v2071
        %v2080 = vpack.c.b16 %v2074, %v2073
        %v2081 = vpack.c.b16 %v2076, %v2075
        %v2082 = vpack.c.b16 %v2078, %v2077
        %vm2087 = vcmask 523264
        %v2089 = vsel %vm2087, %v2047, 0
        %2091 = vmatprep.subr.bf16.mxu0 0
        %2092 = vmatpush1.bf16.msra.mxu0 0
        %2093 = vmatprep.subr.bf16.mxu0 0
        %2094 = vmatpush1.bf16.msra.mxu0 0
        %2095 = vmatprep.subr.bf16.mxu0 0
        %2096 = vmatpush1.bf16.msra.mxu0 0
        %2097 = vmatprep.subr.bf16.mxu0 0
        %2098 = vmatpush1.bf16.msra.mxu0 0
        %2099 = vmatprep.subr.bf16.mxu0 0
        %2100 = vmatpush1.bf16.msra.mxu0 %v2082
        %2101 = vmatprep.subr.bf16.mxu0 0
        %2102 = vmatpush1.bf16.msra.mxu0 %v2081
        %2103 = vmatprep.subr.bf16.mxu0 0
        %2104 = vmatpush1.bf16.msra.mxu0 %v2080
        %2105 = vmatprep.subr.bf16.mxu0 0
        %2106 = vmatpush1.bf16.msra.mxu0 %v2079
        %2107 = vmatprep.subr.bf16.mxu0 0
        %2108 = vmatpush2.bf16.msra.mxu0 0
        %2109 = vmatprep.subr.bf16.mxu0 0
        %2110 = vmatpush2.bf16.msra.mxu0 0
        %2111 = vmatprep.subr.bf16.mxu0 0
        %2112 = vmatpush2.bf16.msra.mxu0 0
        %2113 = vmatprep.subr.bf16.mxu0 0
        %2114 = vmatpush2.bf16.msra.mxu0 0
        %2115 = vmatprep.subr.bf16.mxu0 0
        %2116 = vmatpush2.bf16.msra.mxu0 0
        %2117 = vmatprep.subr.bf16.mxu0 0
        %2118 = vmatpush2.bf16.msra.mxu0 0
        %2119 = vmatprep.subr.bf16.mxu0 0
        %2120 = vmatpush2.bf16.msra.mxu0 0
        %2121 = vmatprep.subr.bf16.mxu0 0
        %2122 = vmatpush2.bf16.msra.mxu0 0
        %2123 = vmatprep.mubr.bf16.mxu0 0
        %2124 = vmatmul.mubr.bf16.gmra.mxu0 %v2089
        %v2125 = vpop.f32.mrf.mxu0
        %v2126 = vadd.f32 %v2061, %v2125
        %v2127 = vpop.f32.mrf.mxu0
        %v2128 = vpop.f32.mrf.mxu0
        %v2129 = vpop.f32.mrf.mxu0
        %2130 = vdwg.mxu0
        %v2131 = vadd.f32 %v2126, %v1978
        %v2132 = vsel %vm1196, %v2131, 0.0
        %2133 = vadd.xlane.f32.xlu0 %v2132
        %v2134 = vpop.xlane.xlu0 %2133
        %v2135 = vmul.f32 %v2134, %v1552
        %v2136 = vsub.f32 %v2131, %v2135
        %v2137 = vmul.f32 %v2136, %v2136
        %v2138 = vsel %vm1196, %v2137, 0.0
        %2139 = vadd.xlane.f32.xlu0 %v2138
        %v2140 = vpop.xlane.xlu0 %2139
        %v2141 = vmul.f32 %v2140, %v1552
        %v2142 = vadd.f32 %v2141, 1e-05
        %v2143 = vrsqrt.pop %v2142
        %v2144 = vmul.f32 %v2136, %v2143
        %v2145 = vld [vmem:[%s55] sm:$0x1]
        %v2147 = vlaneseq
        %v2148 = vshrl.u32 %v2147, 7
        %v2149 = vsub.s32 0, %v2148
        %v2150 = vrot.slane %v2145, %v2149
        %v2152 = vmul.f32 %v2144, %v2150
        %v2153 = vld [vmem:[%s57] sm:$0x1]
        %v2155 = vlaneseq
        %v2156 = vshrl.u32 %v2155, 7
        %v2157 = vsub.s32 0, %v2156
        %v2158 = vrot.slane %v2153, %v2157
        %v2160 = vadd.f32 %v2152, %v2158
        %2161 = vst.msk [vmem:[%s1157] sm:$0xff] %vm1196, %v2160
        %s2162 = sand.u32 %s716, 1
        %s2163 = scalar_lea.sflag [#allocation4], %s2162
        %s2164 = sand.u32 %s716, 1
        %s2165 = smul.addr %s2164, 8
        %s2166 = scalar_lea.vmem [#allocation29], %s2165
        // Predicated region
        $region205: #{tpu_custom_call.1} parent=135 // pred_check
          %p2167 = pneg %p726
        $region206: #{tpu_custom_call.1} parent=135 // pred_check_branch
          %2169 = sbr.rel (%p2167) target = $region208
        $region207: #{tpu_custom_call.1} parent=135 // pred_region
          %s2171 = ssub.s32 128, 128
          %2172 = vsyncadd %s2163, %s2171
          %s2173 = smul.addr %s84, 128
          %s2174 = scalar_lea.hbm %s59, %s2173
          %s2176 = sshll.u32 %s2166, 4
          %s2177 = int_to_ptr.vmem [resolvable:$true] %s2176
          %2179 = dma.vmem_to_hbm [thread:$0]  %s2177, 128, %s2174, %s2163
        $region208: #{tpu_custom_call.1} parent=135 // pred_fallthru
          _
      $region136: #{tpu_custom_call.1} parent=5 // pred_fallthru
        _
      %p2180 = scmp.le.s32.totalorder 2, %s79
      // Predicated region
      $region209: #{tpu_custom_call.1} parent=5 // pred_check
        %p2181 = pneg %p2180
      $region210: #{tpu_custom_call.1} parent=5 // pred_check_branch
        %2183 = sbr.rel (%p2181) target = $region212
      $region211: #{tpu_custom_call.1} parent=5 // pred_region
        %s2184 = ssub.s32 %s79, 2
        // Predicated region
        $region213: #{tpu_custom_call.1} parent=211 // pred_check
          %p2185 = pneg %p732
        $region214: #{tpu_custom_call.1} parent=211 // pred_check_branch
          %2187 = sbr.rel (%p2185) target = $region216
        $region215: #{tpu_custom_call.1} parent=211 // pred_region
          %s2188 = sand.u32 %s717, 1
          %s2189 = scalar_lea.sflag [#allocation4], %s2188
          %s2190 = sand.u32 %s717, 1
          %s2191 = smul.addr %s2190, 8
          %s2192 = scalar_lea.vmem [#allocation29], %s2191
          %2193 = dma.done %s2189, 128
        $region216: #{tpu_custom_call.1} parent=211 // pred_fallthru
          _
      $region212: #{tpu_custom_call.1} parent=5 // pred_fallthru
        _
    $region6: #{tpu_custom_call.1} parent=1 // loop_footer
      %s83 = sadd.s32 1, %s79
    $region7: #{tpu_custom_call.1} parent=1 // loop_footer_branch
      %78 = sbr.rel target = $region3
    $region8: #{tpu_custom_call.1} parent=1 // loop_exit
      _
    %2194 = vsyncpa [#allocation3], 1
    %s2195 = scalar_lea.sflag [#allocation3], 1
    %2196 = vsyncpa %s2195, 1
    %2197 = vsyncpa [#allocation6], 1
    %2198 = vsyncpa [#allocation9], 1
    %2199 = vsyncpa [#allocation12], 1
    %2200 = vsyncpa [#allocation15], 1
    %2201 = vsyncpa [#allocation18], 1
    %2202 = vsyncpa [#allocation21], 1
    %2203 = vsyncpa [#allocation24], 1
    %2204 = vsyncpa [#allocation27], 1
    %2205 = vsyncpa [#allocation4], 1
    %s2206 = scalar_lea.sflag [#allocation4], 1
    %2207 = vsyncpa %s2206, 1

</llo_original>
